<compile_context>
chip_gen: v7x
topology: tpu7x:2x2x1
jax: 0.10.0
libtpu: 0.0.40
codegen_flags: <defaults>
</compile_context>

<pallas_src>
import jax
import jax.numpy as jnp
from jax.experimental import pallas as pl
from jax.experimental.pallas import tpu as pltpu

LN_EPS = 1e-5
NUM_MODULES = 6  # 0 cnn_lstm, 1 cnn_trans, 2 lstm_cnn, 3 lstm_trans, 4 trans_cnn, 5 trans_lstm


def _round_up(x, m):
    return (x + m - 1) // m * m


def _pad_last(x, c):
    return jnp.pad(x, [(0, 0)] * (x.ndim - 1) + [(0, c - x.shape[-1])])


def _pad_last2(x, r, c):
    return jnp.pad(x, [(0, 0)] * (x.ndim - 2) + [(0, r - x.shape[-2]), (0, c - x.shape[-1])])


def _make_kernel(h_real, hp):
    f32 = jnp.float32
    bf16 = jnp.bfloat16
    inv_h = 1.0 / float(h_real)

    def kernel(q_ref, kv_ref,
               wcomb_ref, bcomb_ref,
               ln1g_ref, ln1b_ref, ln2g_ref, ln2b_ref,
               w1_ref, b1_ref, w2_ref, b2_ref,
               wfuse_ref, bfuse_ref,
               wattn_ref, battn_ref,
               wfin_ref, bfin_ref, lnfg_ref, lnfb_ref,
               out_ref,
               acc0, acc1, acc2):
        m = pl.program_id(1)

        # Lane mask over the padded hidden dim (real lanes < h_real).
        lane = jax.lax.broadcasted_iota(jnp.int32, (1, hp), 1)
        mask = (lane < h_real).astype(f32)

        def layernorm(x, g, b):
            # padded lanes of x are exactly zero, so the plain lane-sum is the
            # sum over the h_real real lanes; variance uses the masked xc.
            mu = jnp.sum(x, axis=-1, keepdims=True) * inv_h
            xc = (x - mu) * mask
            var = jnp.sum(xc * xc, axis=-1, keepdims=True) * inv_h
            inv = jax.lax.rsqrt(var + LN_EPS)
            return xc * inv * g + b

        q = q_ref[0]    # (TB, Hp) f32
        kv = kv_ref[0]  # (TB, Hp) f32

        # ---- one CrossAttention module (seq-len 1 => softmax == 1) ----
        attn = jnp.dot(kv.astype(bf16), wcomb_ref[0],
                       preferred_element_type=f32) + bcomb_ref[0]
        out1 = layernorm(q + attn, ln1g_ref[0], ln1b_ref[0])
        h = jnp.dot(out1.astype(bf16), w1_ref[0],
                    preferred_element_type=f32) + b1_ref[0]
        h = jnp.maximum(h, 0.0)
        ffn = jnp.dot(h.astype(bf16), w2_ref[0],
                      preferred_element_type=f32) + b2_ref[0]
        out2 = layernorm(out1 + ffn, ln2g_ref[0], ln2b_ref[0])

        # ---- accumulate per-branch enhanced sums (query added on the first
        #      module of each pair, so no separate init step is needed) ----
        accs = (acc0, acc1, acc2)
        for mm in range(NUM_MODULES):
            acc = accs[mm // 2]
            if mm % 2 == 0:
                @pl.when(m == mm)
                def _(acc=acc):
                    acc[...] = q + out2
            else:
                @pl.when(m == mm)
                def _(acc=acc):
                    acc[...] = acc[...] + out2

        # ---- epilogue: branch fusion linears, 3-way softmax, final fusion ----
        @pl.when(m == NUM_MODULES - 1)
        def _():
            enh = []
            for j in range(3):
                e = jnp.dot(accs[j][...].astype(bf16), wfuse_ref[j],
                            preferred_element_type=f32) + bfuse_ref[j]
                enh.append(e)

            # split-weight scoring: avoids materializing a [TB, 3H] lane concat
            logits = battn_ref[...]
            for j in range(3):
                logits = logits + jnp.dot(enh[j], wattn_ref[j],
                                          preferred_element_type=f32)
            logits = logits - jnp.max(logits, axis=1, keepdims=True)
            ex = jnp.exp(logits)
            w = ex * pl.reciprocal(jnp.sum(ex, axis=1, keepdims=True), approx=True)

            fused = (enh[0] * w[:, 0:1]
                     + enh[1] * w[:, 1:2]
                     + enh[2] * w[:, 2:3])

            z = jnp.dot(fused.astype(bf16), wfin_ref[...],
                        preferred_element_type=f32) + bfin_ref[...]
            z = layernorm(z, lnfg_ref[...], lnfb_ref[...])
            out_ref[...] = jnp.maximum(z, 0.0).astype(out_ref.dtype)

    return kernel


def init_params(key, hidden_size):
    """Raw parameters in [in, out] (pre-transposed) layout, f32, at real H."""
    H = hidden_size
    ks = jax.random.split(key, 16)
    s = 0.05
    return dict(
        wv=jax.random.normal(ks[0], (6, H, H), jnp.float32) * s,
        bv=jax.random.normal(ks[1], (6, H), jnp.float32) * s,
        wo=jax.random.normal(ks[2], (6, H, H), jnp.float32) * s,
        bo=jax.random.normal(ks[3], (6, H), jnp.float32) * s,
        ln1g=jnp.ones((6, H), jnp.float32),
        ln1b=jnp.zeros((6, H), jnp.float32),
        ln2g=jnp.ones((6, H), jnp.float32),
        ln2b=jnp.zeros((6, H), jnp.float32),
        w1=jax.random.normal(ks[4], (6, H, 4 * H), jnp.float32) * s,
        b1=jax.random.normal(ks[5], (6, 4 * H), jnp.float32) * s,
        w2=jax.random.normal(ks[6], (6, 4 * H, H), jnp.float32) * s,
        b2=jax.random.normal(ks[7], (6, H), jnp.float32) * s,
        wfuse=jax.random.normal(ks[8], (3, H, H), jnp.float32) * s,
        bfuse=jax.random.normal(ks[9], (3, H), jnp.float32) * s,
        wattn=jax.random.normal(ks[10], (3 * H, 3), jnp.float32) * s,
        battn=jax.random.normal(ks[11], (1, 3), jnp.float32) * s,
        wfin=jax.random.normal(ks[12], (H, H), jnp.float32) * s,
        bfin=jax.random.normal(ks[13], (1, H), jnp.float32) * s,
        lnfg=jnp.ones((1, H), jnp.float32),
        lnfb=jnp.zeros((1, H), jnp.float32),
    )


def prepare_params(params, hidden_size, hp):
    """Fold Wv@Wo, pad H -> hp (zeros, incl. gammas so padded lanes stay 0), cast matrices to bf16."""
    H = hidden_size
    f32, bf16 = jnp.float32, jnp.bfloat16

    wcomb = jnp.einsum("mij,mjk->mik", params["wv"], params["wo"])
    bcomb = jnp.einsum("mj,mjk->mk", params["bv"], params["wo"]) + params["bo"]

    def vec3(x, width):  # (G, W) -> (G, 1, width_padded)
        return _pad_last(x, width)[:, None, :].astype(f32)

    p = dict(
        wcomb=_pad_last2(wcomb, hp, hp).astype(bf16),
        bcomb=vec3(bcomb, hp),
        ln1g=vec3(params["ln1g"], hp),
        ln1b=vec3(params["ln1b"], hp),
        ln2g=vec3(params["ln2g"], hp),
        ln2b=vec3(params["ln2b"], hp),
        w1=_pad_last2(params["w1"], hp, 4 * hp).astype(bf16),
        b1=vec3(params["b1"], 4 * hp),
        w2=_pad_last2(params["w2"], 4 * hp, hp).astype(bf16),
        b2=vec3(params["b2"], hp),
        wfuse=_pad_last2(params["wfuse"], hp, hp).astype(bf16),
        bfuse=vec3(params["bfuse"], hp),
        wattn=jnp.pad(params["wattn"].reshape(3, H, 3),
                      ((0, 0), (0, hp - H), (0, 0))).astype(f32),
        battn=params["battn"].astype(f32),
        wfin=_pad_last2(params["wfin"], hp, hp).astype(bf16),
        bfin=_pad_last(params["bfin"], hp).astype(f32),
        lnfg=_pad_last(params["lnfg"], hp).astype(f32),
        lnfb=_pad_last(params["lnfb"], hp).astype(f32),
    )
    return p


def feature_fusion_forward(cnn_feat, lstm_feat, transformer_feat, params,
                           *, batch_tile=256):
    B, H = cnn_feat.shape
    hp = max(128, _round_up(H, 128))          # lane-dense hidden dim

    if B <= batch_tile:
        tb, bp = B, B
    else:
        tb = _round_up(batch_tile, 8)
        bp = _round_up(B, tb)
    nb = bp // tb

    pp = prepare_params(params, H, hp)

    def pad_feat(x):
        return jnp.pad(x.astype(jnp.float32), ((0, bp - B), (0, hp - H)))

    cnn_p = pad_feat(cnn_feat)
    lstm_p = pad_feat(lstm_feat)
    trn_p = pad_feat(transformer_feat)
    # per-module query / key-value stacks (module order as in the PyTorch forward)
    q_stack = jnp.stack([cnn_p, cnn_p, lstm_p, lstm_p, trn_p, trn_p], axis=0)
    kv_stack = jnp.stack([lstm_p, trn_p, cnn_p, trn_p, cnn_p, lstm_p], axis=0)

    kernel = _make_kernel(H, hp)

    def mod_spec(shape):   # streamed per-module slab
        return pl.BlockSpec(shape, lambda b, m: (m,) + (0,) * (len(shape) - 1))

    def res_spec(shape):   # resident (constant index) block
        return pl.BlockSpec(shape, lambda b, m: (0,) * len(shape))

    in_specs = [
        pl.BlockSpec((1, tb, hp), lambda b, m: (m, b, 0)),   # q_stack
        pl.BlockSpec((1, tb, hp), lambda b, m: (m, b, 0)),   # kv_stack
        mod_spec((1, hp, hp)),       # wcomb
        mod_spec((1, 1, hp)),        # bcomb
        mod_spec((1, 1, hp)),        # ln1g
        mod_spec((1, 1, hp)),        # ln1b
        mod_spec((1, 1, hp)),        # ln2g
        mod_spec((1, 1, hp)),        # ln2b
        mod_spec((1, hp, 4 * hp)),   # w1
        mod_spec((1, 1, 4 * hp)),    # b1
        mod_spec((1, 4 * hp, hp)),   # w2
        mod_spec((1, 1, hp)),        # b2
        res_spec((3, hp, hp)),       # wfuse
        res_spec((3, 1, hp)),        # bfuse
        res_spec((3, hp, 3)),        # wattn
        res_spec((1, 3)),            # battn
        res_spec((hp, hp)),          # wfin
        res_spec((1, hp)),           # bfin
        res_spec((1, hp)),           # lnfg
        res_spec((1, hp)),           # lnfb
    ]
    out_spec = pl.BlockSpec((tb, hp), lambda b, m: (b, 0))

    # VMEM budget: double-buffered per-module bf16 slab + resident epilogue
    # weights + activation / scratch tiles, with headroom; clamp to portable range.
    per_module_bytes = 2 * 9 * hp * hp                   # bf16: wcomb + w1 + w2
    resident_bytes = 2 * 4 * hp * hp + 64 * hp           # bf16 wfuse/wfin + vectors
    act_bytes = 4 * tb * (4 * hp) * 4 + 4 * 16 * tb * hp
    vmem_limit = int(min(max(2 * per_module_bytes + resident_bytes + act_bytes
                             + (8 << 20), 32 << 20), 64 << 20))

    flops = 2 * bp * hp * hp * (NUM_MODULES * 9 + 4) + 2 * bp * hp * 9
    bytes_accessed = (NUM_MODULES * per_module_bytes + resident_bytes
                      + 4 * (2 * NUM_MODULES + 1) * bp * hp)
    cost = pl.CostEstimate(flops=int(flops), transcendentals=int(20 * bp),
                           bytes_accessed=int(bytes_accessed))

    grid_spec = pltpu.PrefetchScalarGridSpec(
        num_scalar_prefetch=0,
        grid=(nb, NUM_MODULES),
        in_specs=in_specs,
        out_specs=out_spec,
        scratch_shapes=[pltpu.VMEM((tb, hp), jnp.float32)] * 3,
    )

    out_padded = pl.pallas_call(
        kernel,
        out_shape=jax.ShapeDtypeStruct((bp, hp), jnp.float32),
        grid_spec=grid_spec,
        compiler_params=pltpu.CompilerParams(
            dimension_semantics=("parallel", "arbitrary"),
            vmem_limit_bytes=vmem_limit),
        cost_estimate=cost,
    )(q_stack, kv_stack,
      pp["wcomb"], pp["bcomb"],
      pp["ln1g"], pp["ln1b"], pp["ln2g"], pp["ln2b"],
      pp["w1"], pp["b1"], pp["w2"], pp["b2"],
      pp["wfuse"], pp["bfuse"],
      pp["wattn"], pp["battn"],
      pp["wfin"], pp["bfin"], pp["lnfg"], pp["lnfb"])

    return out_padded[:B, :H]


if __name__ == "__main__":
    key = jax.random.PRNGKey(0)
    B, H = 2, 32
    k1, k2, k3, kp = jax.random.split(key, 4)
    cnn_feat = jax.random.normal(k1, (B, H), jnp.float32)
    lstm_feat = jax.random.normal(k2, (B, H), jnp.float32)
    transformer_feat = jax.random.normal(k3, (B, H), jnp.float32)

    params = init_params(kp, H)

    out = feature_fusion_forward(cnn_feat, lstm_feat, transformer_feat, params)
    out = jax.block_until_ready(out)
    assert out.shape == (B, H)
    assert bool(jnp.all(jnp.isfinite(out)))
    print("KERNEL_OK")
</pallas_src>

<mosaic_0001>
module attributes {stable_mosaic.version = 11 : i64} {
  func.func @kernel(%arg0: i32, %arg1: i32, %arg2: memref<1x2x128xf32, #tpu.memory_space<vmem>>, %arg3: memref<1x2x128xf32, #tpu.memory_space<vmem>>, %arg4: memref<1x128x128xbf16, #tpu.memory_space<vmem>>, %arg5: memref<1x1x128xf32, #tpu.memory_space<vmem>>, %arg6: memref<1x1x128xf32, #tpu.memory_space<vmem>>, %arg7: memref<1x1x128xf32, #tpu.memory_space<vmem>>, %arg8: memref<1x1x128xf32, #tpu.memory_space<vmem>>, %arg9: memref<1x1x128xf32, #tpu.memory_space<vmem>>, %arg10: memref<1x128x512xbf16, #tpu.memory_space<vmem>>, %arg11: memref<1x1x512xf32, #tpu.memory_space<vmem>>, %arg12: memref<1x512x128xbf16, #tpu.memory_space<vmem>>, %arg13: memref<1x1x128xf32, #tpu.memory_space<vmem>>, %arg14: memref<3x128x128xbf16, #tpu.memory_space<vmem>>, %arg15: memref<3x1x128xf32, #tpu.memory_space<vmem>>, %arg16: memref<3x128x3xf32, #tpu.memory_space<vmem>>, %arg17: memref<1x3xf32, #tpu.memory_space<vmem>>, %arg18: memref<128x128xbf16, #tpu.memory_space<vmem>>, %arg19: memref<1x128xf32, #tpu.memory_space<vmem>>, %arg20: memref<1x128xf32, #tpu.memory_space<vmem>>, %arg21: memref<1x128xf32, #tpu.memory_space<vmem>>, %arg22: memref<2x128xf32, #tpu.memory_space<vmem>>, %arg23: memref<2x128xf32, #tpu.memory_space<vmem>>, %arg24: memref<2x128xf32, #tpu.memory_space<vmem>>, %arg25: memref<2x128xf32, #tpu.memory_space<vmem>>) attributes {dimension_semantics = [#tpu.dimension_semantics<parallel>, #tpu.dimension_semantics<arbitrary>], iteration_bounds = array<i64: 1, 6>, scalar_prefetch = 0 : i64, scratch_operands = 3 : i64, tpu.core_type = #tpu.core_type<tc>, window_params = [{transform_indices = @transform_0, window_bounds = array<i64: 1, 2, 128>}, {transform_indices = @transform_1, window_bounds = array<i64: 1, 2, 128>}, {transform_indices = @transform_2, window_bounds = array<i64: 1, 128, 128>}, {transform_indices = @transform_3, window_bounds = array<i64: 1, 1, 128>}, {transform_indices = @transform_4, window_bounds = array<i64: 1, 1, 128>}, {transform_indices = @transform_5, window_bounds = array<i64: 1, 1, 128>}, {transform_indices = @transform_6, window_bounds = array<i64: 1, 1, 128>}, {transform_indices = @transform_7, window_bounds = array<i64: 1, 1, 128>}, {transform_indices = @transform_8, window_bounds = array<i64: 1, 128, 512>}, {transform_indices = @transform_9, window_bounds = array<i64: 1, 1, 512>}, {transform_indices = @transform_10, window_bounds = array<i64: 1, 512, 128>}, {transform_indices = @transform_11, window_bounds = array<i64: 1, 1, 128>}, {pipeline_mode = #tpu.pipeline_mode<synchronous>, transform_indices = @transform_12, window_bounds = array<i64: 3, 128, 128>}, {pipeline_mode = #tpu.pipeline_mode<synchronous>, transform_indices = @transform_13, window_bounds = array<i64: 3, 1, 128>}, {pipeline_mode = #tpu.pipeline_mode<synchronous>, transform_indices = @transform_14, window_bounds = array<i64: 3, 128, 3>}, {pipeline_mode = #tpu.pipeline_mode<synchronous>, transform_indices = @transform_15, window_bounds = array<i64: 1, 3>}, {pipeline_mode = #tpu.pipeline_mode<synchronous>, transform_indices = @transform_16, window_bounds = array<i64: 128, 128>}, {pipeline_mode = #tpu.pipeline_mode<synchronous>, transform_indices = @transform_17, window_bounds = array<i64: 1, 128>}, {pipeline_mode = #tpu.pipeline_mode<synchronous>, transform_indices = @transform_18, window_bounds = array<i64: 1, 128>}, {pipeline_mode = #tpu.pipeline_mode<synchronous>, transform_indices = @transform_19, window_bounds = array<i64: 1, 128>}, {transform_indices = @transform_20, window_bounds = array<i64: 2, 128>}]} {
    %0 = tpu.iota {dimensions = array<i32: 1>} : vector<1x128xi32>
    %c32_i32 = arith.constant 32 : i32
    %1 = vector.broadcast %c32_i32 : i32 to vector<1x128xi32>
    %2 = arith.cmpi slt, %0, %1 : vector<1x128xi32>
    %3 = arith.extui %2 : vector<1x128xi1> to vector<1x128xi32>
    %4 = arith.sitofp %3 : vector<1x128xi32> to vector<1x128xf32>
    %c0 = arith.constant 0 : index
    %c0_0 = arith.constant 0 : index
    %c0_1 = arith.constant 0 : index
    %5 = vector.load %arg2[%c0, %c0_0, %c0_1] : memref<1x2x128xf32, #tpu.memory_space<vmem>>, vector<1x2x128xf32>
    %6 = vector.shape_cast %5 : vector<1x2x128xf32> to vector<2x128xf32>
    %c0_2 = arith.constant 0 : index
    %c0_3 = arith.constant 0 : index
    %c0_4 = arith.constant 0 : index
    %7 = vector.load %arg3[%c0_2, %c0_3, %c0_4] : memref<1x2x128xf32, #tpu.memory_space<vmem>>, vector<1x2x128xf32>
    %8 = vector.shape_cast %7 : vector<1x2x128xf32> to vector<2x128xf32>
    %9 = arith.truncf %8 : vector<2x128xf32> to vector<2x128xbf16>
    %c0_5 = arith.constant 0 : index
    %c0_6 = arith.constant 0 : index
    %c0_7 = arith.constant 0 : index
    %10 = vector.load %arg4[%c0_5, %c0_6, %c0_7] : memref<1x128x128xbf16, #tpu.memory_space<vmem>>, vector<1x128x128xbf16>
    %11 = vector.shape_cast %10 : vector<1x128x128xbf16> to vector<128x128xbf16>
    %cst = arith.constant dense<0.000000e+00> : vector<2x128xf32>
    %12 = tpu.matmul %9, %11, %cst {dimension_numbers = #tpu.dot_dimension_numbers<[1], [0], [0], [1], [0, 0, 1, 1], [], []>} : vector<2x128xbf16>, vector<128x128xbf16>, vector<2x128xf32> -> vector<2x128xf32>
    %c0_8 = arith.constant 0 : index
    %c0_9 = arith.constant 0 : index
    %c0_10 = arith.constant 0 : index
    %13 = vector.load %arg5[%c0_8, %c0_9, %c0_10] : memref<1x1x128xf32, #tpu.memory_space<vmem>>, vector<1x1x128xf32>
    %14 = vector.shape_cast %13 : vector<1x1x128xf32> to vector<1x128xf32>
    %15 = vector.broadcast %14 : vector<1x128xf32> to vector<2x128xf32>
    %16 = arith.addf %12, %15 : vector<2x128xf32>
    %17 = arith.addf %6, %16 : vector<2x128xf32>
    %c0_11 = arith.constant 0 : index
    %c0_12 = arith.constant 0 : index
    %c0_13 = arith.constant 0 : index
    %18 = vector.load %arg6[%c0_11, %c0_12, %c0_13] : memref<1x1x128xf32, #tpu.memory_space<vmem>>, vector<1x1x128xf32>
    %19 = vector.shape_cast %18 : vector<1x1x128xf32> to vector<1x128xf32>
    %c0_14 = arith.constant 0 : index
    %c0_15 = arith.constant 0 : index
    %c0_16 = arith.constant 0 : index
    %20 = vector.load %arg7[%c0_14, %c0_15, %c0_16] : memref<1x1x128xf32, #tpu.memory_space<vmem>>, vector<1x1x128xf32>
    %21 = vector.shape_cast %20 : vector<1x1x128xf32> to vector<1x128xf32>
    %cst_17 = arith.constant dense<0.000000e+00> : vector<2xf32>
    %22 = vector.multi_reduction <add>, %17, %cst_17 [1] : vector<2x128xf32> to vector<2xf32>
    %23 = vector.shape_cast %22 : vector<2xf32> to vector<2x1xf32>
    %cst_18 = arith.constant 3.125000e-02 : f32
    %24 = vector.broadcast %cst_18 : f32 to vector<2x1xf32>
    %25 = arith.mulf %23, %24 : vector<2x1xf32>
    %26 = vector.broadcast %25 : vector<2x1xf32> to vector<2x128xf32>
    %27 = arith.subf %17, %26 : vector<2x128xf32>
    %28 = vector.broadcast %4 : vector<1x128xf32> to vector<2x128xf32>
    %29 = arith.mulf %27, %28 : vector<2x128xf32>
    %30 = arith.mulf %29, %29 : vector<2x128xf32>
    %cst_19 = arith.constant dense<0.000000e+00> : vector<2xf32>
    %31 = vector.multi_reduction <add>, %30, %cst_19 [1] : vector<2x128xf32> to vector<2xf32>
    %32 = vector.shape_cast %31 : vector<2xf32> to vector<2x1xf32>
    %cst_20 = arith.constant 3.125000e-02 : f32
    %33 = vector.broadcast %cst_20 : f32 to vector<2x1xf32>
    %34 = arith.mulf %32, %33 : vector<2x1xf32>
    %cst_21 = arith.constant 9.99999974E-6 : f32
    %35 = vector.broadcast %cst_21 : f32 to vector<2x1xf32>
    %36 = arith.addf %34, %35 : vector<2x1xf32>
    %37 = math.rsqrt %36 : vector<2x1xf32>
    %38 = vector.broadcast %37 : vector<2x1xf32> to vector<2x128xf32>
    %39 = arith.mulf %29, %38 : vector<2x128xf32>
    %40 = vector.broadcast %19 : vector<1x128xf32> to vector<2x128xf32>
    %41 = arith.mulf %39, %40 : vector<2x128xf32>
    %42 = vector.broadcast %21 : vector<1x128xf32> to vector<2x128xf32>
    %43 = arith.addf %41, %42 : vector<2x128xf32>
    %44 = arith.truncf %43 : vector<2x128xf32> to vector<2x128xbf16>
    %c0_22 = arith.constant 0 : index
    %c0_23 = arith.constant 0 : index
    %c0_24 = arith.constant 0 : index
    %45 = vector.load %arg10[%c0_22, %c0_23, %c0_24] : memref<1x128x512xbf16, #tpu.memory_space<vmem>>, vector<1x128x512xbf16>
    %46 = vector.shape_cast %45 : vector<1x128x512xbf16> to vector<128x512xbf16>
    %cst_25 = arith.constant dense<0.000000e+00> : vector<2x512xf32>
    %47 = tpu.matmul %44, %46, %cst_25 {dimension_numbers = #tpu.dot_dimension_numbers<[1], [0], [0], [1], [0, 0, 1, 1], [], []>} : vector<2x128xbf16>, vector<128x512xbf16>, vector<2x512xf32> -> vector<2x512xf32>
    %c0_26 = arith.constant 0 : index
    %c0_27 = arith.constant 0 : index
    %c0_28 = arith.constant 0 : index
    %48 = vector.load %arg11[%c0_26, %c0_27, %c0_28] : memref<1x1x512xf32, #tpu.memory_space<vmem>>, vector<1x1x512xf32>
    %49 = vector.shape_cast %48 : vector<1x1x512xf32> to vector<1x512xf32>
    %50 = vector.broadcast %49 : vector<1x512xf32> to vector<2x512xf32>
    %51 = arith.addf %47, %50 : vector<2x512xf32>
    %cst_29 = arith.constant 0.000000e+00 : f32
    %52 = vector.broadcast %cst_29 : f32 to vector<2x512xf32>
    %53 = arith.maximumf %51, %52 : vector<2x512xf32>
    %54 = arith.truncf %53 : vector<2x512xf32> to vector<2x512xbf16>
    %c0_30 = arith.constant 0 : index
    %c0_31 = arith.constant 0 : index
    %c0_32 = arith.constant 0 : index
    %55 = vector.load %arg12[%c0_30, %c0_31, %c0_32] : memref<1x512x128xbf16, #tpu.memory_space<vmem>>, vector<1x512x128xbf16>
    %56 = vector.shape_cast %55 : vector<1x512x128xbf16> to vector<512x128xbf16>
    %cst_33 = arith.constant dense<0.000000e+00> : vector<2x128xf32>
    %57 = tpu.matmul %54, %56, %cst_33 {dimension_numbers = #tpu.dot_dimension_numbers<[1], [0], [0], [1], [0, 0, 1, 1], [], []>} : vector<2x512xbf16>, vector<512x128xbf16>, vector<2x128xf32> -> vector<2x128xf32>
    %c0_34 = arith.constant 0 : index
    %c0_35 = arith.constant 0 : index
    %c0_36 = arith.constant 0 : index
    %58 = vector.load %arg13[%c0_34, %c0_35, %c0_36] : memref<1x1x128xf32, #tpu.memory_space<vmem>>, vector<1x1x128xf32>
    %59 = vector.shape_cast %58 : vector<1x1x128xf32> to vector<1x128xf32>
    %60 = vector.broadcast %59 : vector<1x128xf32> to vector<2x128xf32>
    %61 = arith.addf %57, %60 : vector<2x128xf32>
    %62 = arith.addf %43, %61 : vector<2x128xf32>
    %c0_37 = arith.constant 0 : index
    %c0_38 = arith.constant 0 : index
    %c0_39 = arith.constant 0 : index
    %63 = vector.load %arg8[%c0_37, %c0_38, %c0_39] : memref<1x1x128xf32, #tpu.memory_space<vmem>>, vector<1x1x128xf32>
    %64 = vector.shape_cast %63 : vector<1x1x128xf32> to vector<1x128xf32>
    %c0_40 = arith.constant 0 : index
    %c0_41 = arith.constant 0 : index
    %c0_42 = arith.constant 0 : index
    %65 = vector.load %arg9[%c0_40, %c0_41, %c0_42] : memref<1x1x128xf32, #tpu.memory_space<vmem>>, vector<1x1x128xf32>
    %66 = vector.shape_cast %65 : vector<1x1x128xf32> to vector<1x128xf32>
    %cst_43 = arith.constant dense<0.000000e+00> : vector<2xf32>
    %67 = vector.multi_reduction <add>, %62, %cst_43 [1] : vector<2x128xf32> to vector<2xf32>
    %68 = vector.shape_cast %67 : vector<2xf32> to vector<2x1xf32>
    %cst_44 = arith.constant 3.125000e-02 : f32
    %69 = vector.broadcast %cst_44 : f32 to vector<2x1xf32>
    %70 = arith.mulf %68, %69 : vector<2x1xf32>
    %71 = vector.broadcast %70 : vector<2x1xf32> to vector<2x128xf32>
    %72 = arith.subf %62, %71 : vector<2x128xf32>
    %73 = vector.broadcast %4 : vector<1x128xf32> to vector<2x128xf32>
    %74 = arith.mulf %72, %73 : vector<2x128xf32>
    %75 = arith.mulf %74, %74 : vector<2x128xf32>
    %cst_45 = arith.constant dense<0.000000e+00> : vector<2xf32>
    %76 = vector.multi_reduction <add>, %75, %cst_45 [1] : vector<2x128xf32> to vector<2xf32>
    %77 = vector.shape_cast %76 : vector<2xf32> to vector<2x1xf32>
    %cst_46 = arith.constant 3.125000e-02 : f32
    %78 = vector.broadcast %cst_46 : f32 to vector<2x1xf32>
    %79 = arith.mulf %77, %78 : vector<2x1xf32>
    %cst_47 = arith.constant 9.99999974E-6 : f32
    %80 = vector.broadcast %cst_47 : f32 to vector<2x1xf32>
    %81 = arith.addf %79, %80 : vector<2x1xf32>
    %82 = math.rsqrt %81 : vector<2x1xf32>
    %83 = vector.broadcast %82 : vector<2x1xf32> to vector<2x128xf32>
    %84 = arith.mulf %74, %83 : vector<2x128xf32>
    %85 = vector.broadcast %64 : vector<1x128xf32> to vector<2x128xf32>
    %86 = arith.mulf %84, %85 : vector<2x128xf32>
    %87 = vector.broadcast %66 : vector<1x128xf32> to vector<2x128xf32>
    %88 = arith.addf %86, %87 : vector<2x128xf32>
    %c0_i32 = arith.constant 0 : i32
    %89 = arith.cmpi eq, %arg1, %c0_i32 : i32
    %90 = arith.extui %89 : i1 to i32
    %c0_i32_48 = arith.constant 0 : i32
    %91 = arith.cmpi ne, %90, %c0_i32_48 : i32
    scf.if %91 {
      %110 = arith.addf %6, %88 : vector<2x128xf32>
      %c0_56 = arith.constant 0 : index
      %c0_57 = arith.constant 0 : index
      %111 = vector.load %arg23[%c0_56, %c0_57] : memref<2x128xf32, #tpu.memory_space<vmem>>, vector<2x128xf32>
      tpu.vector_store %arg23[%c0_56, %c0_57], %110 {strides = array<i32>} : memref<2x128xf32, #tpu.memory_space<vmem>>, vector<2x128xf32>,
    } else {
    }
    %c1_i32 = arith.constant 1 : i32
    %92 = arith.cmpi eq, %arg1, %c1_i32 : i32
    %93 = arith.extui %92 : i1 to i32
    %c0_i32_49 = arith.constant 0 : i32
    %94 = arith.cmpi ne, %93, %c0_i32_49 : i32
    scf.if %94 {
      %c0_56 = arith.constant 0 : index
      %c0_57 = arith.constant 0 : index
      %110 = vector.load %arg23[%c0_56, %c0_57] : memref<2x128xf32, #tpu.memory_space<vmem>>, vector<2x128xf32>
      %111 = arith.addf %110, %88 : vector<2x128xf32>
      %c0_58 = arith.constant 0 : index
      %c0_59 = arith.constant 0 : index
      %112 = vector.load %arg23[%c0_58, %c0_59] : memref<2x128xf32, #tpu.memory_space<vmem>>, vector<2x128xf32>
      tpu.vector_store %arg23[%c0_58, %c0_59], %111 {strides = array<i32>} : memref<2x128xf32, #tpu.memory_space<vmem>>, vector<2x128xf32>,
    } else {
    }
    %c2_i32 = arith.constant 2 : i32
    %95 = arith.cmpi eq, %arg1, %c2_i32 : i32
    %96 = arith.extui %95 : i1 to i32
    %c0_i32_50 = arith.constant 0 : i32
    %97 = arith.cmpi ne, %96, %c0_i32_50 : i32
    scf.if %97 {
      %110 = arith.addf %6, %88 : vector<2x128xf32>
      %c0_56 = arith.constant 0 : index
      %c0_57 = arith.constant 0 : index
      %111 = vector.load %arg24[%c0_56, %c0_57] : memref<2x128xf32, #tpu.memory_space<vmem>>, vector<2x128xf32>
      tpu.vector_store %arg24[%c0_56, %c0_57], %110 {strides = array<i32>} : memref<2x128xf32, #tpu.memory_space<vmem>>, vector<2x128xf32>,
    } else {
    }
    %c3_i32 = arith.constant 3 : i32
    %98 = arith.cmpi eq, %arg1, %c3_i32 : i32
    %99 = arith.extui %98 : i1 to i32
    %c0_i32_51 = arith.constant 0 : i32
    %100 = arith.cmpi ne, %99, %c0_i32_51 : i32
    scf.if %100 {
      %c0_56 = arith.constant 0 : index
      %c0_57 = arith.constant 0 : index
      %110 = vector.load %arg24[%c0_56, %c0_57] : memref<2x128xf32, #tpu.memory_space<vmem>>, vector<2x128xf32>
      %111 = arith.addf %110, %88 : vector<2x128xf32>
      %c0_58 = arith.constant 0 : index
      %c0_59 = arith.constant 0 : index
      %112 = vector.load %arg24[%c0_58, %c0_59] : memref<2x128xf32, #tpu.memory_space<vmem>>, vector<2x128xf32>
      tpu.vector_store %arg24[%c0_58, %c0_59], %111 {strides = array<i32>} : memref<2x128xf32, #tpu.memory_space<vmem>>, vector<2x128xf32>,
    } else {
    }
    %c4_i32 = arith.constant 4 : i32
    %101 = arith.cmpi eq, %arg1, %c4_i32 : i32
    %102 = arith.extui %101 : i1 to i32
    %c0_i32_52 = arith.constant 0 : i32
    %103 = arith.cmpi ne, %102, %c0_i32_52 : i32
    scf.if %103 {
      %110 = arith.addf %6, %88 : vector<2x128xf32>
      %c0_56 = arith.constant 0 : index
      %c0_57 = arith.constant 0 : index
      %111 = vector.load %arg25[%c0_56, %c0_57] : memref<2x128xf32, #tpu.memory_space<vmem>>, vector<2x128xf32>
      tpu.vector_store %arg25[%c0_56, %c0_57], %110 {strides = array<i32>} : memref<2x128xf32, #tpu.memory_space<vmem>>, vector<2x128xf32>,
    } else {
    }
    %c5_i32 = arith.constant 5 : i32
    %104 = arith.cmpi eq, %arg1, %c5_i32 : i32
    %105 = arith.extui %104 : i1 to i32
    %c0_i32_53 = arith.constant 0 : i32
    %106 = arith.cmpi ne, %105, %c0_i32_53 : i32
    scf.if %106 {
      %c0_56 = arith.constant 0 : index
      %c0_57 = arith.constant 0 : index
      %110 = vector.load %arg25[%c0_56, %c0_57] : memref<2x128xf32, #tpu.memory_space<vmem>>, vector<2x128xf32>
      %111 = arith.addf %110, %88 : vector<2x128xf32>
      %c0_58 = arith.constant 0 : index
      %c0_59 = arith.constant 0 : index
      %112 = vector.load %arg25[%c0_58, %c0_59] : memref<2x128xf32, #tpu.memory_space<vmem>>, vector<2x128xf32>
      tpu.vector_store %arg25[%c0_58, %c0_59], %111 {strides = array<i32>} : memref<2x128xf32, #tpu.memory_space<vmem>>, vector<2x128xf32>,
    } else {
    }
    %c5_i32_54 = arith.constant 5 : i32
    %107 = arith.cmpi eq, %arg1, %c5_i32_54 : i32
    %108 = arith.extui %107 : i1 to i32
    %c0_i32_55 = arith.constant 0 : i32
    %109 = arith.cmpi ne, %108, %c0_i32_55 : i32
    scf.if %109 {
      %c0_56 = arith.constant 0 : index
      %c0_57 = arith.constant 0 : index
      %110 = vector.load %arg23[%c0_56, %c0_57] : memref<2x128xf32, #tpu.memory_space<vmem>>, vector<2x128xf32>
      %111 = arith.truncf %110 : vector<2x128xf32> to vector<2x128xbf16>
      %c0_58 = arith.constant 0 : index
      %c0_59 = arith.constant 0 : index
      %c0_60 = arith.constant 0 : index
      %112 = vector.load %arg14[%c0_58, %c0_59, %c0_60] : memref<3x128x128xbf16, #tpu.memory_space<vmem>>, vector<1x128x128xbf16>
      %113 = vector.shape_cast %112 : vector<1x128x128xbf16> to vector<128x128xbf16>
      %cst_61 = arith.constant dense<0.000000e+00> : vector<2x128xf32>
      %114 = tpu.matmul %111, %113, %cst_61 {dimension_numbers = #tpu.dot_dimension_numbers<[1], [0], [0], [1], [0, 0, 1, 1], [], []>} : vector<2x128xbf16>, vector<128x128xbf16>, vector<2x128xf32> -> vector<2x128xf32>
      %c0_62 = arith.constant 0 : index
      %c0_63 = arith.constant 0 : index
      %c0_64 = arith.constant 0 : index
      %115 = vector.load %arg15[%c0_62, %c0_63, %c0_64] : memref<3x1x128xf32, #tpu.memory_space<vmem>>, vector<1x1x128xf32>
      %116 = vector.shape_cast %115 : vector<1x1x128xf32> to vector<1x128xf32>
      %117 = vector.broadcast %116 : vector<1x128xf32> to vector<2x128xf32>
      %118 = arith.addf %114, %117 : vector<2x128xf32>
      %c0_65 = arith.constant 0 : index
      %c0_66 = arith.constant 0 : index
      %119 = vector.load %arg24[%c0_65, %c0_66] : memref<2x128xf32, #tpu.memory_space<vmem>>, vector<2x128xf32>
      %120 = arith.truncf %119 : vector<2x128xf32> to vector<2x128xbf16>
      %c1 = arith.constant 1 : index
      %c0_67 = arith.constant 0 : index
      %c0_68 = arith.constant 0 : index
      %121 = vector.load %arg14[%c1, %c0_67, %c0_68] : memref<3x128x128xbf16, #tpu.memory_space<vmem>>, vector<1x128x128xbf16>
      %122 = vector.shape_cast %121 : vector<1x128x128xbf16> to vector<128x128xbf16>
      %cst_69 = arith.constant dense<0.000000e+00> : vector<2x128xf32>
      %123 = tpu.matmul %120, %122, %cst_69 {dimension_numbers = #tpu.dot_dimension_numbers<[1], [0], [0], [1], [0, 0, 1, 1], [], []>} : vector<2x128xbf16>, vector<128x128xbf16>, vector<2x128xf32> -> vector<2x128xf32>
      %c1_70 = arith.constant 1 : index
      %c0_71 = arith.constant 0 : index
      %c0_72 = arith.constant 0 : index
      %124 = vector.load %arg15[%c1_70, %c0_71, %c0_72] : memref<3x1x128xf32, #tpu.memory_space<vmem>>, vector<1x1x128xf32>
      %125 = vector.shape_cast %124 : vector<1x1x128xf32> to vector<1x128xf32>
      %126 = vector.broadcast %125 : vector<1x128xf32> to vector<2x128xf32>
      %127 = arith.addf %123, %126 : vector<2x128xf32>
      %c0_73 = arith.constant 0 : index
      %c0_74 = arith.constant 0 : index
      %128 = vector.load %arg25[%c0_73, %c0_74] : memref<2x128xf32, #tpu.memory_space<vmem>>, vector<2x128xf32>
      %129 = arith.truncf %128 : vector<2x128xf32> to vector<2x128xbf16>
      %c2 = arith.constant 2 : index
      %c0_75 = arith.constant 0 : index
      %c0_76 = arith.constant 0 : index
      %130 = vector.load %arg14[%c2, %c0_75, %c0_76] : memref<3x128x128xbf16, #tpu.memory_space<vmem>>, vector<1x128x128xbf16>
      %131 = vector.shape_cast %130 : vector<1x128x128xbf16> to vector<128x128xbf16>
      %cst_77 = arith.constant dense<0.000000e+00> : vector<2x128xf32>
      %132 = tpu.matmul %129, %131, %cst_77 {dimension_numbers = #tpu.dot_dimension_numbers<[1], [0], [0], [1], [0, 0, 1, 1], [], []>} : vector<2x128xbf16>, vector<128x128xbf16>, vector<2x128xf32> -> vector<2x128xf32>
      %c2_78 = arith.constant 2 : index
      %c0_79 = arith.constant 0 : index
      %c0_80 = arith.constant 0 : index
      %133 = vector.load %arg15[%c2_78, %c0_79, %c0_80] : memref<3x1x128xf32, #tpu.memory_space<vmem>>, vector<1x1x128xf32>
      %134 = vector.shape_cast %133 : vector<1x1x128xf32> to vector<1x128xf32>
      %135 = vector.broadcast %134 : vector<1x128xf32> to vector<2x128xf32>
      %136 = arith.addf %132, %135 : vector<2x128xf32>
      %c0_81 = arith.constant 0 : index
      %c0_82 = arith.constant 0 : index
      %137 = vector.load %arg17[%c0_81, %c0_82] : memref<1x3xf32, #tpu.memory_space<vmem>>, vector<1x3xf32>
      %c0_83 = arith.constant 0 : index
      %c0_84 = arith.constant 0 : index
      %c0_85 = arith.constant 0 : index
      %138 = vector.load %arg16[%c0_83, %c0_84, %c0_85] : memref<3x128x3xf32, #tpu.memory_space<vmem>>, vector<1x128x3xf32>
      %139 = vector.shape_cast %138 : vector<1x128x3xf32> to vector<128x3xf32>
      %cst_86 = arith.constant dense<0.000000e+00> : vector<2x3xf32>
      %140 = tpu.matmul %118, %139, %cst_86 {dimension_numbers = #tpu.dot_dimension_numbers<[1], [0], [0], [1], [0, 0, 1, 1], [], []>} : vector<2x128xf32>, vector<128x3xf32>, vector<2x3xf32> -> vector<2x3xf32>
      %141 = vector.broadcast %137 : vector<1x3xf32> to vector<2x3xf32>
      %142 = arith.addf %141, %140 : vector<2x3xf32>
      %c1_87 = arith.constant 1 : index
      %c0_88 = arith.constant 0 : index
      %c0_89 = arith.constant 0 : index
      %143 = vector.load %arg16[%c1_87, %c0_88, %c0_89] : memref<3x128x3xf32, #tpu.memory_space<vmem>>, vector<1x128x3xf32>
      %144 = vector.shape_cast %143 : vector<1x128x3xf32> to vector<128x3xf32>
      %cst_90 = arith.constant dense<0.000000e+00> : vector<2x3xf32>
      %145 = tpu.matmul %127, %144, %cst_90 {dimension_numbers = #tpu.dot_dimension_numbers<[1], [0], [0], [1], [0, 0, 1, 1], [], []>} : vector<2x128xf32>, vector<128x3xf32>, vector<2x3xf32> -> vector<2x3xf32>
      %146 = arith.addf %142, %145 : vector<2x3xf32>
      %c2_91 = arith.constant 2 : index
      %c0_92 = arith.constant 0 : index
      %c0_93 = arith.constant 0 : index
      %147 = vector.load %arg16[%c2_91, %c0_92, %c0_93] : memref<3x128x3xf32, #tpu.memory_space<vmem>>, vector<1x128x3xf32>
      %148 = vector.shape_cast %147 : vector<1x128x3xf32> to vector<128x3xf32>
      %cst_94 = arith.constant dense<0.000000e+00> : vector<2x3xf32>
      %149 = tpu.matmul %136, %148, %cst_94 {dimension_numbers = #tpu.dot_dimension_numbers<[1], [0], [0], [1], [0, 0, 1, 1], [], []>} : vector<2x128xf32>, vector<128x3xf32>, vector<2x3xf32> -> vector<2x3xf32>
      %150 = arith.addf %146, %149 : vector<2x3xf32>
      %cst_95 = arith.constant dense<0xFF800000> : vector<2xf32>
      %151 = vector.multi_reduction <maximumf>, %150, %cst_95 [1] : vector<2x3xf32> to vector<2xf32>
      %152 = vector.shape_cast %151 : vector<2xf32> to vector<2x1xf32>
      %153 = vector.broadcast %152 : vector<2x1xf32> to vector<2x3xf32>
      %154 = arith.subf %150, %153 : vector<2x3xf32>
      %155 = math.exp %154 : vector<2x3xf32>
      %cst_96 = arith.constant dense<0.000000e+00> : vector<2xf32>
      %156 = vector.multi_reduction <add>, %155, %cst_96 [1] : vector<2x3xf32> to vector<2xf32>
      %157 = vector.shape_cast %156 : vector<2xf32> to vector<2x1xf32>
      %158 = tpu.reciprocal %157 {approx = true} : vector<2x1xf32> -> vector<2x1xf32>
      %159 = vector.broadcast %158 : vector<2x1xf32> to vector<2x3xf32>
      %160 = arith.mulf %155, %159 : vector<2x3xf32>
      %161 = vector.extract_strided_slice %160 {offsets = [0, 0], sizes = [2, 1], strides = [1, 1]} : vector<2x3xf32> to vector<2x1xf32>
      %162 = vector.broadcast %161 : vector<2x1xf32> to vector<2x128xf32>
      %163 = arith.mulf %118, %162 : vector<2x128xf32>
      %164 = vector.extract_strided_slice %160 {offsets = [0, 1], sizes = [2, 1], strides = [1, 1]} : vector<2x3xf32> to vector<2x1xf32>
      %165 = vector.broadcast %164 : vector<2x1xf32> to vector<2x128xf32>
      %166 = arith.mulf %127, %165 : vector<2x128xf32>
      %167 = arith.addf %163, %166 : vector<2x128xf32>
      %168 = vector.extract_strided_slice %160 {offsets = [0, 2], sizes = [2, 1], strides = [1, 1]} : vector<2x3xf32> to vector<2x1xf32>
      %169 = vector.broadcast %168 : vector<2x1xf32> to vector<2x128xf32>
      %170 = arith.mulf %136, %169 : vector<2x128xf32>
      %171 = arith.addf %167, %170 : vector<2x128xf32>
      %172 = arith.truncf %171 : vector<2x128xf32> to vector<2x128xbf16>
      %c0_97 = arith.constant 0 : index
      %c0_98 = arith.constant 0 : index
      %173 = vector.load %arg18[%c0_97, %c0_98] : memref<128x128xbf16, #tpu.memory_space<vmem>>, vector<128x128xbf16>
      %cst_99 = arith.constant dense<0.000000e+00> : vector<2x128xf32>
      %174 = tpu.matmul %172, %173, %cst_99 {dimension_numbers = #tpu.dot_dimension_numbers<[1], [0], [0], [1], [0, 0, 1, 1], [], []>} : vector<2x128xbf16>, vector<128x128xbf16>, vector<2x128xf32> -> vector<2x128xf32>
      %c0_100 = arith.constant 0 : index
      %c0_101 = arith.constant 0 : index
      %175 = vector.load %arg19[%c0_100, %c0_101] : memref<1x128xf32, #tpu.memory_space<vmem>>, vector<1x128xf32>
      %176 = vector.broadcast %175 : vector<1x128xf32> to vector<2x128xf32>
      %177 = arith.addf %174, %176 : vector<2x128xf32>
      %c0_102 = arith.constant 0 : index
      %c0_103 = arith.constant 0 : index
      %178 = vector.load %arg20[%c0_102, %c0_103] : memref<1x128xf32, #tpu.memory_space<vmem>>, vector<1x128xf32>
      %c0_104 = arith.constant 0 : index
      %c0_105 = arith.constant 0 : index
      %179 = vector.load %arg21[%c0_104, %c0_105] : memref<1x128xf32, #tpu.memory_space<vmem>>, vector<1x128xf32>
      %cst_106 = arith.constant dense<0.000000e+00> : vector<2xf32>
      %180 = vector.multi_reduction <add>, %177, %cst_106 [1] : vector<2x128xf32> to vector<2xf32>
      %181 = vector.shape_cast %180 : vector<2xf32> to vector<2x1xf32>
      %cst_107 = arith.constant 3.125000e-02 : f32
      %182 = vector.broadcast %cst_107 : f32 to vector<2x1xf32>
      %183 = arith.mulf %181, %182 : vector<2x1xf32>
      %184 = vector.broadcast %183 : vector<2x1xf32> to vector<2x128xf32>
      %185 = arith.subf %177, %184 : vector<2x128xf32>
      %186 = vector.broadcast %4 : vector<1x128xf32> to vector<2x128xf32>
      %187 = arith.mulf %185, %186 : vector<2x128xf32>
      %188 = arith.mulf %187, %187 : vector<2x128xf32>
      %cst_108 = arith.constant dense<0.000000e+00> : vector<2xf32>
      %189 = vector.multi_reduction <add>, %188, %cst_108 [1] : vector<2x128xf32> to vector<2xf32>
      %190 = vector.shape_cast %189 : vector<2xf32> to vector<2x1xf32>
      %cst_109 = arith.constant 3.125000e-02 : f32
      %191 = vector.broadcast %cst_109 : f32 to vector<2x1xf32>
      %192 = arith.mulf %190, %191 : vector<2x1xf32>
      %cst_110 = arith.constant 9.99999974E-6 : f32
      %193 = vector.broadcast %cst_110 : f32 to vector<2x1xf32>
      %194 = arith.addf %192, %193 : vector<2x1xf32>
      %195 = math.rsqrt %194 : vector<2x1xf32>
      %196 = vector.broadcast %195 : vector<2x1xf32> to vector<2x128xf32>
      %197 = arith.mulf %187, %196 : vector<2x128xf32>
      %198 = vector.broadcast %178 : vector<1x128xf32> to vector<2x128xf32>
      %199 = arith.mulf %197, %198 : vector<2x128xf32>
      %200 = vector.broadcast %179 : vector<1x128xf32> to vector<2x128xf32>
      %201 = arith.addf %199, %200 : vector<2x128xf32>
      %cst_111 = arith.constant 0.000000e+00 : f32
      %202 = vector.broadcast %cst_111 : f32 to vector<2x128xf32>
      %203 = arith.maximumf %201, %202 : vector<2x128xf32>
      %c0_112 = arith.constant 0 : index
      %c0_113 = arith.constant 0 : index
      %204 = vector.load %arg22[%c0_112, %c0_113] : memref<2x128xf32, #tpu.memory_space<vmem>>, vector<2x128xf32>
      tpu.vector_store %arg22[%c0_112, %c0_113], %203 {strides = array<i32>} : memref<2x128xf32, #tpu.memory_space<vmem>>, vector<2x128xf32>,
    } else {
    }
    return
  }
  func.func @transform_0(%arg0: i32, %arg1: i32) -> (i32, i32, i32) {
    %c0_i32 = arith.constant 0 : i32
    %c0_i32_0 = arith.constant 0 : i32
    return %arg1, %arg0, %c0_i32 : i32, i32, i32
  }
  func.func @transform_1(%arg0: i32, %arg1: i32) -> (i32, i32, i32) {
    %c0_i32 = arith.constant 0 : i32
    %c0_i32_0 = arith.constant 0 : i32
    return %arg1, %arg0, %c0_i32 : i32, i32, i32
  }
  func.func @transform_2(%arg0: i32, %arg1: i32) -> (i32, i32, i32) {
    %c0_i32 = arith.constant 0 : i32
    %c0_i32_0 = arith.constant 0 : i32
    %c0_i32_1 = arith.constant 0 : i32
    return %arg1, %c0_i32, %c0_i32_0 : i32, i32, i32
  }
  func.func @transform_3(%arg0: i32, %arg1: i32) -> (i32, i32, i32) {
    %c0_i32 = arith.constant 0 : i32
    %c0_i32_0 = arith.constant 0 : i32
    %c0_i32_1 = arith.constant 0 : i32
    return %arg1, %c0_i32, %c0_i32_0 : i32, i32, i32
  }
  func.func @transform_4(%arg0: i32, %arg1: i32) -> (i32, i32, i32) {
    %c0_i32 = arith.constant 0 : i32
    %c0_i32_0 = arith.constant 0 : i32
    %c0_i32_1 = arith.constant 0 : i32
    return %arg1, %c0_i32, %c0_i32_0 : i32, i32, i32
  }
  func.func @transform_5(%arg0: i32, %arg1: i32) -> (i32, i32, i32) {
    %c0_i32 = arith.constant 0 : i32
    %c0_i32_0 = arith.constant 0 : i32
    %c0_i32_1 = arith.constant 0 : i32
    return %arg1, %c0_i32, %c0_i32_0 : i32, i32, i32
  }
  func.func @transform_6(%arg0: i32, %arg1: i32) -> (i32, i32, i32) {
    %c0_i32 = arith.constant 0 : i32
    %c0_i32_0 = arith.constant 0 : i32
    %c0_i32_1 = arith.constant 0 : i32
    return %arg1, %c0_i32, %c0_i32_0 : i32, i32, i32
  }
  func.func @transform_7(%arg0: i32, %arg1: i32) -> (i32, i32, i32) {
    %c0_i32 = arith.constant 0 : i32
    %c0_i32_0 = arith.constant 0 : i32
    %c0_i32_1 = arith.constant 0 : i32
    return %arg1, %c0_i32, %c0_i32_0 : i32, i32, i32
  }
  func.func @transform_8(%arg0: i32, %arg1: i32) -> (i32, i32, i32) {
    %c0_i32 = arith.constant 0 : i32
    %c0_i32_0 = arith.constant 0 : i32
    %c0_i32_1 = arith.constant 0 : i32
    return %arg1, %c0_i32, %c0_i32_0 : i32, i32, i32
  }
  func.func @transform_9(%arg0: i32, %arg1: i32) -> (i32, i32, i32) {
    %c0_i32 = arith.constant 0 : i32
    %c0_i32_0 = arith.constant 0 : i32
    %c0_i32_1 = arith.constant 0 : i32
    return %arg1, %c0_i32, %c0_i32_0 : i32, i32, i32
  }
  func.func @transform_10(%arg0: i32, %arg1: i32) -> (i32, i32, i32) {
    %c0_i32 = arith.constant 0 : i32
    %c0_i32_0 = arith.constant 0 : i32
    %c0_i32_1 = arith.constant 0 : i32
    return %arg1, %c0_i32, %c0_i32_0 : i32, i32, i32
  }
  func.func @transform_11(%arg0: i32, %arg1: i32) -> (i32, i32, i32) {
    %c0_i32 = arith.constant 0 : i32
    %c0_i32_0 = arith.constant 0 : i32
    %c0_i32_1 = arith.constant 0 : i32
    return %arg1, %c0_i32, %c0_i32_0 : i32, i32, i32
  }
  func.func @transform_12(%arg0: i32, %arg1: i32) -> (i32, i32, i32) {
    %c0_i32 = arith.constant 0 : i32
    %c0_i32_0 = arith.constant 0 : i32
    %c0_i32_1 = arith.constant 0 : i32
    %c0_i32_2 = arith.constant 0 : i32
    return %c0_i32, %c0_i32_0, %c0_i32_1 : i32, i32, i32
  }
  func.func @transform_13(%arg0: i32, %arg1: i32) -> (i32, i32, i32) {
    %c0_i32 = arith.constant 0 : i32
    %c0_i32_0 = arith.constant 0 : i32
    %c0_i32_1 = arith.constant 0 : i32
    %c0_i32_2 = arith.constant 0 : i32
    return %c0_i32, %c0_i32_0, %c0_i32_1 : i32, i32, i32
  }
  func.func @transform_14(%arg0: i32, %arg1: i32) -> (i32, i32, i32) {
    %c0_i32 = arith.constant 0 : i32
    %c0_i32_0 = arith.constant 0 : i32
    %c0_i32_1 = arith.constant 0 : i32
    %c0_i32_2 = arith.constant 0 : i32
    return %c0_i32, %c0_i32_0, %c0_i32_1 : i32, i32, i32
  }
  func.func @transform_15(%arg0: i32, %arg1: i32) -> (i32, i32) {
    %c0_i32 = arith.constant 0 : i32
    %c0_i32_0 = arith.constant 0 : i32
    %c0_i32_1 = arith.constant 0 : i32
    return %c0_i32, %c0_i32_0 : i32, i32
  }
  func.func @transform_16(%arg0: i32, %arg1: i32) -> (i32, i32) {
    %c0_i32 = arith.constant 0 : i32
    %c0_i32_0 = arith.constant 0 : i32
    %c0_i32_1 = arith.constant 0 : i32
    return %c0_i32, %c0_i32_0 : i32, i32
  }
  func.func @transform_17(%arg0: i32, %arg1: i32) -> (i32, i32) {
    %c0_i32 = arith.constant 0 : i32
    %c0_i32_0 = arith.constant 0 : i32
    %c0_i32_1 = arith.constant 0 : i32
    return %c0_i32, %c0_i32_0 : i32, i32
  }
  func.func @transform_18(%arg0: i32, %arg1: i32) -> (i32, i32) {
    %c0_i32 = arith.constant 0 : i32
    %c0_i32_0 = arith.constant 0 : i32
    %c0_i32_1 = arith.constant 0 : i32
    return %c0_i32, %c0_i32_0 : i32, i32
  }
  func.func @transform_19(%arg0: i32, %arg1: i32) -> (i32, i32) {
    %c0_i32 = arith.constant 0 : i32
    %c0_i32_0 = arith.constant 0 : i32
    %c0_i32_1 = arith.constant 0 : i32
    return %c0_i32, %c0_i32_0 : i32, i32
  }
  func.func @transform_20(%arg0: i32, %arg1: i32) -> (i32, i32) {
    %c0_i32 = arith.constant 0 : i32
    %c0_i32_0 = arith.constant 0 : i32
    return %arg0, %c0_i32 : i32, i32
  }
}

</mosaic_0001>

<llo_original>
// kernel: tpu_custom_call.1
$region0: #{tpu_custom_call.1}
  #allocation0 [shape = 'u32[]', space=smem, size = 0x4, offset = 0x4, fixed_abs, tag = 'smem constant byte address 0x4 - core index']
  #allocation1 [shape = 'u32[144,128]{1,0:T(1,128)}', space=vmem, size = 0x12000, scoped, tag = 'internal scratch']
  #allocation2 [shape = 'f32[2,128]{1,0:T(2,128)}', space=vmem, size = 0x400, scoped, tag = 'scratch operand']
  #allocation3 [shape = 'f32[2,128]{1,0:T(2,128)}', space=vmem, size = 0x400, scoped, tag = 'scratch operand']
  #allocation4 [shape = 'f32[2,128]{1,0:T(2,128)}', space=vmem, size = 0x400, scoped, tag = 'scratch operand']
  %s0 = inlined_call_operand.hbm [shape: f32[6,2,128], index: 0, kind: input, shape index: {}]
  %s1 = inlined_call_operand.hbm [shape: f32[6,2,128], index: 1, kind: input, shape index: {}]
  %s2 = inlined_call_operand.vmem [shape: bf16[6,128,128], index: 2, kind: input, shape index: {}]
  %s3 = inlined_call_operand.hbm [shape: f32[6,1,128], index: 3, kind: input, shape index: {}]
  %s4 = inlined_call_operand.hbm [shape: f32[6,1,128], index: 4, kind: input, shape index: {}]
  %s5 = inlined_call_operand.hbm [shape: f32[6,1,128], index: 5, kind: input, shape index: {}]
  %s6 = inlined_call_operand.hbm [shape: f32[6,1,128], index: 6, kind: input, shape index: {}]
  %s7 = inlined_call_operand.hbm [shape: f32[6,1,128], index: 7, kind: input, shape index: {}]
  %s8 = inlined_call_operand.hbm [shape: bf16[6,128,512], index: 8, kind: input, shape index: {}]
  %s9 = inlined_call_operand.hbm [shape: f32[6,1,512], index: 9, kind: input, shape index: {}]
  %s10 = inlined_call_operand.hbm [shape: bf16[6,512,128], index: 10, kind: input, shape index: {}]
  %s11 = inlined_call_operand.hbm [shape: f32[6,1,128], index: 11, kind: input, shape index: {}]
  %s12 = inlined_call_operand.hbm [shape: bf16[3,128,128], index: 12, kind: input, shape index: {}]
  %s13 = inlined_call_operand.hbm [shape: f32[3,1,128], index: 13, kind: input, shape index: {}]
  %s14 = inlined_call_operand.vmem [shape: f32[3,128,3], index: 14, kind: input, shape index: {}]
  %s15 = inlined_call_operand.hbm [shape: f32[1,3], index: 15, kind: input, shape index: {}]
  %s16 = inlined_call_operand.vmem [shape: bf16[128,128], index: 16, kind: input, shape index: {}]
  %s17 = inlined_call_operand.vmem [shape: f32[1,128], index: 17, kind: input, shape index: {}]
  %s18 = inlined_call_operand.vmem [shape: f32[1,128], index: 18, kind: input, shape index: {}]
  %s19 = inlined_call_operand.vmem [shape: f32[1,128], index: 19, kind: input, shape index: {}]
  %s20 = inlined_call_operand.hbm [shape: f32[2,128], index: 20, kind: output, shape index: {}]
  %s21 = sld [smem:[#allocation0]]
  $region193: #{tpu_custom_call.1} parent=0
    _
  %s23 = ssub.s32 1, %s21
  %s24 = scalar_select 0, %s23, %s21
  $region1: #{tpu_custom_call.1} parent=0
    #allocation5 [shape = 'u8[2048]{0}', space=vmem, size = 0x800, scoped, tag = 'input window, operand 0']
    #allocation6 [shape = 's32[2]{0}', space=sflag, size = 0x8, scoped, tag = 'scoped memory for tpu_custom_call.1']
    #allocation7 [shape = 's32[2]{0}', space=sflag, size = 0x8, scoped, tag = 'scoped memory for tpu_custom_call.1']
    #allocation8 [shape = 'u8[2048]{0}', space=vmem, size = 0x800, scoped, tag = 'input window, operand 1']
    #allocation9 [shape = 's32[2]{0}', space=sflag, size = 0x8, scoped, tag = 'scoped memory for tpu_custom_call.1']
    #allocation10 [shape = 'u8[1024]{0}', space=vmem, size = 0x400, scoped, tag = 'input window, operand 3']
    #allocation11 [shape = 'u8[1024]{0}', space=vmem, size = 0x400, scoped, tag = 'input window, operand 4']
    #allocation12 [shape = 's32[2]{0}', space=sflag, size = 0x8, scoped, tag = 'scoped memory for tpu_custom_call.1']
    #allocation13 [shape = 'u8[1024]{0}', space=vmem, size = 0x400, scoped, tag = 'input window, operand 5']
    #allocation14 [shape = 'u8[1024]{0}', space=vmem, size = 0x400, scoped, tag = 'input window, operand 6']
    #allocation15 [shape = 's32[2]{0}', space=sflag, size = 0x8, scoped, tag = 'scoped memory for tpu_custom_call.1']
    #allocation16 [shape = 'u8[1024]{0}', space=vmem, size = 0x400, scoped, tag = 'input window, operand 7']
    #allocation17 [shape = 'u8[262144]{0}', space=vmem, size = 0x40000, scoped, tag = 'input window, operand 8']
    #allocation18 [shape = 's32[2]{0}', space=sflag, size = 0x8, scoped, tag = 'scoped memory for tpu_custom_call.1']
    #allocation19 [shape = 'u8[4096]{0}', space=vmem, size = 0x1000, scoped, tag = 'input window, operand 9']
    #allocation20 [shape = 'u8[262144]{0}', space=vmem, size = 0x40000, scoped, tag = 'input window, operand 10']
    #allocation21 [shape = 's32[2]{0}', space=sflag, size = 0x8, scoped, tag = 'scoped memory for tpu_custom_call.1']
    #allocation22 [shape = 'u8[1024]{0}', space=vmem, size = 0x400, scoped, tag = 'input window, operand 11']
    #allocation23 [shape = 'u8[98304]{0}', space=vmem, size = 0x18000, scoped, tag = 'input window, operand 12, single buffered']
    #allocation24 [shape = 's32[1]{0}', space=sflag, size = 0x4, scoped, tag = 'scoped memory for tpu_custom_call.1']
    #allocation25 [shape = 'u8[1536]{0}', space=vmem, size = 0x800, scoped, tag = 'input window, operand 13, single buffered']
    #allocation26 [shape = 'u8[512]{0}', space=vmem, size = 0x400, scoped, tag = 'input window, operand 15, single buffered']
    #allocation27 [shape = 's32[1]{0}', space=sflag, size = 0x4, scoped, tag = 'scoped memory for tpu_custom_call.1']
    #allocation28 [shape = 'u8[1024]{0}', space=vmem, size = 0x400, scoped, tag = 'output window, operand 0, single buffered']
    %25 = vsyncpa [#allocation6], 0
    %s26 = scalar_lea.sflag [#allocation6], 1
    %27 = vsyncpa %s26, 0
    %28 = vsyncpa [#allocation9], 0
    %s29 = scalar_lea.sflag [#allocation9], 1
    %30 = vsyncpa %s29, 0
    %31 = vsyncpa [#allocation12], 0
    %s32 = scalar_lea.sflag [#allocation12], 1
    %33 = vsyncpa %s32, 0
    %34 = vsyncpa [#allocation15], 0
    %s35 = scalar_lea.sflag [#allocation15], 1
    %36 = vsyncpa %s35, 0
    %37 = vsyncpa [#allocation18], 0
    %s38 = scalar_lea.sflag [#allocation18], 1
    %39 = vsyncpa %s38, 0
    %40 = vsyncpa [#allocation21], 0
    %s41 = scalar_lea.sflag [#allocation21], 1
    %42 = vsyncpa %s41, 0
    %43 = vsyncpa [#allocation24], 0
    %44 = vsyncpa [#allocation27], 0
    %45 = vsyncpa [#allocation7], 0
    loop: start=0, step=1, limit=8
    $region2: #{tpu_custom_call.1} parent=1 // loop_pre_header
      _
    $region3: #{tpu_custom_call.1} parent=1 // loop_header
      %s47 = sphi 0, %s51
      %p48 = scmp.ge.s32.totalorder %s47, 8
      %s54 = sphi 0, %s66
      %s55 = sphi 0, %s62
      %s56 = sphi 0, %s54
      %s57 = sphi 0, %s55
      %s58 = sphi 0, %s56
      %s59 = sphi 0, %s57
      %s71 = sphi 0, %s73
      %s74 = sphi 0, %s71
      %s75 = sphi 0, %s74
      %s91 = sphi 0, %s75
      %s99 = sphi 0, %s101
      %s102 = sphi 0, %s99
      %s103 = sphi 0, %s102
      %s119 = sphi 0, %s103
      %s125 = sphi 0, %s127
      %s128 = sphi 0, %s125
      %s129 = sphi 0, %s128
      %s145 = sphi 0, %s129
      %s151 = sphi 0, %s153
      %s154 = sphi 0, %s151
      %s155 = sphi 0, %s154
      %s171 = sphi 0, %s155
      %s177 = sphi 0, %s179
      %s180 = sphi 0, %s177
      %s181 = sphi 0, %s180
      %s197 = sphi 0, %s181
      %s203 = sphi 0, %s205
      %s206 = sphi 0, %s203
      %s207 = sphi 0, %s206
      %s223 = sphi 0, %s207
      %s229 = sphi 0, %s231
      %s232 = sphi 0, %s229
      %s233 = sphi 0, %s232
      %s249 = sphi 0, %s233
      %s255 = sphi 0, %s257
      %s258 = sphi 0, %s255
      %s259 = sphi 0, %s258
      %s275 = sphi 0, %s259
      %s281 = sphi 0, %s283
      %s284 = sphi 0, %s281
      %s285 = sphi 0, %s284
      %s301 = sphi 0, %s285
      %s307 = sphi 0, %s309
      %s310 = sphi 0, %s307
      %s311 = sphi 0, %s310
      %s327 = sphi 0, %s311
      %s333 = sphi 0, %s335
      %s336 = sphi 0, %s333
      %s337 = sphi 0, %s336
      %s353 = sphi 0, %s337
      %s359 = sphi 0, %s361
      %s362 = sphi 0, %s359
      %s363 = sphi 0, %s362
      %s379 = sphi 0, %s363
      %s383 = sphi 0, %s383
      %s385 = sphi 0, %s383
      %s386 = sphi 0, %s385
      %s400 = sphi 0, %s386
      %s404 = sphi 0, %s404
      %s406 = sphi 0, %s404
      %s407 = sphi 0, %s406
      %s421 = sphi 0, %s407
      %s425 = sphi 0, %s425
      %s427 = sphi 0, %s425
      %s428 = sphi 0, %s427
      %s442 = sphi 0, %s428
      %s446 = sphi 0, %s446
      %s448 = sphi 0, %s446
      %s449 = sphi 0, %s448
      %s463 = sphi 0, %s449
      %s467 = sphi 0, %s467
      %s469 = sphi 0, %s467
      %s470 = sphi 0, %s469
      %s484 = sphi 0, %s470
      %s488 = sphi 0, %s488
      %s490 = sphi 0, %s488
      %s491 = sphi 0, %s490
      %s505 = sphi 0, %s491
      %s509 = sphi 0, %s509
      %s511 = sphi 0, %s509
      %s512 = sphi 0, %s511
      %s526 = sphi 0, %s512
      %s530 = sphi 0, %s530
      %s532 = sphi 0, %s530
      %s533 = sphi 0, %s532
      %s547 = sphi 0, %s533
      %s553 = sphi 0, %s555
      %s556 = sphi 0, %s553
      %s557 = sphi 0, %s556
      %s573 = sphi 0, %s557
    $region4: #{tpu_custom_call.1} parent=1 // loop_header_branch
      %50 = sbr.rel (%p48) target = $region8
    $region5: #{tpu_custom_call.1} parent=1 // loop_body
      %s52 = ssub.s32 %s47, 1
      %s53 = ssub.s32 %s47, 2
      %s60 = sadd.s32 1, %s55
      %p61 = scmp.ge.s32.totalorder %s60, 6
      %s62 = scalar_select %p61, 0, %s60
      %s63 = sadd.s32 1, %s54
      %s64 = scalar_select %p61, %s63, %s54
      %p65 = scmp.ge.s32.totalorder %s64, 1
      %s66 = scalar_select %p65, 0, %s64
      %s67 = ssub.s32 %s55, %s62
      %s68 = ssub.s32 %s54, %s66
      %s69 = sor.u32 %s67, %s68
      %p70 = scmp.eq.s32.totalorder %s69, 0
      %s72 = sadd.s32 %s71, 1
      %s73 = scalar_select %p70, %s71, %s72
      %p76 = pneg %p70
      %p77 = scmp.eq.s32.totalorder %s47, 5
      %p78 = por %p76, %p77
      %p79 = scmp.ne.s32.totalorder %s71, %s74
      %p80 = scmp.eq.s32.totalorder %s47, 0
      %p81 = por %p79, %p80
      %p82 = scmp.ne.s32.totalorder %s71, %s74
      %p83 = scmp.eq.s32.totalorder %s52, 5
      %p84 = por %p82, %p83
      %p85 = scmp.ne.s32.totalorder %s74, %s75
      %p86 = scmp.eq.s32.totalorder %s52, 0
      %p87 = por %p85, %p86
      %p88 = scmp.ne.s32.totalorder %s74, %s75
      %p89 = scmp.eq.s32.totalorder %s53, 5
      %p90 = por %p88, %p89
      %p92 = scmp.ne.s32.totalorder %s75, %s91
      %p93 = scmp.eq.s32.totalorder %s53, 0
      %p94 = por %p92, %p93
      %s95 = ssub.s32 %s55, %s62
      %s96 = ssub.s32 %s54, %s66
      %s97 = sor.u32 %s95, %s96
      %p98 = scmp.eq.s32.totalorder %s97, 0
      %s100 = sadd.s32 %s99, 1
      %s101 = scalar_select %p98, %s99, %s100
      %p104 = pneg %p98
      %p105 = scmp.eq.s32.totalorder %s47, 5
      %p106 = por %p104, %p105
      %p107 = scmp.ne.s32.totalorder %s99, %s102
      %p108 = scmp.eq.s32.totalorder %s47, 0
      %p109 = por %p107, %p108
      %p110 = scmp.ne.s32.totalorder %s99, %s102
      %p111 = scmp.eq.s32.totalorder %s52, 5
      %p112 = por %p110, %p111
      %p113 = scmp.ne.s32.totalorder %s102, %s103
      %p114 = scmp.eq.s32.totalorder %s52, 0
      %p115 = por %p113, %p114
      %p116 = scmp.ne.s32.totalorder %s102, %s103
      %p117 = scmp.eq.s32.totalorder %s53, 5
      %p118 = por %p116, %p117
      %p120 = scmp.ne.s32.totalorder %s103, %s119
      %p121 = scmp.eq.s32.totalorder %s53, 0
      %p122 = por %p120, %p121
      %s123 = ssub.s32 %s55, %s62
      %p124 = scmp.eq.s32.totalorder %s123, 0
      %s126 = sadd.s32 %s125, 1
      %s127 = scalar_select %p124, %s125, %s126
      %p130 = pneg %p124
      %p131 = scmp.eq.s32.totalorder %s47, 5
      %p132 = por %p130, %p131
      %p133 = scmp.ne.s32.totalorder %s125, %s128
      %p134 = scmp.eq.s32.totalorder %s47, 0
      %p135 = por %p133, %p134
      %p136 = scmp.ne.s32.totalorder %s125, %s128
      %p137 = scmp.eq.s32.totalorder %s52, 5
      %p138 = por %p136, %p137
      %p139 = scmp.ne.s32.totalorder %s128, %s129
      %p140 = scmp.eq.s32.totalorder %s52, 0
      %p141 = por %p139, %p140
      %p142 = scmp.ne.s32.totalorder %s128, %s129
      %p143 = scmp.eq.s32.totalorder %s53, 5
      %p144 = por %p142, %p143
      %p146 = scmp.ne.s32.totalorder %s129, %s145
      %p147 = scmp.eq.s32.totalorder %s53, 0
      %p148 = por %p146, %p147
      %s149 = ssub.s32 %s55, %s62
      %p150 = scmp.eq.s32.totalorder %s149, 0
      %s152 = sadd.s32 %s151, 1
      %s153 = scalar_select %p150, %s151, %s152
      %p156 = pneg %p150
      %p157 = scmp.eq.s32.totalorder %s47, 5
      %p158 = por %p156, %p157
      %p159 = scmp.ne.s32.totalorder %s151, %s154
      %p160 = scmp.eq.s32.totalorder %s47, 0
      %p161 = por %p159, %p160
      %p162 = scmp.ne.s32.totalorder %s151, %s154
      %p163 = scmp.eq.s32.totalorder %s52, 5
      %p164 = por %p162, %p163
      %p165 = scmp.ne.s32.totalorder %s154, %s155
      %p166 = scmp.eq.s32.totalorder %s52, 0
      %p167 = por %p165, %p166
      %p168 = scmp.ne.s32.totalorder %s154, %s155
      %p169 = scmp.eq.s32.totalorder %s53, 5
      %p170 = por %p168, %p169
      %p172 = scmp.ne.s32.totalorder %s155, %s171
      %p173 = scmp.eq.s32.totalorder %s53, 0
      %p174 = por %p172, %p173
      %s175 = ssub.s32 %s55, %s62
      %p176 = scmp.eq.s32.totalorder %s175, 0
      %s178 = sadd.s32 %s177, 1
      %s179 = scalar_select %p176, %s177, %s178
      %p182 = pneg %p176
      %p183 = scmp.eq.s32.totalorder %s47, 5
      %p184 = por %p182, %p183
      %p185 = scmp.ne.s32.totalorder %s177, %s180
      %p186 = scmp.eq.s32.totalorder %s47, 0
      %p187 = por %p185, %p186
      %p188 = scmp.ne.s32.totalorder %s177, %s180
      %p189 = scmp.eq.s32.totalorder %s52, 5
      %p190 = por %p188, %p189
      %p191 = scmp.ne.s32.totalorder %s180, %s181
      %p192 = scmp.eq.s32.totalorder %s52, 0
      %p193 = por %p191, %p192
      %p194 = scmp.ne.s32.totalorder %s180, %s181
      %p195 = scmp.eq.s32.totalorder %s53, 5
      %p196 = por %p194, %p195
      %p198 = scmp.ne.s32.totalorder %s181, %s197
      %p199 = scmp.eq.s32.totalorder %s53, 0
      %p200 = por %p198, %p199
      %s201 = ssub.s32 %s55, %s62
      %p202 = scmp.eq.s32.totalorder %s201, 0
      %s204 = sadd.s32 %s203, 1
      %s205 = scalar_select %p202, %s203, %s204
      %p208 = pneg %p202
      %p209 = scmp.eq.s32.totalorder %s47, 5
      %p210 = por %p208, %p209
      %p211 = scmp.ne.s32.totalorder %s203, %s206
      %p212 = scmp.eq.s32.totalorder %s47, 0
      %p213 = por %p211, %p212
      %p214 = scmp.ne.s32.totalorder %s203, %s206
      %p215 = scmp.eq.s32.totalorder %s52, 5
      %p216 = por %p214, %p215
      %p217 = scmp.ne.s32.totalorder %s206, %s207
      %p218 = scmp.eq.s32.totalorder %s52, 0
      %p219 = por %p217, %p218
      %p220 = scmp.ne.s32.totalorder %s206, %s207
      %p221 = scmp.eq.s32.totalorder %s53, 5
      %p222 = por %p220, %p221
      %p224 = scmp.ne.s32.totalorder %s207, %s223
      %p225 = scmp.eq.s32.totalorder %s53, 0
      %p226 = por %p224, %p225
      %s227 = ssub.s32 %s55, %s62
      %p228 = scmp.eq.s32.totalorder %s227, 0
      %s230 = sadd.s32 %s229, 1
      %s231 = scalar_select %p228, %s229, %s230
      %p234 = pneg %p228
      %p235 = scmp.eq.s32.totalorder %s47, 5
      %p236 = por %p234, %p235
      %p237 = scmp.ne.s32.totalorder %s229, %s232
      %p238 = scmp.eq.s32.totalorder %s47, 0
      %p239 = por %p237, %p238
      %p240 = scmp.ne.s32.totalorder %s229, %s232
      %p241 = scmp.eq.s32.totalorder %s52, 5
      %p242 = por %p240, %p241
      %p243 = scmp.ne.s32.totalorder %s232, %s233
      %p244 = scmp.eq.s32.totalorder %s52, 0
      %p245 = por %p243, %p244
      %p246 = scmp.ne.s32.totalorder %s232, %s233
      %p247 = scmp.eq.s32.totalorder %s53, 5
      %p248 = por %p246, %p247
      %p250 = scmp.ne.s32.totalorder %s233, %s249
      %p251 = scmp.eq.s32.totalorder %s53, 0
      %p252 = por %p250, %p251
      %s253 = ssub.s32 %s55, %s62
      %p254 = scmp.eq.s32.totalorder %s253, 0
      %s256 = sadd.s32 %s255, 1
      %s257 = scalar_select %p254, %s255, %s256
      %p260 = pneg %p254
      %p261 = scmp.eq.s32.totalorder %s47, 5
      %p262 = por %p260, %p261
      %p263 = scmp.ne.s32.totalorder %s255, %s258
      %p264 = scmp.eq.s32.totalorder %s47, 0
      %p265 = por %p263, %p264
      %p266 = scmp.ne.s32.totalorder %s255, %s258
      %p267 = scmp.eq.s32.totalorder %s52, 5
      %p268 = por %p266, %p267
      %p269 = scmp.ne.s32.totalorder %s258, %s259
      %p270 = scmp.eq.s32.totalorder %s52, 0
      %p271 = por %p269, %p270
      %p272 = scmp.ne.s32.totalorder %s258, %s259
      %p273 = scmp.eq.s32.totalorder %s53, 5
      %p274 = por %p272, %p273
      %p276 = scmp.ne.s32.totalorder %s259, %s275
      %p277 = scmp.eq.s32.totalorder %s53, 0
      %p278 = por %p276, %p277
      %s279 = ssub.s32 %s55, %s62
      %p280 = scmp.eq.s32.totalorder %s279, 0
      %s282 = sadd.s32 %s281, 1
      %s283 = scalar_select %p280, %s281, %s282
      %p286 = pneg %p280
      %p287 = scmp.eq.s32.totalorder %s47, 5
      %p288 = por %p286, %p287
      %p289 = scmp.ne.s32.totalorder %s281, %s284
      %p290 = scmp.eq.s32.totalorder %s47, 0
      %p291 = por %p289, %p290
      %p292 = scmp.ne.s32.totalorder %s281, %s284
      %p293 = scmp.eq.s32.totalorder %s52, 5
      %p294 = por %p292, %p293
      %p295 = scmp.ne.s32.totalorder %s284, %s285
      %p296 = scmp.eq.s32.totalorder %s52, 0
      %p297 = por %p295, %p296
      %p298 = scmp.ne.s32.totalorder %s284, %s285
      %p299 = scmp.eq.s32.totalorder %s53, 5
      %p300 = por %p298, %p299
      %p302 = scmp.ne.s32.totalorder %s285, %s301
      %p303 = scmp.eq.s32.totalorder %s53, 0
      %p304 = por %p302, %p303
      %s305 = ssub.s32 %s55, %s62
      %p306 = scmp.eq.s32.totalorder %s305, 0
      %s308 = sadd.s32 %s307, 1
      %s309 = scalar_select %p306, %s307, %s308
      %p312 = pneg %p306
      %p313 = scmp.eq.s32.totalorder %s47, 5
      %p314 = por %p312, %p313
      %p315 = scmp.ne.s32.totalorder %s307, %s310
      %p316 = scmp.eq.s32.totalorder %s47, 0
      %p317 = por %p315, %p316
      %p318 = scmp.ne.s32.totalorder %s307, %s310
      %p319 = scmp.eq.s32.totalorder %s52, 5
      %p320 = por %p318, %p319
      %p321 = scmp.ne.s32.totalorder %s310, %s311
      %p322 = scmp.eq.s32.totalorder %s52, 0
      %p323 = por %p321, %p322
      %p324 = scmp.ne.s32.totalorder %s310, %s311
      %p325 = scmp.eq.s32.totalorder %s53, 5
      %p326 = por %p324, %p325
      %p328 = scmp.ne.s32.totalorder %s311, %s327
      %p329 = scmp.eq.s32.totalorder %s53, 0
      %p330 = por %p328, %p329
      %s331 = ssub.s32 %s55, %s62
      %p332 = scmp.eq.s32.totalorder %s331, 0
      %s334 = sadd.s32 %s333, 1
      %s335 = scalar_select %p332, %s333, %s334
      %p338 = pneg %p332
      %p339 = scmp.eq.s32.totalorder %s47, 5
      %p340 = por %p338, %p339
      %p341 = scmp.ne.s32.totalorder %s333, %s336
      %p342 = scmp.eq.s32.totalorder %s47, 0
      %p343 = por %p341, %p342
      %p344 = scmp.ne.s32.totalorder %s333, %s336
      %p345 = scmp.eq.s32.totalorder %s52, 5
      %p346 = por %p344, %p345
      %p347 = scmp.ne.s32.totalorder %s336, %s337
      %p348 = scmp.eq.s32.totalorder %s52, 0
      %p349 = por %p347, %p348
      %p350 = scmp.ne.s32.totalorder %s336, %s337
      %p351 = scmp.eq.s32.totalorder %s53, 5
      %p352 = por %p350, %p351
      %p354 = scmp.ne.s32.totalorder %s337, %s353
      %p355 = scmp.eq.s32.totalorder %s53, 0
      %p356 = por %p354, %p355
      %s357 = ssub.s32 %s55, %s62
      %p358 = scmp.eq.s32.totalorder %s357, 0
      %s360 = sadd.s32 %s359, 1
      %s361 = scalar_select %p358, %s359, %s360
      %p364 = pneg %p358
      %p365 = scmp.eq.s32.totalorder %s47, 5
      %p366 = por %p364, %p365
      %p367 = scmp.ne.s32.totalorder %s359, %s362
      %p368 = scmp.eq.s32.totalorder %s47, 0
      %p369 = por %p367, %p368
      %p370 = scmp.ne.s32.totalorder %s359, %s362
      %p371 = scmp.eq.s32.totalorder %s52, 5
      %p372 = por %p370, %p371
      %p373 = scmp.ne.s32.totalorder %s362, %s363
      %p374 = scmp.eq.s32.totalorder %s52, 0
      %p375 = por %p373, %p374
      %p376 = scmp.ne.s32.totalorder %s362, %s363
      %p377 = scmp.eq.s32.totalorder %s53, 5
      %p378 = por %p376, %p377
      %p380 = scmp.ne.s32.totalorder %s363, %s379
      %p381 = scmp.eq.s32.totalorder %s53, 0
      %p382 = por %p380, %p381
      %s384 = sadd.s32 %s383, 1
      %p387 = scmp.eq.s32.totalorder %s47, 5
      %p388 = scmp.ne.s32.totalorder %s383, %s385
      %p389 = scmp.eq.s32.totalorder %s47, 0
      %p390 = por %p388, %p389
      %p391 = scmp.ne.s32.totalorder %s383, %s385
      %p392 = scmp.eq.s32.totalorder %s52, 5
      %p393 = por %p391, %p392
      %p394 = scmp.ne.s32.totalorder %s385, %s386
      %p395 = scmp.eq.s32.totalorder %s52, 0
      %p396 = por %p394, %p395
      %p397 = scmp.ne.s32.totalorder %s385, %s386
      %p398 = scmp.eq.s32.totalorder %s53, 5
      %p399 = por %p397, %p398
      %p401 = scmp.ne.s32.totalorder %s386, %s400
      %p402 = scmp.eq.s32.totalorder %s53, 0
      %p403 = por %p401, %p402
      %s405 = sadd.s32 %s404, 1
      %p408 = scmp.eq.s32.totalorder %s47, 5
      %p409 = scmp.ne.s32.totalorder %s404, %s406
      %p410 = scmp.eq.s32.totalorder %s47, 0
      %p411 = por %p409, %p410
      %p412 = scmp.ne.s32.totalorder %s404, %s406
      %p413 = scmp.eq.s32.totalorder %s52, 5
      %p414 = por %p412, %p413
      %p415 = scmp.ne.s32.totalorder %s406, %s407
      %p416 = scmp.eq.s32.totalorder %s52, 0
      %p417 = por %p415, %p416
      %p418 = scmp.ne.s32.totalorder %s406, %s407
      %p419 = scmp.eq.s32.totalorder %s53, 5
      %p420 = por %p418, %p419
      %p422 = scmp.ne.s32.totalorder %s407, %s421
      %p423 = scmp.eq.s32.totalorder %s53, 0
      %p424 = por %p422, %p423
      %s426 = sadd.s32 %s425, 1
      %p429 = scmp.eq.s32.totalorder %s47, 5
      %p430 = scmp.ne.s32.totalorder %s425, %s427
      %p431 = scmp.eq.s32.totalorder %s47, 0
      %p432 = por %p430, %p431
      %p433 = scmp.ne.s32.totalorder %s425, %s427
      %p434 = scmp.eq.s32.totalorder %s52, 5
      %p435 = por %p433, %p434
      %p436 = scmp.ne.s32.totalorder %s427, %s428
      %p437 = scmp.eq.s32.totalorder %s52, 0
      %p438 = por %p436, %p437
      %p439 = scmp.ne.s32.totalorder %s427, %s428
      %p440 = scmp.eq.s32.totalorder %s53, 5
      %p441 = por %p439, %p440
      %p443 = scmp.ne.s32.totalorder %s428, %s442
      %p444 = scmp.eq.s32.totalorder %s53, 0
      %p445 = por %p443, %p444
      %s447 = sadd.s32 %s446, 1
      %p450 = scmp.eq.s32.totalorder %s47, 5
      %p451 = scmp.ne.s32.totalorder %s446, %s448
      %p452 = scmp.eq.s32.totalorder %s47, 0
      %p453 = por %p451, %p452
      %p454 = scmp.ne.s32.totalorder %s446, %s448
      %p455 = scmp.eq.s32.totalorder %s52, 5
      %p456 = por %p454, %p455
      %p457 = scmp.ne.s32.totalorder %s448, %s449
      %p458 = scmp.eq.s32.totalorder %s52, 0
      %p459 = por %p457, %p458
      %p460 = scmp.ne.s32.totalorder %s448, %s449
      %p461 = scmp.eq.s32.totalorder %s53, 5
      %p462 = por %p460, %p461
      %p464 = scmp.ne.s32.totalorder %s449, %s463
      %p465 = scmp.eq.s32.totalorder %s53, 0
      %p466 = por %p464, %p465
      %s468 = sadd.s32 %s467, 1
      %p471 = scmp.eq.s32.totalorder %s47, 5
      %p472 = scmp.ne.s32.totalorder %s467, %s469
      %p473 = scmp.eq.s32.totalorder %s47, 0
      %p474 = por %p472, %p473
      %p475 = scmp.ne.s32.totalorder %s467, %s469
      %p476 = scmp.eq.s32.totalorder %s52, 5
      %p477 = por %p475, %p476
      %p478 = scmp.ne.s32.totalorder %s469, %s470
      %p479 = scmp.eq.s32.totalorder %s52, 0
      %p480 = por %p478, %p479
      %p481 = scmp.ne.s32.totalorder %s469, %s470
      %p482 = scmp.eq.s32.totalorder %s53, 5
      %p483 = por %p481, %p482
      %p485 = scmp.ne.s32.totalorder %s470, %s484
      %p486 = scmp.eq.s32.totalorder %s53, 0
      %p487 = por %p485, %p486
      %s489 = sadd.s32 %s488, 1
      %p492 = scmp.eq.s32.totalorder %s47, 5
      %p493 = scmp.ne.s32.totalorder %s488, %s490
      %p494 = scmp.eq.s32.totalorder %s47, 0
      %p495 = por %p493, %p494
      %p496 = scmp.ne.s32.totalorder %s488, %s490
      %p497 = scmp.eq.s32.totalorder %s52, 5
      %p498 = por %p496, %p497
      %p499 = scmp.ne.s32.totalorder %s490, %s491
      %p500 = scmp.eq.s32.totalorder %s52, 0
      %p501 = por %p499, %p500
      %p502 = scmp.ne.s32.totalorder %s490, %s491
      %p503 = scmp.eq.s32.totalorder %s53, 5
      %p504 = por %p502, %p503
      %p506 = scmp.ne.s32.totalorder %s491, %s505
      %p507 = scmp.eq.s32.totalorder %s53, 0
      %p508 = por %p506, %p507
      %s510 = sadd.s32 %s509, 1
      %p513 = scmp.eq.s32.totalorder %s47, 5
      %p514 = scmp.ne.s32.totalorder %s509, %s511
      %p515 = scmp.eq.s32.totalorder %s47, 0
      %p516 = por %p514, %p515
      %p517 = scmp.ne.s32.totalorder %s509, %s511
      %p518 = scmp.eq.s32.totalorder %s52, 5
      %p519 = por %p517, %p518
      %p520 = scmp.ne.s32.totalorder %s511, %s512
      %p521 = scmp.eq.s32.totalorder %s52, 0
      %p522 = por %p520, %p521
      %p523 = scmp.ne.s32.totalorder %s511, %s512
      %p524 = scmp.eq.s32.totalorder %s53, 5
      %p525 = por %p523, %p524
      %p527 = scmp.ne.s32.totalorder %s512, %s526
      %p528 = scmp.eq.s32.totalorder %s53, 0
      %p529 = por %p527, %p528
      %s531 = sadd.s32 %s530, 1
      %p534 = scmp.eq.s32.totalorder %s47, 5
      %p535 = scmp.ne.s32.totalorder %s530, %s532
      %p536 = scmp.eq.s32.totalorder %s47, 0
      %p537 = por %p535, %p536
      %p538 = scmp.ne.s32.totalorder %s530, %s532
      %p539 = scmp.eq.s32.totalorder %s52, 5
      %p540 = por %p538, %p539
      %p541 = scmp.ne.s32.totalorder %s532, %s533
      %p542 = scmp.eq.s32.totalorder %s52, 0
      %p543 = por %p541, %p542
      %p544 = scmp.ne.s32.totalorder %s532, %s533
      %p545 = scmp.eq.s32.totalorder %s53, 5
      %p546 = por %p544, %p545
      %p548 = scmp.ne.s32.totalorder %s533, %s547
      %p549 = scmp.eq.s32.totalorder %s53, 0
      %p550 = por %p548, %p549
      %s551 = ssub.s32 %s54, %s66
      %p552 = scmp.eq.s32.totalorder %s551, 0
      %s554 = sadd.s32 %s553, 1
      %s555 = scalar_select %p552, %s553, %s554
      %p558 = pneg %p552
      %p559 = scmp.eq.s32.totalorder %s47, 5
      %p560 = por %p558, %p559
      %p561 = scmp.ne.s32.totalorder %s553, %s556
      %p562 = scmp.eq.s32.totalorder %s47, 0
      %p563 = por %p561, %p562
      %p564 = scmp.ne.s32.totalorder %s553, %s556
      %p565 = scmp.eq.s32.totalorder %s52, 5
      %p566 = por %p564, %p565
      %p567 = scmp.ne.s32.totalorder %s556, %s557
      %p568 = scmp.eq.s32.totalorder %s52, 0
      %p569 = por %p567, %p568
      %p570 = scmp.ne.s32.totalorder %s556, %s557
      %p571 = scmp.eq.s32.totalorder %s53, 5
      %p572 = por %p570, %p571
      %p574 = scmp.ne.s32.totalorder %s557, %s573
      %p575 = scmp.eq.s32.totalorder %s53, 0
      %p576 = por %p574, %p575
      %p577 = scmp.le.s32.totalorder 1, %s47
      %p578 = scmp.lt.s32.totalorder %s47, 7
      %p579 = pnand %p577, %p578
      %p580 = pneg %p579
      // Predicated region
      $region9: #{tpu_custom_call.1} parent=5 // pred_check
        _
      $region10: #{tpu_custom_call.1} parent=5 // pred_check_branch
        %582 = sbr.rel (%p579) target = $region12
      $region11: #{tpu_custom_call.1} parent=5 // pred_region
        %s583 = ssub.s32 %s47, 1
        // Predicated region
        $region13: #{tpu_custom_call.1} parent=11 // pred_check
          %p584 = pneg %p396
        $region14: #{tpu_custom_call.1} parent=11 // pred_check_branch
          %586 = sbr.rel (%p584) target = $region16
        $region15: #{tpu_custom_call.1} parent=11 // pred_region
          %s588 = ssub.s32 3072, 3072
          %589 = vsyncadd [#allocation24], %s588
          %s590 = sshll.u32 [#allocation23], 4
          %s591 = int_to_ptr.vmem [resolvable:$true] %s590
          %596 = dma.hbm_to_vmem [thread:$0]  %s12, 3072, %s591, [#allocation24], 64, 64, 4
        $region16: #{tpu_custom_call.1} parent=11 // pred_fallthru
          _
        // Predicated region
        $region17: #{tpu_custom_call.1} parent=11 // pred_check
          %p597 = pneg %p417
        $region18: #{tpu_custom_call.1} parent=11 // pred_check_branch
          %599 = sbr.rel (%p597) target = $region20
        $region19: #{tpu_custom_call.1} parent=11 // pred_region
          %s601 = ssub.s32 48, 48
          %602 = vsyncadd [#allocation24], %s601
          %s603 = sshll.u32 [#allocation25], 4
          %s604 = int_to_ptr.vmem [resolvable:$true] %s603
          %609 = dma.hbm_to_vmem [thread:$0]  %s13, 48, %s604, [#allocation24], 16, 16, 1
        $region20: #{tpu_custom_call.1} parent=11 // pred_fallthru
          _
        // Predicated region
        $region21: #{tpu_custom_call.1} parent=11 // pred_check
          %p610 = pneg %p438
        $region22: #{tpu_custom_call.1} parent=11 // pred_check_branch
          %612 = sbr.rel (%p610) target = $region24
        $region23: #{tpu_custom_call.1} parent=11 // pred_region
          _
        $region24: #{tpu_custom_call.1} parent=11 // pred_fallthru
          _
        // Predicated region
        $region25: #{tpu_custom_call.1} parent=11 // pred_check
          %p613 = pneg %p459
        $region26: #{tpu_custom_call.1} parent=11 // pred_check_branch
          %615 = sbr.rel (%p613) target = $region28
        $region27: #{tpu_custom_call.1} parent=11 // pred_region
          %s617 = ssub.s32 16, 16
          %618 = vsyncadd [#allocation27], %s617
          %s620 = sshll.u32 [#allocation26], 4
          %s621 = int_to_ptr.vmem [resolvable:$true] %s620
          %623 = dma.hbm_to_vmem [thread:$0]  %s15, 16, %s621, [#allocation27]
        $region28: #{tpu_custom_call.1} parent=11 // pred_fallthru
          _
        // Predicated region
        $region29: #{tpu_custom_call.1} parent=11 // pred_check
          %p624 = pneg %p480
        $region30: #{tpu_custom_call.1} parent=11 // pred_check_branch
          %626 = sbr.rel (%p624) target = $region32
        $region31: #{tpu_custom_call.1} parent=11 // pred_region
          _
        $region32: #{tpu_custom_call.1} parent=11 // pred_fallthru
          _
        // Predicated region
        $region33: #{tpu_custom_call.1} parent=11 // pred_check
          %p627 = pneg %p501
        $region34: #{tpu_custom_call.1} parent=11 // pred_check_branch
          %629 = sbr.rel (%p627) target = $region36
        $region35: #{tpu_custom_call.1} parent=11 // pred_region
          _
        $region36: #{tpu_custom_call.1} parent=11 // pred_fallthru
          _
        // Predicated region
        $region37: #{tpu_custom_call.1} parent=11 // pred_check
          %p630 = pneg %p522
        $region38: #{tpu_custom_call.1} parent=11 // pred_check_branch
          %632 = sbr.rel (%p630) target = $region40
        $region39: #{tpu_custom_call.1} parent=11 // pred_region
          _
        $region40: #{tpu_custom_call.1} parent=11 // pred_fallthru
          _
        // Predicated region
        $region41: #{tpu_custom_call.1} parent=11 // pred_check
          %p633 = pneg %p543
        $region42: #{tpu_custom_call.1} parent=11 // pred_check_branch
          %635 = sbr.rel (%p633) target = $region44
        $region43: #{tpu_custom_call.1} parent=11 // pred_region
          _
        $region44: #{tpu_custom_call.1} parent=11 // pred_fallthru
          _
      $region12: #{tpu_custom_call.1} parent=5 // pred_fallthru
        _
      %p636 = scmp.lt.s32.totalorder %s47, 6
      // Predicated region
      $region45: #{tpu_custom_call.1} parent=5 // pred_check
        %p637 = pneg %p636
      $region46: #{tpu_custom_call.1} parent=5 // pred_check_branch
        %639 = sbr.rel (%p637) target = $region48
      $region47: #{tpu_custom_call.1} parent=5 // pred_region
        // Predicated region
        $region49: #{tpu_custom_call.1} parent=47 // pred_check
          %p640 = pneg %p81
        $region50: #{tpu_custom_call.1} parent=47 // pred_check_branch
          %642 = sbr.rel (%p640) target = $region52
        $region51: #{tpu_custom_call.1} parent=47 // pred_region
          %s643 = sand.u32 %s71, 1
          %s644 = scalar_lea.sflag [#allocation6], %s643
          %s645 = sand.u32 %s71, 1
          %s646 = smul.addr %s645, 2
          %s647 = scalar_lea.vmem [#allocation5], %s646
          %s649 = ssub.s32 32, 32
          %650 = vsyncadd %s644, %s649
          %s651 = sadd.s32 %s54, %s55
          %s652 = smul.addr %s651, 32
          %s653 = scalar_lea.hbm %s0, %s652
          %s655 = sshll.u32 %s647, 4
          %s656 = int_to_ptr.vmem [resolvable:$true] %s655
          %658 = dma.hbm_to_vmem [thread:$0]  %s653, 32, %s656, %s644
        $region52: #{tpu_custom_call.1} parent=47 // pred_fallthru
          _
        // Predicated region
        $region53: #{tpu_custom_call.1} parent=47 // pred_check
          %p659 = pneg %p109
        $region54: #{tpu_custom_call.1} parent=47 // pred_check_branch
          %661 = sbr.rel (%p659) target = $region56
        $region55: #{tpu_custom_call.1} parent=47 // pred_region
          %s662 = sand.u32 %s47, 1
          %s663 = scalar_lea.sflag [#allocation9], %s662
          %s664 = sand.u32 %s99, 1
          %s665 = smul.addr %s664, 2
          %s666 = scalar_lea.vmem [#allocation8], %s665
          %s668 = ssub.s32 32, 32
          %669 = vsyncadd %s663, %s668
          %s670 = sadd.s32 %s54, %s55
          %s671 = smul.addr %s670, 32
          %s672 = scalar_lea.hbm %s1, %s671
          %s674 = sshll.u32 %s666, 4
          %s675 = int_to_ptr.vmem [resolvable:$true] %s674
          %677 = dma.hbm_to_vmem [thread:$0]  %s672, 32, %s675, %s663
        $region56: #{tpu_custom_call.1} parent=47 // pred_fallthru
          _
        // Predicated region
        $region57: #{tpu_custom_call.1} parent=47 // pred_check
          %p678 = pneg %p135
        $region58: #{tpu_custom_call.1} parent=47 // pred_check_branch
          %680 = sbr.rel (%p678) target = $region60
        $region59: #{tpu_custom_call.1} parent=47 // pred_region
          %p681 = scmp.lt.s32.totalorder %s55, 5
          %s682 = scalar_select %p681, %s55, 5
          %s683 = smul.addr %s682, 16
          %s684 = smul.addr %s683, 4
          %s685 = scalar_lea.vmem %s2, %s684
        $region60: #{tpu_custom_call.1} parent=47 // pred_fallthru
          _
        // Predicated region
        $region61: #{tpu_custom_call.1} parent=47 // pred_check
          %p686 = pneg %p161
        $region62: #{tpu_custom_call.1} parent=47 // pred_check_branch
          %688 = sbr.rel (%p686) target = $region64
        $region63: #{tpu_custom_call.1} parent=47 // pred_region
          %s689 = sand.u32 %s47, 1
          %s690 = scalar_lea.sflag [#allocation9], %s689
          %s691 = sand.u32 %s151, 1
          %s692 = scalar_lea.vmem [#allocation10], %s691
          %s694 = ssub.s32 16, 16
          %695 = vsyncadd %s690, %s694
          %s696 = smul.addr %s55, 16
          %s697 = scalar_lea.hbm %s3, %s696
          %s699 = sshll.u32 %s692, 4
          %s700 = int_to_ptr.vmem [resolvable:$true] %s699
          %702 = dma.hbm_to_vmem [thread:$0]  %s697, 16, %s700, %s690
        $region64: #{tpu_custom_call.1} parent=47 // pred_fallthru
          _
        // Predicated region
        $region65: #{tpu_custom_call.1} parent=47 // pred_check
          %p703 = pneg %p187
        $region66: #{tpu_custom_call.1} parent=47 // pred_check_branch
          %705 = sbr.rel (%p703) target = $region68
        $region67: #{tpu_custom_call.1} parent=47 // pred_region
          %s706 = sand.u32 %s47, 1
          %s707 = scalar_lea.sflag [#allocation12], %s706
          %s708 = sand.u32 %s177, 1
          %s709 = scalar_lea.vmem [#allocation11], %s708
          %s711 = ssub.s32 16, 16
          %712 = vsyncadd %s707, %s711
          %s713 = smul.addr %s55, 16
          %s714 = scalar_lea.hbm %s4, %s713
          %s716 = sshll.u32 %s709, 4
          %s717 = int_to_ptr.vmem [resolvable:$true] %s716
          %719 = dma.hbm_to_vmem [thread:$0]  %s714, 16, %s717, %s707
        $region68: #{tpu_custom_call.1} parent=47 // pred_fallthru
          _
        // Predicated region
        $region69: #{tpu_custom_call.1} parent=47 // pred_check
          %p720 = pneg %p213
        $region70: #{tpu_custom_call.1} parent=47 // pred_check_branch
          %722 = sbr.rel (%p720) target = $region72
        $region71: #{tpu_custom_call.1} parent=47 // pred_region
          %s723 = sand.u32 %s47, 1
          %s724 = scalar_lea.sflag [#allocation12], %s723
          %s725 = sand.u32 %s203, 1
          %s726 = scalar_lea.vmem [#allocation13], %s725
          %s728 = ssub.s32 16, 16
          %729 = vsyncadd %s724, %s728
          %s730 = smul.addr %s55, 16
          %s731 = scalar_lea.hbm %s5, %s730
          %s733 = sshll.u32 %s726, 4
          %s734 = int_to_ptr.vmem [resolvable:$true] %s733
          %736 = dma.hbm_to_vmem [thread:$0]  %s731, 16, %s734, %s724
        $region72: #{tpu_custom_call.1} parent=47 // pred_fallthru
          _
        // Predicated region
        $region73: #{tpu_custom_call.1} parent=47 // pred_check
          %p737 = pneg %p239
        $region74: #{tpu_custom_call.1} parent=47 // pred_check_branch
          %739 = sbr.rel (%p737) target = $region76
        $region75: #{tpu_custom_call.1} parent=47 // pred_region
          %s740 = sand.u32 %s47, 1
          %s741 = scalar_lea.sflag [#allocation15], %s740
          %s742 = sand.u32 %s229, 1
          %s743 = scalar_lea.vmem [#allocation14], %s742
          %s745 = ssub.s32 16, 16
          %746 = vsyncadd %s741, %s745
          %s747 = smul.addr %s55, 16
          %s748 = scalar_lea.hbm %s6, %s747
          %s750 = sshll.u32 %s743, 4
          %s751 = int_to_ptr.vmem [resolvable:$true] %s750
          %753 = dma.hbm_to_vmem [thread:$0]  %s748, 16, %s751, %s741
        $region76: #{tpu_custom_call.1} parent=47 // pred_fallthru
          _
        // Predicated region
        $region77: #{tpu_custom_call.1} parent=47 // pred_check
          %p754 = pneg %p265
        $region78: #{tpu_custom_call.1} parent=47 // pred_check_branch
          %756 = sbr.rel (%p754) target = $region80
        $region79: #{tpu_custom_call.1} parent=47 // pred_region
          %s757 = sand.u32 %s47, 1
          %s758 = scalar_lea.sflag [#allocation15], %s757
          %s759 = sand.u32 %s255, 1
          %s760 = scalar_lea.vmem [#allocation16], %s759
          %s762 = ssub.s32 16, 16
          %763 = vsyncadd %s758, %s762
          %s764 = smul.addr %s55, 16
          %s765 = scalar_lea.hbm %s7, %s764
          %s767 = sshll.u32 %s760, 4
          %s768 = int_to_ptr.vmem [resolvable:$true] %s767
          %770 = dma.hbm_to_vmem [thread:$0]  %s765, 16, %s768, %s758
        $region80: #{tpu_custom_call.1} parent=47 // pred_fallthru
          _
        // Predicated region
        $region81: #{tpu_custom_call.1} parent=47 // pred_check
          %p771 = pneg %p291
        $region82: #{tpu_custom_call.1} parent=47 // pred_check_branch
          %773 = sbr.rel (%p771) target = $region84
        $region83: #{tpu_custom_call.1} parent=47 // pred_region
          %s774 = sand.u32 %s47, 1
          %s775 = scalar_lea.sflag [#allocation18], %s774
          %s776 = sand.u32 %s281, 1
          %s777 = smul.addr %s776, 256
          %s778 = scalar_lea.vmem [#allocation17], %s777
          %s780 = ssub.s32 4096, 4096
          %781 = vsyncadd %s775, %s780
          %s782 = smul.addr %s55, 64
          %s783 = smul.addr %s782, 64
          %s784 = scalar_lea.hbm %s8, %s783
          %s785 = sshll.u32 %s778, 4
          %s786 = int_to_ptr.vmem [resolvable:$true] %s785
          %791 = dma.hbm_to_vmem [thread:$0]  %s784, 4096, %s786, %s775, 256, 256, 16
        $region84: #{tpu_custom_call.1} parent=47 // pred_fallthru
          _
        // Predicated region
        $region85: #{tpu_custom_call.1} parent=47 // pred_check
          %p792 = pneg %p317
        $region86: #{tpu_custom_call.1} parent=47 // pred_check_branch
          %794 = sbr.rel (%p792) target = $region88
        $region87: #{tpu_custom_call.1} parent=47 // pred_region
          %s795 = sand.u32 %s47, 1
          %s796 = scalar_lea.sflag [#allocation18], %s795
          %s797 = sand.u32 %s307, 1
          %s798 = smul.addr %s797, 4
          %s799 = scalar_lea.vmem [#allocation19], %s798
          %s801 = ssub.s32 64, 64
          %802 = vsyncadd %s796, %s801
          %s803 = smul.addr %s55, 4
          %s804 = smul.addr %s803, 16
          %s805 = scalar_lea.hbm %s9, %s804
          %s807 = sshll.u32 %s799, 4
          %s808 = int_to_ptr.vmem [resolvable:$true] %s807
          %810 = dma.hbm_to_vmem [thread:$0]  %s805, 64, %s808, %s796
        $region88: #{tpu_custom_call.1} parent=47 // pred_fallthru
          _
        // Predicated region
        $region89: #{tpu_custom_call.1} parent=47 // pred_check
          %p811 = pneg %p343
        $region90: #{tpu_custom_call.1} parent=47 // pred_check_branch
          %813 = sbr.rel (%p811) target = $region92
        $region91: #{tpu_custom_call.1} parent=47 // pred_region
          %s814 = sand.u32 %s47, 1
          %s815 = scalar_lea.sflag [#allocation21], %s814
          %s816 = sand.u32 %s333, 1
          %s817 = smul.addr %s816, 256
          %s818 = scalar_lea.vmem [#allocation20], %s817
          %s820 = ssub.s32 4096, 4096
          %821 = vsyncadd %s815, %s820
          %s822 = smul.addr %s55, 64
          %s823 = smul.addr %s822, 64
          %s824 = scalar_lea.hbm %s10, %s823
          %s825 = sshll.u32 %s818, 4
          %s826 = int_to_ptr.vmem [resolvable:$true] %s825
          %831 = dma.hbm_to_vmem [thread:$0]  %s824, 4096, %s826, %s815, 64, 64, 4
        $region92: #{tpu_custom_call.1} parent=47 // pred_fallthru
          _
        // Predicated region
        $region93: #{tpu_custom_call.1} parent=47 // pred_check
          %p832 = pneg %p369
        $region94: #{tpu_custom_call.1} parent=47 // pred_check_branch
          %834 = sbr.rel (%p832) target = $region96
        $region95: #{tpu_custom_call.1} parent=47 // pred_region
          %s835 = sand.u32 %s47, 1
          %s836 = scalar_lea.sflag [#allocation21], %s835
          %s837 = sand.u32 %s359, 1
          %s838 = scalar_lea.vmem [#allocation22], %s837
          %s840 = ssub.s32 16, 16
          %841 = vsyncadd %s836, %s840
          %s842 = smul.addr %s55, 16
          %s843 = scalar_lea.hbm %s11, %s842
          %s845 = sshll.u32 %s838, 4
          %s846 = int_to_ptr.vmem [resolvable:$true] %s845
          %848 = dma.hbm_to_vmem [thread:$0]  %s843, 16, %s846, %s836
        $region96: #{tpu_custom_call.1} parent=47 // pred_fallthru
          _
      $region48: #{tpu_custom_call.1} parent=5 // pred_fallthru
        _
      %p849 = scmp.le.s32.totalorder 1, %s47
      %p850 = scmp.lt.s32.totalorder %s47, 7
      %p851 = pnand %p849, %p850
      %p852 = pneg %p851
      // Predicated region
      $region97: #{tpu_custom_call.1} parent=5 // pred_check
        _
      $region98: #{tpu_custom_call.1} parent=5 // pred_check_branch
        %854 = sbr.rel (%p851) target = $region100
      $region99: #{tpu_custom_call.1} parent=5 // pred_region
        %s855 = ssub.s32 %s47, 1
        %s856 = sand.u32 %s74, 1
        %s857 = scalar_lea.sflag [#allocation6], %s856
        %s858 = sand.u32 %s74, 1
        %s859 = smul.addr %s858, 2
        %s860 = scalar_lea.vmem [#allocation5], %s859
        // Predicated region
        $region101: #{tpu_custom_call.1} parent=99 // pred_check
          %p861 = pneg %p87
        $region102: #{tpu_custom_call.1} parent=99 // pred_check_branch
          %863 = sbr.rel (%p861) target = $region104
        $region103: #{tpu_custom_call.1} parent=99 // pred_region
          %864 = dma.done %s857, 32
        $region104: #{tpu_custom_call.1} parent=99 // pred_fallthru
          _
        %s865 = sand.u32 %s52, 1
        %s866 = scalar_lea.sflag [#allocation9], %s865
        %s867 = sand.u32 %s102, 1
        %s868 = smul.addr %s867, 2
        %s869 = scalar_lea.vmem [#allocation8], %s868
        // Predicated region
        $region105: #{tpu_custom_call.1} parent=99 // pred_check
          %p870 = pneg %p115
        $region106: #{tpu_custom_call.1} parent=99 // pred_check_branch
          %872 = sbr.rel (%p870) target = $region108
        $region107: #{tpu_custom_call.1} parent=99 // pred_region
          %873 = dma.done %s866, 32
        $region108: #{tpu_custom_call.1} parent=99 // pred_fallthru
          _
        %s874 = sand.u32 %s52, 1
        %s875 = scalar_lea.sflag [#allocation9], %s874
        %s876 = sand.u32 %s154, 1
        %s877 = scalar_lea.vmem [#allocation10], %s876
        // Predicated region
        $region109: #{tpu_custom_call.1} parent=99 // pred_check
          %p878 = pneg %p167
        $region110: #{tpu_custom_call.1} parent=99 // pred_check_branch
          %880 = sbr.rel (%p878) target = $region112
        $region111: #{tpu_custom_call.1} parent=99 // pred_region
          %881 = dma.done %s875, 16
        $region112: #{tpu_custom_call.1} parent=99 // pred_fallthru
          _
        %s882 = sand.u32 %s52, 1
        %s883 = scalar_lea.sflag [#allocation12], %s882
        %s884 = sand.u32 %s180, 1
        %s885 = scalar_lea.vmem [#allocation11], %s884
        // Predicated region
        $region113: #{tpu_custom_call.1} parent=99 // pred_check
          %p886 = pneg %p193
        $region114: #{tpu_custom_call.1} parent=99 // pred_check_branch
          %888 = sbr.rel (%p886) target = $region116
        $region115: #{tpu_custom_call.1} parent=99 // pred_region
          %889 = dma.done %s883, 16
        $region116: #{tpu_custom_call.1} parent=99 // pred_fallthru
          _
        %s890 = sand.u32 %s52, 1
        %s891 = scalar_lea.sflag [#allocation12], %s890
        %s892 = sand.u32 %s206, 1
        %s893 = scalar_lea.vmem [#allocation13], %s892
        // Predicated region
        $region117: #{tpu_custom_call.1} parent=99 // pred_check
          %p894 = pneg %p219
        $region118: #{tpu_custom_call.1} parent=99 // pred_check_branch
          %896 = sbr.rel (%p894) target = $region120
        $region119: #{tpu_custom_call.1} parent=99 // pred_region
          %897 = dma.done %s891, 16
        $region120: #{tpu_custom_call.1} parent=99 // pred_fallthru
          _
        %s898 = sand.u32 %s52, 1
        %s899 = scalar_lea.sflag [#allocation15], %s898
        %s900 = sand.u32 %s232, 1
        %s901 = scalar_lea.vmem [#allocation14], %s900
        // Predicated region
        $region121: #{tpu_custom_call.1} parent=99 // pred_check
          %p902 = pneg %p245
        $region122: #{tpu_custom_call.1} parent=99 // pred_check_branch
          %904 = sbr.rel (%p902) target = $region124
        $region123: #{tpu_custom_call.1} parent=99 // pred_region
          %905 = dma.done %s899, 16
        $region124: #{tpu_custom_call.1} parent=99 // pred_fallthru
          _
        %s906 = sand.u32 %s52, 1
        %s907 = scalar_lea.sflag [#allocation15], %s906
        %s908 = sand.u32 %s258, 1
        %s909 = scalar_lea.vmem [#allocation16], %s908
        // Predicated region
        $region125: #{tpu_custom_call.1} parent=99 // pred_check
          %p910 = pneg %p271
        $region126: #{tpu_custom_call.1} parent=99 // pred_check_branch
          %912 = sbr.rel (%p910) target = $region128
        $region127: #{tpu_custom_call.1} parent=99 // pred_region
          %913 = dma.done %s907, 16
        $region128: #{tpu_custom_call.1} parent=99 // pred_fallthru
          _
        %s914 = sand.u32 %s52, 1
        %s915 = scalar_lea.sflag [#allocation18], %s914
        %s916 = sand.u32 %s284, 1
        %s917 = smul.addr %s916, 256
        %s918 = scalar_lea.vmem [#allocation17], %s917
        // Predicated region
        $region129: #{tpu_custom_call.1} parent=99 // pred_check
          %p919 = pneg %p297
        $region130: #{tpu_custom_call.1} parent=99 // pred_check_branch
          %921 = sbr.rel (%p919) target = $region132
        $region131: #{tpu_custom_call.1} parent=99 // pred_region
          %922 = dma.done %s915, 4096
        $region132: #{tpu_custom_call.1} parent=99 // pred_fallthru
          _
        %s923 = sand.u32 %s52, 1
        %s924 = scalar_lea.sflag [#allocation18], %s923
        %s925 = sand.u32 %s310, 1
        %s926 = smul.addr %s925, 4
        %s927 = scalar_lea.vmem [#allocation19], %s926
        // Predicated region
        $region133: #{tpu_custom_call.1} parent=99 // pred_check
          %p928 = pneg %p323
        $region134: #{tpu_custom_call.1} parent=99 // pred_check_branch
          %930 = sbr.rel (%p928) target = $region136
        $region135: #{tpu_custom_call.1} parent=99 // pred_region
          %931 = dma.done %s924, 64
        $region136: #{tpu_custom_call.1} parent=99 // pred_fallthru
          _
        %s932 = sand.u32 %s52, 1
        %s933 = scalar_lea.sflag [#allocation21], %s932
        %s934 = sand.u32 %s336, 1
        %s935 = smul.addr %s934, 256
        %s936 = scalar_lea.vmem [#allocation20], %s935
        // Predicated region
        $region137: #{tpu_custom_call.1} parent=99 // pred_check
          %p937 = pneg %p349
        $region138: #{tpu_custom_call.1} parent=99 // pred_check_branch
          %939 = sbr.rel (%p937) target = $region140
        $region139: #{tpu_custom_call.1} parent=99 // pred_region
          %940 = dma.done %s933, 4096
        $region140: #{tpu_custom_call.1} parent=99 // pred_fallthru
          _
        %s941 = sand.u32 %s52, 1
        %s942 = scalar_lea.sflag [#allocation21], %s941
        %s943 = sand.u32 %s362, 1
        %s944 = scalar_lea.vmem [#allocation22], %s943
        // Predicated region
        $region141: #{tpu_custom_call.1} parent=99 // pred_check
          %p945 = pneg %p375
        $region142: #{tpu_custom_call.1} parent=99 // pred_check_branch
          %947 = sbr.rel (%p945) target = $region144
        $region143: #{tpu_custom_call.1} parent=99 // pred_region
          %948 = dma.done %s942, 16
        $region144: #{tpu_custom_call.1} parent=99 // pred_fallthru
          _
        // Predicated region
        $region145: #{tpu_custom_call.1} parent=99 // pred_check
          %p949 = pneg %p396
        $region146: #{tpu_custom_call.1} parent=99 // pred_check_branch
          %951 = sbr.rel (%p949) target = $region148
        $region147: #{tpu_custom_call.1} parent=99 // pred_region
          %952 = dma.done [#allocation24], 3072
        $region148: #{tpu_custom_call.1} parent=99 // pred_fallthru
          _
        // Predicated region
        $region149: #{tpu_custom_call.1} parent=99 // pred_check
          %p953 = pneg %p417
        $region150: #{tpu_custom_call.1} parent=99 // pred_check_branch
          %955 = sbr.rel (%p953) target = $region152
        $region151: #{tpu_custom_call.1} parent=99 // pred_region
          %956 = dma.done [#allocation24], 48
        $region152: #{tpu_custom_call.1} parent=99 // pred_fallthru
          _
        // Predicated region
        $region153: #{tpu_custom_call.1} parent=99 // pred_check
          %p957 = pneg %p459
        $region154: #{tpu_custom_call.1} parent=99 // pred_check_branch
          %959 = sbr.rel (%p957) target = $region156
        $region155: #{tpu_custom_call.1} parent=99 // pred_region
          %960 = dma.done [#allocation27], 16
        $region156: #{tpu_custom_call.1} parent=99 // pred_fallthru
          _
        %s961 = sand.u32 %s74, 1
        %s962 = scalar_lea.sflag [#allocation6], %s961
        %s963 = sand.u32 %s74, 1
        %s964 = smul.addr %s963, 2
        %s965 = scalar_lea.vmem [#allocation5], %s964
        %p966 = pneg %p87
        %p967 = pneg %p84
        %s968 = sand.u32 %s52, 1
        %s969 = scalar_lea.sflag [#allocation9], %s968
        %s970 = sand.u32 %s102, 1
        %s971 = smul.addr %s970, 2
        %s972 = scalar_lea.vmem [#allocation8], %s971
        %p973 = pneg %p115
        %p974 = pneg %p112
        %p975 = scmp.lt.s32.totalorder %s57, 5
        %s976 = scalar_select %p975, %s57, 5
        %s977 = smul.addr %s976, 16
        %s978 = smul.addr %s977, 4
        %s979 = scalar_lea.vmem %s2, %s978
        %p980 = pneg %p141
        %p981 = pneg %p138
        %s982 = sand.u32 %s52, 1
        %s983 = scalar_lea.sflag [#allocation9], %s982
        %s984 = sand.u32 %s154, 1
        %s985 = scalar_lea.vmem [#allocation10], %s984
        %p986 = pneg %p167
        %p987 = pneg %p164
        %s988 = sand.u32 %s52, 1
        %s989 = scalar_lea.sflag [#allocation12], %s988
        %s990 = sand.u32 %s180, 1
        %s991 = scalar_lea.vmem [#allocation11], %s990
        %p992 = pneg %p193
        %p993 = pneg %p190
        %s994 = sand.u32 %s52, 1
        %s995 = scalar_lea.sflag [#allocation12], %s994
        %s996 = sand.u32 %s206, 1
        %s997 = scalar_lea.vmem [#allocation13], %s996
        %p998 = pneg %p219
        %p999 = pneg %p216
        %s1000 = sand.u32 %s52, 1
        %s1001 = scalar_lea.sflag [#allocation15], %s1000
        %s1002 = sand.u32 %s232, 1
        %s1003 = scalar_lea.vmem [#allocation14], %s1002
        %p1004 = pneg %p245
        %p1005 = pneg %p242
        %s1006 = sand.u32 %s52, 1
        %s1007 = scalar_lea.sflag [#allocation15], %s1006
        %s1008 = sand.u32 %s258, 1
        %s1009 = scalar_lea.vmem [#allocation16], %s1008
        %p1010 = pneg %p271
        %p1011 = pneg %p268
        %s1012 = sand.u32 %s52, 1
        %s1013 = scalar_lea.sflag [#allocation18], %s1012
        %s1014 = sand.u32 %s284, 1
        %s1015 = smul.addr %s1014, 256
        %s1016 = scalar_lea.vmem [#allocation17], %s1015
        %p1017 = pneg %p297
        %p1018 = pneg %p294
        %s1019 = sand.u32 %s52, 1
        %s1020 = scalar_lea.sflag [#allocation18], %s1019
        %s1021 = sand.u32 %s310, 1
        %s1022 = smul.addr %s1021, 4
        %s1023 = scalar_lea.vmem [#allocation19], %s1022
        %p1024 = pneg %p323
        %p1025 = pneg %p320
        %s1026 = sand.u32 %s52, 1
        %s1027 = scalar_lea.sflag [#allocation21], %s1026
        %s1028 = sand.u32 %s336, 1
        %s1029 = smul.addr %s1028, 256
        %s1030 = scalar_lea.vmem [#allocation20], %s1029
        %p1031 = pneg %p349
        %p1032 = pneg %p346
        %s1033 = sand.u32 %s52, 1
        %s1034 = scalar_lea.sflag [#allocation21], %s1033
        %s1035 = sand.u32 %s362, 1
        %s1036 = scalar_lea.vmem [#allocation22], %s1035
        %p1037 = pneg %p375
        %p1038 = pneg %p372
        %p1039 = pneg %p396
        %p1040 = pneg %p393
        %p1041 = pneg %p417
        %p1042 = pneg %p414
        %p1043 = pneg %p438
        %p1044 = pneg %p435
        %p1045 = pneg %p459
        %p1046 = pneg %p456
        %p1047 = pneg %p480
        %p1048 = pneg %p477
        %p1049 = pneg %p501
        %p1050 = pneg %p498
        %p1051 = pneg %p522
        %p1052 = pneg %p519
        %p1053 = pneg %p543
        %p1054 = pneg %p540
        %p1055 = pneg %p569
        %p1056 = pneg %p566
        %p1057 = scmp.lt.s32.totalorder %s57, 5
        %s1058 = scalar_select %p1057, %s57, 5
        %s1059 = smul.addr %s1058, 16
        %s1060 = smul.addr %s1059, 4
        %s1061 = scalar_lea.vmem %s2, %s1060
        %v1063 = vlaneseq
        %v1064 = vand.u32 %v1063, 127
        %vm1065 = vcmp.lt.s32.totalorder %v1064, 32
        %v1066 = vsel %vm1065, 1, 0
        %v1067 = vcvt.s32.f32 %v1066
        %v1068 = vld [vmem:[%s860] sm:$0x3]
        %v1069 = vld [vmem:[%s869] sm:$0x3]
        %v1070 = vpack.c.bf16 %v1069, %v1069
        %v1071 = vld [vmem:[%s1061] sm:$0xf]
        %v1072 = vld [vmem:[%s1061 + $0x4] sm:$0xf]
        %v1073 = vld [vmem:[%s1061 + $0x8] sm:$0xf]
        %v1074 = vld [vmem:[%s1061 + $0xc] sm:$0xf]
        %v1075 = vld [vmem:[%s1061 + $0x10] sm:$0xf]
        %v1076 = vld [vmem:[%s1061 + $0x14] sm:$0xf]
        %v1077 = vld [vmem:[%s1061 + $0x18] sm:$0xf]
        %v1078 = vld [vmem:[%s1061 + $0x1c] sm:$0xf]
        %v1079 = vld [vmem:[%s1061 + $0x20] sm:$0xf]
        %v1080 = vld [vmem:[%s1061 + $0x24] sm:$0xf]
        %v1081 = vld [vmem:[%s1061 + $0x28] sm:$0xf]
        %v1082 = vld [vmem:[%s1061 + $0x2c] sm:$0xf]
        %v1083 = vld [vmem:[%s1061 + $0x30] sm:$0xf]
        %v1084 = vld [vmem:[%s1061 + $0x34] sm:$0xf]
        %v1085 = vld [vmem:[%s1061 + $0x38] sm:$0xf]
        %v1086 = vld [vmem:[%s1061 + $0x3c] sm:$0xf]
        %v1087 = vld [vmem:[%s877] sm:$0x1]
        %v1089 = vlaneseq
        %v1090 = vshrl.u32 %v1089, 7
        %v1091 = vsub.s32 0, %v1090
        %v1092 = vrot.slane %v1087, %v1091
        %v1110 = vunpack.c.l.b16 %v1071
        %v1111 = vunpack.c.l.b16 %v1072
        %v1112 = vunpack.c.l.b16 %v1073
        %v1113 = vunpack.c.l.b16 %v1074
        %v1114 = vunpack.c.l.b16 %v1075
        %v1115 = vunpack.c.l.b16 %v1076
        %v1116 = vunpack.c.l.b16 %v1077
        %v1117 = vunpack.c.l.b16 %v1078
        %v1118 = vunpack.c.l.b16 %v1079
        %v1119 = vunpack.c.l.b16 %v1080
        %v1120 = vunpack.c.l.b16 %v1081
        %v1121 = vunpack.c.l.b16 %v1082
        %v1122 = vunpack.c.l.b16 %v1083
        %v1123 = vunpack.c.l.b16 %v1084
        %v1124 = vunpack.c.l.b16 %v1085
        %v1125 = vunpack.c.l.b16 %v1086
        %v1126 = vpack.c.b16 %v1111, %v1110
        %v1127 = vpack.c.b16 %v1113, %v1112
        %v1128 = vpack.c.b16 %v1115, %v1114
        %v1129 = vpack.c.b16 %v1117, %v1116
        %v1130 = vpack.c.b16 %v1119, %v1118
        %v1131 = vpack.c.b16 %v1121, %v1120
        %v1132 = vpack.c.b16 %v1123, %v1122
        %v1133 = vpack.c.b16 %v1125, %v1124
        %1142 = vmatprep.subr.bf16.mxu0 0
        %1143 = vmatpush1.bf16.msra.mxu0 %v1126
        %1144 = vmatprep.subr.bf16.mxu0 0
        %1145 = vmatpush1.bf16.msra.mxu0 %v1127
        %1146 = vmatprep.subr.bf16.mxu0 0
        %1147 = vmatpush1.bf16.msra.mxu0 %v1128
        %1148 = vmatprep.subr.bf16.mxu0 0
        %1149 = vmatpush1.bf16.msra.mxu0 %v1129
        %1150 = vmatprep.subr.bf16.mxu0 0
        %1151 = vmatpush1.bf16.msra.mxu0 %v1130
        %1152 = vmatprep.subr.bf16.mxu0 0
        %1153 = vmatpush1.bf16.msra.mxu0 %v1131
        %1154 = vmatprep.subr.bf16.mxu0 0
        %1155 = vmatpush1.bf16.msra.mxu0 %v1132
        %1156 = vmatprep.subr.bf16.mxu0 0
        %1157 = vmatpush1.bf16.msra.mxu0 %v1133
        %1158 = vmatprep.subr.bf16.mxu0 0
        %1159 = vmatpush1.bf16.msra.mxu0 0
        %1160 = vmatprep.subr.bf16.mxu0 0
        %1161 = vmatpush1.bf16.msra.mxu0 0
        %1162 = vmatprep.subr.bf16.mxu0 0
        %1163 = vmatpush1.bf16.msra.mxu0 0
        %1164 = vmatprep.subr.bf16.mxu0 0
        %1165 = vmatpush1.bf16.msra.mxu0 0
        %1166 = vmatprep.subr.bf16.mxu0 0
        %1167 = vmatpush1.bf16.msra.mxu0 0
        %1168 = vmatprep.subr.bf16.mxu0 0
        %1169 = vmatpush1.bf16.msra.mxu0 0
        %1170 = vmatprep.subr.bf16.mxu0 0
        %1171 = vmatpush1.bf16.msra.mxu0 0
        %1172 = vmatprep.subr.bf16.mxu0 0
        %1173 = vmatpush1.bf16.msra.mxu0 0
        %1174 = vmatprep.mubr.bf16.mxu0 0
        %1175 = vmatmul.mubr.bf16.gmra.mrb[0].mxu0 %v1070
        %v1176 = vpop.f32.mrb[0].mxu0
        %v1177 = vadd.f32 %v1092, %v1176
        %v1178 = vpop.f32.mrb[0].mxu0
        %v1179 = vpop.f32.mrb[0].mxu0
        %v1180 = vpop.f32.mrb[0].mxu0
        %1181 = vdwg.mxu0
        %v1182 = vadd.f32 %v1068, %v1177
        %v1183 = vld [vmem:[%s885] sm:$0x1]
        %v1184 = vld [vmem:[%s893] sm:$0x1]
        %vm1185 = vcmask 1041408
        %v1186 = vsel %vm1185, %v1182, 0.0
        %1187 = vadd.xlane.f32.xlu0 %v1186
        %v1188 = vpop.xlane.xlu0 %1187
        %v1189 = vmul.f32 %v1188, 0.03125
        %v1190 = vsub.f32 %v1182, %v1189
        %v1191 = vmul.f32 %v1190, %v1067
        %v1192 = vmul.f32 %v1191, %v1191
        %v1193 = vsel %vm1185, %v1192, 0.0
        %1194 = vadd.xlane.f32.xlu0 %v1193
        %v1195 = vpop.xlane.xlu0 %1194
        %v1196 = vmul.f32 %v1195, 0.03125
        %v1197 = vadd.f32 %v1196, 1e-05
        %v1198 = vrsqrt.pop %v1197
        %v1199 = vmul.f32 %v1191, %v1198
        %v1201 = vlaneseq
        %v1202 = vshrl.u32 %v1201, 7
        %v1203 = vsub.s32 0, %v1202
        %v1204 = vrot.slane %v1183, %v1203
        %v1206 = vmul.f32 %v1199, %v1204
        %v1208 = vlaneseq
        %v1209 = vshrl.u32 %v1208, 7
        %v1210 = vsub.s32 0, %v1209
        %v1211 = vrot.slane %v1184, %v1210
        %v1213 = vadd.f32 %v1206, %v1211
        %v1214 = vpack.c.bf16 %v1213, %v1213
        %v1215 = vld [vmem:[%s918] sm:$0xff]
        %v1216 = vld [vmem:[%s918 + $0x8] sm:$0xff]
        %v1217 = vld [vmem:[%s918 + $0x10] sm:$0xff]
        %v1218 = vld [vmem:[%s918 + $0x18] sm:$0xff]
        %v1219 = vld [vmem:[%s918 + $0x20] sm:$0xff]
        %v1220 = vld [vmem:[%s918 + $0x28] sm:$0xff]
        %v1221 = vld [vmem:[%s918 + $0x30] sm:$0xff]
        %v1222 = vld [vmem:[%s918 + $0x38] sm:$0xff]
        %v1223 = vld [vmem:[%s918 + $0x40] sm:$0xff]
        %v1224 = vld [vmem:[%s918 + $0x48] sm:$0xff]
        %v1225 = vld [vmem:[%s918 + $0x50] sm:$0xff]
        %v1226 = vld [vmem:[%s918 + $0x58] sm:$0xff]
        %v1227 = vld [vmem:[%s918 + $0x60] sm:$0xff]
        %v1228 = vld [vmem:[%s918 + $0x68] sm:$0xff]
        %v1229 = vld [vmem:[%s918 + $0x70] sm:$0xff]
        %v1230 = vld [vmem:[%s918 + $0x78] sm:$0xff]
        %v1231 = vld [vmem:[%s918 + $0x80] sm:$0xff]
        %v1232 = vld [vmem:[%s918 + $0x88] sm:$0xff]
        %v1233 = vld [vmem:[%s918 + $0x90] sm:$0xff]
        %v1234 = vld [vmem:[%s918 + $0x98] sm:$0xff]
        %v1235 = vld [vmem:[%s918 + $0xa0] sm:$0xff]
        %v1236 = vld [vmem:[%s918 + $0xa8] sm:$0xff]
        %v1237 = vld [vmem:[%s918 + $0xb0] sm:$0xff]
        %v1238 = vld [vmem:[%s918 + $0xb8] sm:$0xff]
        %v1239 = vld [vmem:[%s918 + $0xc0] sm:$0xff]
        %v1240 = vld [vmem:[%s918 + $0xc8] sm:$0xff]
        %v1241 = vld [vmem:[%s918 + $0xd0] sm:$0xff]
        %v1242 = vld [vmem:[%s918 + $0xd8] sm:$0xff]
        %v1243 = vld [vmem:[%s918 + $0xe0] sm:$0xff]
        %v1244 = vld [vmem:[%s918 + $0xe8] sm:$0xff]
        %v1245 = vld [vmem:[%s918 + $0xf0] sm:$0xff]
        %v1246 = vld [vmem:[%s918 + $0xf8] sm:$0xff]
        %v1247 = vld [vmem:[%s927] sm:$0xf]
        %v1249 = vlaneseq
        %v1250 = vshrl.u32 %v1249, 7
        %v1251 = vsub.s32 0, %v1250
        %v1252 = vrot.slane %v1247, %v1251
        %v1253 = vlaneseq
        %v1254 = vshrl.u32 %v1253, 7
        %v1255 = vsub.s32 1, %v1254
        %v1256 = vrot.slane %v1247, %v1255
        %v1257 = vlaneseq
        %v1258 = vshrl.u32 %v1257, 7
        %v1259 = vsub.s32 2, %v1258
        %v1260 = vrot.slane %v1247, %v1259
        %v1261 = vlaneseq
        %v1262 = vshrl.u32 %v1261, 7
        %v1263 = vsub.s32 3, %v1262
        %v1264 = vrot.slane %v1247, %v1263
        %v1301 = vunpack.c.l.b16 %v1215
        %v1302 = vunpack.c.h.b16 %v1215
        %v1303 = vunpack.c.l.b16 %v1216
        %v1304 = vunpack.c.h.b16 %v1216
        %v1305 = vunpack.c.l.b16 %v1217
        %v1306 = vunpack.c.h.b16 %v1217
        %v1307 = vunpack.c.l.b16 %v1218
        %v1308 = vunpack.c.h.b16 %v1218
        %v1309 = vunpack.c.l.b16 %v1219
        %v1310 = vunpack.c.h.b16 %v1219
        %v1311 = vunpack.c.l.b16 %v1220
        %v1312 = vunpack.c.h.b16 %v1220
        %v1313 = vunpack.c.l.b16 %v1221
        %v1314 = vunpack.c.h.b16 %v1221
        %v1315 = vunpack.c.l.b16 %v1222
        %v1316 = vunpack.c.h.b16 %v1222
        %v1317 = vunpack.c.l.b16 %v1223
        %v1318 = vunpack.c.h.b16 %v1223
        %v1319 = vunpack.c.l.b16 %v1224
        %v1320 = vunpack.c.h.b16 %v1224
        %v1321 = vunpack.c.l.b16 %v1225
        %v1322 = vunpack.c.h.b16 %v1225
        %v1323 = vunpack.c.l.b16 %v1226
        %v1324 = vunpack.c.h.b16 %v1226
        %v1325 = vunpack.c.l.b16 %v1227
        %v1326 = vunpack.c.h.b16 %v1227
        %v1327 = vunpack.c.l.b16 %v1228
        %v1328 = vunpack.c.h.b16 %v1228
        %v1329 = vunpack.c.l.b16 %v1229
        %v1330 = vunpack.c.h.b16 %v1229
        %v1331 = vunpack.c.l.b16 %v1230
        %v1332 = vunpack.c.h.b16 %v1230
        %v1333 = vunpack.c.l.b16 %v1231
        %v1334 = vunpack.c.h.b16 %v1231
        %v1335 = vunpack.c.l.b16 %v1232
        %v1336 = vunpack.c.h.b16 %v1232
        %v1337 = vunpack.c.l.b16 %v1233
        %v1338 = vunpack.c.h.b16 %v1233
        %v1339 = vunpack.c.l.b16 %v1234
        %v1340 = vunpack.c.h.b16 %v1234
        %v1341 = vunpack.c.l.b16 %v1235
        %v1342 = vunpack.c.h.b16 %v1235
        %v1343 = vunpack.c.l.b16 %v1236
        %v1344 = vunpack.c.h.b16 %v1236
        %v1345 = vunpack.c.l.b16 %v1237
        %v1346 = vunpack.c.h.b16 %v1237
        %v1347 = vunpack.c.l.b16 %v1238
        %v1348 = vunpack.c.h.b16 %v1238
        %v1349 = vunpack.c.l.b16 %v1239
        %v1350 = vunpack.c.h.b16 %v1239
        %v1351 = vunpack.c.l.b16 %v1240
        %v1352 = vunpack.c.h.b16 %v1240
        %v1353 = vunpack.c.l.b16 %v1241
        %v1354 = vunpack.c.h.b16 %v1241
        %v1355 = vunpack.c.l.b16 %v1242
        %v1356 = vunpack.c.h.b16 %v1242
        %v1357 = vunpack.c.l.b16 %v1243
        %v1358 = vunpack.c.h.b16 %v1243
        %v1359 = vunpack.c.l.b16 %v1244
        %v1360 = vunpack.c.h.b16 %v1244
        %v1361 = vunpack.c.l.b16 %v1245
        %v1362 = vunpack.c.h.b16 %v1245
        %v1363 = vunpack.c.l.b16 %v1246
        %v1364 = vunpack.c.h.b16 %v1246
        %v1365 = vpack.c.b16 %v1305, %v1301
        %v1366 = vpack.c.b16 %v1306, %v1302
        %v1367 = vpack.c.b16 %v1307, %v1303
        %v1368 = vpack.c.b16 %v1308, %v1304
        %v1369 = vpack.c.b16 %v1313, %v1309
        %v1370 = vpack.c.b16 %v1314, %v1310
        %v1371 = vpack.c.b16 %v1315, %v1311
        %v1372 = vpack.c.b16 %v1316, %v1312
        %v1373 = vpack.c.b16 %v1321, %v1317
        %v1374 = vpack.c.b16 %v1322, %v1318
        %v1375 = vpack.c.b16 %v1323, %v1319
        %v1376 = vpack.c.b16 %v1324, %v1320
        %v1377 = vpack.c.b16 %v1329, %v1325
        %v1378 = vpack.c.b16 %v1330, %v1326
        %v1379 = vpack.c.b16 %v1331, %v1327
        %v1380 = vpack.c.b16 %v1332, %v1328
        %v1381 = vpack.c.b16 %v1337, %v1333
        %v1382 = vpack.c.b16 %v1338, %v1334
        %v1383 = vpack.c.b16 %v1339, %v1335
        %v1384 = vpack.c.b16 %v1340, %v1336
        %v1385 = vpack.c.b16 %v1345, %v1341
        %v1386 = vpack.c.b16 %v1346, %v1342
        %v1387 = vpack.c.b16 %v1347, %v1343
        %v1388 = vpack.c.b16 %v1348, %v1344
        %v1389 = vpack.c.b16 %v1353, %v1349
        %v1390 = vpack.c.b16 %v1354, %v1350
        %v1391 = vpack.c.b16 %v1355, %v1351
        %v1392 = vpack.c.b16 %v1356, %v1352
        %v1393 = vpack.c.b16 %v1361, %v1357
        %v1394 = vpack.c.b16 %v1362, %v1358
        %v1395 = vpack.c.b16 %v1363, %v1359
        %v1396 = vpack.c.b16 %v1364, %v1360
        %1429 = vmatprep.subr.bf16.mxu0 %v1366
        %1430 = vmatpush1.bf16.msra.mxu0 %v1365
        %1431 = vmatprep.subr.bf16.mxu0 %v1370
        %1432 = vmatpush1.bf16.msra.mxu0 %v1369
        %1433 = vmatprep.subr.bf16.mxu0 %v1374
        %1434 = vmatpush1.bf16.msra.mxu0 %v1373
        %1435 = vmatprep.subr.bf16.mxu0 %v1378
        %1436 = vmatpush1.bf16.msra.mxu0 %v1377
        %1437 = vmatprep.subr.bf16.mxu0 %v1382
        %1438 = vmatpush1.bf16.msra.mxu0 %v1381
        %1439 = vmatprep.subr.bf16.mxu0 %v1386
        %1440 = vmatpush1.bf16.msra.mxu0 %v1385
        %1441 = vmatprep.subr.bf16.mxu0 %v1390
        %1442 = vmatpush1.bf16.msra.mxu0 %v1389
        %1443 = vmatprep.subr.bf16.mxu0 %v1394
        %1444 = vmatpush1.bf16.msra.mxu0 %v1393
        %1445 = vmatprep.subr.bf16.mxu0 0
        %1446 = vmatpush1.bf16.msra.mxu0 0
        %1447 = vmatprep.subr.bf16.mxu0 0
        %1448 = vmatpush1.bf16.msra.mxu0 0
        %1449 = vmatprep.subr.bf16.mxu0 0
        %1450 = vmatpush1.bf16.msra.mxu0 0
        %1451 = vmatprep.subr.bf16.mxu0 0
        %1452 = vmatpush1.bf16.msra.mxu0 0
        %1453 = vmatprep.subr.bf16.mxu0 0
        %1454 = vmatpush1.bf16.msra.mxu0 0
        %1455 = vmatprep.subr.bf16.mxu0 0
        %1456 = vmatpush1.bf16.msra.mxu0 0
        %1457 = vmatprep.subr.bf16.mxu0 0
        %1458 = vmatpush1.bf16.msra.mxu0 0
        %1459 = vmatprep.subr.bf16.mxu0 0
        %1460 = vmatpush1.bf16.msra.mxu0 0
        %1461 = vmatprep.mubr.bf16.mxu0 0
        %1462 = vmatmul.mubr.bf16.gmra.mrb[0].mxu0 %v1214
        %v1463 = vpop.f32.mrb[0].mxu0
        %v1464 = vadd.f32 %v1252, %v1463
        %v1465 = vpop.f32.mrb[0].mxu0
        %v1466 = vadd.f32 %v1256, %v1465
        %v1467 = vpop.f32.mrb[0].mxu0
        %v1468 = vpop.f32.mrb[0].mxu0
        %1469 = vdwg.mxu0
        %1470 = vmatprep.subr.bf16.mxu0 %v1368
        %1471 = vmatpush1.bf16.msra.mxu0 %v1367
        %1472 = vmatprep.subr.bf16.mxu0 %v1372
        %1473 = vmatpush1.bf16.msra.mxu0 %v1371
        %1474 = vmatprep.subr.bf16.mxu0 %v1376
        %1475 = vmatpush1.bf16.msra.mxu0 %v1375
        %1476 = vmatprep.subr.bf16.mxu0 %v1380
        %1477 = vmatpush1.bf16.msra.mxu0 %v1379
        %1478 = vmatprep.subr.bf16.mxu0 %v1384
        %1479 = vmatpush1.bf16.msra.mxu0 %v1383
        %1480 = vmatprep.subr.bf16.mxu0 %v1388
        %1481 = vmatpush1.bf16.msra.mxu0 %v1387
        %1482 = vmatprep.subr.bf16.mxu0 %v1392
        %1483 = vmatpush1.bf16.msra.mxu0 %v1391
        %1484 = vmatprep.subr.bf16.mxu0 %v1396
        %1485 = vmatpush1.bf16.msra.mxu0 %v1395
        %1486 = vmatprep.subr.bf16.mxu0 0
        %1487 = vmatpush1.bf16.msra.mxu0 0
        %1488 = vmatprep.subr.bf16.mxu0 0
        %1489 = vmatpush1.bf16.msra.mxu0 0
        %1490 = vmatprep.subr.bf16.mxu0 0
        %1491 = vmatpush1.bf16.msra.mxu0 0
        %1492 = vmatprep.subr.bf16.mxu0 0
        %1493 = vmatpush1.bf16.msra.mxu0 0
        %1494 = vmatprep.subr.bf16.mxu0 0
        %1495 = vmatpush1.bf16.msra.mxu0 0
        %1496 = vmatprep.subr.bf16.mxu0 0
        %1497 = vmatpush1.bf16.msra.mxu0 0
        %1498 = vmatprep.subr.bf16.mxu0 0
        %1499 = vmatpush1.bf16.msra.mxu0 0
        %1500 = vmatprep.subr.bf16.mxu0 0
        %1501 = vmatpush1.bf16.msra.mxu0 0
        %1502 = vmatprep.mubr.bf16.mxu0 0
        %1503 = vmatmul.mubr.bf16.gmra.mrb[0].mxu0 %v1214
        %v1504 = vpop.f32.mrb[0].mxu0
        %v1505 = vadd.f32 %v1260, %v1504
        %v1506 = vpop.f32.mrb[0].mxu0
        %v1507 = vadd.f32 %v1264, %v1506
        %v1508 = vpop.f32.mrb[0].mxu0
        %v1509 = vpop.f32.mrb[0].mxu0
        %1510 = vdwg.mxu0
        %v1511 = vmax.f32 %v1464, 0.0
        %v1512 = vmax.f32 %v1466, 0.0
        %v1513 = vmax.f32 %v1505, 0.0
        %v1514 = vmax.f32 %v1507, 0.0
        %v1515 = vpack.c.bf16 %v1511, %v1511
        %v1516 = vpack.c.bf16 %v1512, %v1512
        %v1517 = vpack.c.bf16 %v1513, %v1513
        %v1518 = vpack.c.bf16 %v1514, %v1514
        %v1519 = vld [vmem:[%s936] sm:$0xf]
        %v1520 = vld [vmem:[%s936 + $0x4] sm:$0xf]
        %v1521 = vld [vmem:[%s936 + $0x8] sm:$0xf]
        %v1522 = vld [vmem:[%s936 + $0xc] sm:$0xf]
        %v1523 = vld [vmem:[%s936 + $0x10] sm:$0xf]
        %v1524 = vld [vmem:[%s936 + $0x14] sm:$0xf]
        %v1525 = vld [vmem:[%s936 + $0x18] sm:$0xf]
        %v1526 = vld [vmem:[%s936 + $0x1c] sm:$0xf]
        %v1527 = vld [vmem:[%s936 + $0x20] sm:$0xf]
        %v1528 = vld [vmem:[%s936 + $0x24] sm:$0xf]
        %v1529 = vld [vmem:[%s936 + $0x28] sm:$0xf]
        %v1530 = vld [vmem:[%s936 + $0x2c] sm:$0xf]
        %v1531 = vld [vmem:[%s936 + $0x30] sm:$0xf]
        %v1532 = vld [vmem:[%s936 + $0x34] sm:$0xf]
        %v1533 = vld [vmem:[%s936 + $0x38] sm:$0xf]
        %v1534 = vld [vmem:[%s936 + $0x3c] sm:$0xf]
        %v1535 = vld [vmem:[%s936 + $0x40] sm:$0xf]
        %v1536 = vld [vmem:[%s936 + $0x44] sm:$0xf]
        %v1537 = vld [vmem:[%s936 + $0x48] sm:$0xf]
        %v1538 = vld [vmem:[%s936 + $0x4c] sm:$0xf]
        %v1539 = vld [vmem:[%s936 + $0x50] sm:$0xf]
        %v1540 = vld [vmem:[%s936 + $0x54] sm:$0xf]
        %v1541 = vld [vmem:[%s936 + $0x58] sm:$0xf]
        %v1542 = vld [vmem:[%s936 + $0x5c] sm:$0xf]
        %v1543 = vld [vmem:[%s936 + $0x60] sm:$0xf]
        %v1544 = vld [vmem:[%s936 + $0x64] sm:$0xf]
        %v1545 = vld [vmem:[%s936 + $0x68] sm:$0xf]
        %v1546 = vld [vmem:[%s936 + $0x6c] sm:$0xf]
        %v1547 = vld [vmem:[%s936 + $0x70] sm:$0xf]
        %v1548 = vld [vmem:[%s936 + $0x74] sm:$0xf]
        %v1549 = vld [vmem:[%s936 + $0x78] sm:$0xf]
        %v1550 = vld [vmem:[%s936 + $0x7c] sm:$0xf]
        %v1551 = vld [vmem:[%s936 + $0x80] sm:$0xf]
        %v1552 = vld [vmem:[%s936 + $0x84] sm:$0xf]
        %v1553 = vld [vmem:[%s936 + $0x88] sm:$0xf]
        %v1554 = vld [vmem:[%s936 + $0x8c] sm:$0xf]
        %v1555 = vld [vmem:[%s936 + $0x90] sm:$0xf]
        %v1556 = vld [vmem:[%s936 + $0x94] sm:$0xf]
        %v1557 = vld [vmem:[%s936 + $0x98] sm:$0xf]
        %v1558 = vld [vmem:[%s936 + $0x9c] sm:$0xf]
        %v1559 = vld [vmem:[%s936 + $0xa0] sm:$0xf]
        %v1560 = vld [vmem:[%s936 + $0xa4] sm:$0xf]
        %v1561 = vld [vmem:[%s936 + $0xa8] sm:$0xf]
        %v1562 = vld [vmem:[%s936 + $0xac] sm:$0xf]
        %v1563 = vld [vmem:[%s936 + $0xb0] sm:$0xf]
        %v1564 = vld [vmem:[%s936 + $0xb4] sm:$0xf]
        %v1565 = vld [vmem:[%s936 + $0xb8] sm:$0xf]
        %v1566 = vld [vmem:[%s936 + $0xbc] sm:$0xf]
        %v1567 = vld [vmem:[%s936 + $0xc0] sm:$0xf]
        %v1568 = vld [vmem:[%s936 + $0xc4] sm:$0xf]
        %v1569 = vld [vmem:[%s936 + $0xc8] sm:$0xf]
        %v1570 = vld [vmem:[%s936 + $0xcc] sm:$0xf]
        %v1571 = vld [vmem:[%s936 + $0xd0] sm:$0xf]
        %v1572 = vld [vmem:[%s936 + $0xd4] sm:$0xf]
        %v1573 = vld [vmem:[%s936 + $0xd8] sm:$0xf]
        %v1574 = vld [vmem:[%s936 + $0xdc] sm:$0xf]
        %v1575 = vld [vmem:[%s936 + $0xe0] sm:$0xf]
        %v1576 = vld [vmem:[%s936 + $0xe4] sm:$0xf]
        %v1577 = vld [vmem:[%s936 + $0xe8] sm:$0xf]
        %v1578 = vld [vmem:[%s936 + $0xec] sm:$0xf]
        %v1579 = vld [vmem:[%s936 + $0xf0] sm:$0xf]
        %v1580 = vld [vmem:[%s936 + $0xf4] sm:$0xf]
        %v1581 = vld [vmem:[%s936 + $0xf8] sm:$0xf]
        %v1582 = vld [vmem:[%s936 + $0xfc] sm:$0xf]
        %v1583 = vld [vmem:[%s944] sm:$0x1]
        %v1585 = vlaneseq
        %v1586 = vshrl.u32 %v1585, 7
        %v1587 = vsub.s32 0, %v1586
        %v1588 = vrot.slane %v1583, %v1587
        %v1654 = vunpack.c.l.b16 %v1519
        %v1655 = vunpack.c.l.b16 %v1520
        %v1656 = vunpack.c.l.b16 %v1521
        %v1657 = vunpack.c.l.b16 %v1522
        %v1658 = vunpack.c.l.b16 %v1523
        %v1659 = vunpack.c.l.b16 %v1524
        %v1660 = vunpack.c.l.b16 %v1525
        %v1661 = vunpack.c.l.b16 %v1526
        %v1662 = vunpack.c.l.b16 %v1527
        %v1663 = vunpack.c.l.b16 %v1528
        %v1664 = vunpack.c.l.b16 %v1529
        %v1665 = vunpack.c.l.b16 %v1530
        %v1666 = vunpack.c.l.b16 %v1531
        %v1667 = vunpack.c.l.b16 %v1532
        %v1668 = vunpack.c.l.b16 %v1533
        %v1669 = vunpack.c.l.b16 %v1534
        %v1670 = vunpack.c.l.b16 %v1535
        %v1671 = vunpack.c.l.b16 %v1536
        %v1672 = vunpack.c.l.b16 %v1537
        %v1673 = vunpack.c.l.b16 %v1538
        %v1674 = vunpack.c.l.b16 %v1539
        %v1675 = vunpack.c.l.b16 %v1540
        %v1676 = vunpack.c.l.b16 %v1541
        %v1677 = vunpack.c.l.b16 %v1542
        %v1678 = vunpack.c.l.b16 %v1543
        %v1679 = vunpack.c.l.b16 %v1544
        %v1680 = vunpack.c.l.b16 %v1545
        %v1681 = vunpack.c.l.b16 %v1546
        %v1682 = vunpack.c.l.b16 %v1547
        %v1683 = vunpack.c.l.b16 %v1548
        %v1684 = vunpack.c.l.b16 %v1549
        %v1685 = vunpack.c.l.b16 %v1550
        %v1686 = vunpack.c.l.b16 %v1551
        %v1687 = vunpack.c.l.b16 %v1552
        %v1688 = vunpack.c.l.b16 %v1553
        %v1689 = vunpack.c.l.b16 %v1554
        %v1690 = vunpack.c.l.b16 %v1555
        %v1691 = vunpack.c.l.b16 %v1556
        %v1692 = vunpack.c.l.b16 %v1557
        %v1693 = vunpack.c.l.b16 %v1558
        %v1694 = vunpack.c.l.b16 %v1559
        %v1695 = vunpack.c.l.b16 %v1560
        %v1696 = vunpack.c.l.b16 %v1561
        %v1697 = vunpack.c.l.b16 %v1562
        %v1698 = vunpack.c.l.b16 %v1563
        %v1699 = vunpack.c.l.b16 %v1564
        %v1700 = vunpack.c.l.b16 %v1565
        %v1701 = vunpack.c.l.b16 %v1566
        %v1702 = vunpack.c.l.b16 %v1567
        %v1703 = vunpack.c.l.b16 %v1568
        %v1704 = vunpack.c.l.b16 %v1569
        %v1705 = vunpack.c.l.b16 %v1570
        %v1706 = vunpack.c.l.b16 %v1571
        %v1707 = vunpack.c.l.b16 %v1572
        %v1708 = vunpack.c.l.b16 %v1573
        %v1709 = vunpack.c.l.b16 %v1574
        %v1710 = vunpack.c.l.b16 %v1575
        %v1711 = vunpack.c.l.b16 %v1576
        %v1712 = vunpack.c.l.b16 %v1577
        %v1713 = vunpack.c.l.b16 %v1578
        %v1714 = vunpack.c.l.b16 %v1579
        %v1715 = vunpack.c.l.b16 %v1580
        %v1716 = vunpack.c.l.b16 %v1581
        %v1717 = vunpack.c.l.b16 %v1582
        %v1718 = vpack.c.b16 %v1655, %v1654
        %v1719 = vpack.c.b16 %v1657, %v1656
        %v1720 = vpack.c.b16 %v1659, %v1658
        %v1721 = vpack.c.b16 %v1661, %v1660
        %v1722 = vpack.c.b16 %v1663, %v1662
        %v1723 = vpack.c.b16 %v1665, %v1664
        %v1724 = vpack.c.b16 %v1667, %v1666
        %v1725 = vpack.c.b16 %v1669, %v1668
        %v1726 = vpack.c.b16 %v1671, %v1670
        %v1727 = vpack.c.b16 %v1673, %v1672
        %v1728 = vpack.c.b16 %v1675, %v1674
        %v1729 = vpack.c.b16 %v1677, %v1676
        %v1730 = vpack.c.b16 %v1679, %v1678
        %v1731 = vpack.c.b16 %v1681, %v1680
        %v1732 = vpack.c.b16 %v1683, %v1682
        %v1733 = vpack.c.b16 %v1685, %v1684
        %v1734 = vpack.c.b16 %v1687, %v1686
        %v1735 = vpack.c.b16 %v1689, %v1688
        %v1736 = vpack.c.b16 %v1691, %v1690
        %v1737 = vpack.c.b16 %v1693, %v1692
        %v1738 = vpack.c.b16 %v1695, %v1694
        %v1739 = vpack.c.b16 %v1697, %v1696
        %v1740 = vpack.c.b16 %v1699, %v1698
        %v1741 = vpack.c.b16 %v1701, %v1700
        %v1742 = vpack.c.b16 %v1703, %v1702
        %v1743 = vpack.c.b16 %v1705, %v1704
        %v1744 = vpack.c.b16 %v1707, %v1706
        %v1745 = vpack.c.b16 %v1709, %v1708
        %v1746 = vpack.c.b16 %v1711, %v1710
        %v1747 = vpack.c.b16 %v1713, %v1712
        %v1748 = vpack.c.b16 %v1715, %v1714
        %v1749 = vpack.c.b16 %v1717, %v1716
        %1782 = vmatprep.subr.bf16.mxu0 0
        %1783 = vmatpush1.bf16.msra.mxu0 %v1718
        %1784 = vmatprep.subr.bf16.mxu0 0
        %1785 = vmatpush1.bf16.msra.mxu0 %v1719
        %1786 = vmatprep.subr.bf16.mxu0 0
        %1787 = vmatpush1.bf16.msra.mxu0 %v1720
        %1788 = vmatprep.subr.bf16.mxu0 0
        %1789 = vmatpush1.bf16.msra.mxu0 %v1721
        %1790 = vmatprep.subr.bf16.mxu0 0
        %1791 = vmatpush1.bf16.msra.mxu0 %v1722
        %1792 = vmatprep.subr.bf16.mxu0 0
        %1793 = vmatpush1.bf16.msra.mxu0 %v1723
        %1794 = vmatprep.subr.bf16.mxu0 0
        %1795 = vmatpush1.bf16.msra.mxu0 %v1724
        %1796 = vmatprep.subr.bf16.mxu0 0
        %1797 = vmatpush1.bf16.msra.mxu0 %v1725
        %1798 = vmatprep.subr.bf16.mxu0 0
        %1799 = vmatpush1.bf16.msra.mxu0 %v1726
        %1800 = vmatprep.subr.bf16.mxu0 0
        %1801 = vmatpush1.bf16.msra.mxu0 %v1727
        %1802 = vmatprep.subr.bf16.mxu0 0
        %1803 = vmatpush1.bf16.msra.mxu0 %v1728
        %1804 = vmatprep.subr.bf16.mxu0 0
        %1805 = vmatpush1.bf16.msra.mxu0 %v1729
        %1806 = vmatprep.subr.bf16.mxu0 0
        %1807 = vmatpush1.bf16.msra.mxu0 %v1730
        %1808 = vmatprep.subr.bf16.mxu0 0
        %1809 = vmatpush1.bf16.msra.mxu0 %v1731
        %1810 = vmatprep.subr.bf16.mxu0 0
        %1811 = vmatpush1.bf16.msra.mxu0 %v1732
        %1812 = vmatprep.subr.bf16.mxu0 0
        %1813 = vmatpush1.bf16.msra.mxu0 %v1733
        %1814 = vmatprep.mubr.bf16.mxu0 %v1516
        %1815 = vmatmul.mubr.bf16.gmra.mrb[0].mxu0 %v1515
        %v1816 = vpop.f32.mrb[0].mxu0
        %v1817 = vadd.f32 %v1588, %v1816
        %v1818 = vpop.f32.mrb[0].mxu0
        %v1819 = vpop.f32.mrb[0].mxu0
        %v1820 = vpop.f32.mrb[0].mxu0
        %1821 = vdwg.mxu0
        %1822 = vmatprep.subr.bf16.mxu0 0
        %1823 = vmatpush1.bf16.msra.mxu0 %v1734
        %1824 = vmatprep.subr.bf16.mxu0 0
        %1825 = vmatpush1.bf16.msra.mxu0 %v1735
        %1826 = vmatprep.subr.bf16.mxu0 0
        %1827 = vmatpush1.bf16.msra.mxu0 %v1736
        %1828 = vmatprep.subr.bf16.mxu0 0
        %1829 = vmatpush1.bf16.msra.mxu0 %v1737
        %1830 = vmatprep.subr.bf16.mxu0 0
        %1831 = vmatpush1.bf16.msra.mxu0 %v1738
        %1832 = vmatprep.subr.bf16.mxu0 0
        %1833 = vmatpush1.bf16.msra.mxu0 %v1739
        %1834 = vmatprep.subr.bf16.mxu0 0
        %1835 = vmatpush1.bf16.msra.mxu0 %v1740
        %1836 = vmatprep.subr.bf16.mxu0 0
        %1837 = vmatpush1.bf16.msra.mxu0 %v1741
        %1838 = vmatprep.subr.bf16.mxu0 0
        %1839 = vmatpush1.bf16.msra.mxu0 %v1742
        %1840 = vmatprep.subr.bf16.mxu0 0
        %1841 = vmatpush1.bf16.msra.mxu0 %v1743
        %1842 = vmatprep.subr.bf16.mxu0 0
        %1843 = vmatpush1.bf16.msra.mxu0 %v1744
        %1844 = vmatprep.subr.bf16.mxu0 0
        %1845 = vmatpush1.bf16.msra.mxu0 %v1745
        %1846 = vmatprep.subr.bf16.mxu0 0
        %1847 = vmatpush1.bf16.msra.mxu0 %v1746
        %1848 = vmatprep.subr.bf16.mxu0 0
        %1849 = vmatpush1.bf16.msra.mxu0 %v1747
        %1850 = vmatprep.subr.bf16.mxu0 0
        %1851 = vmatpush1.bf16.msra.mxu0 %v1748
        %1852 = vmatprep.subr.bf16.mxu0 0
        %1853 = vmatpush1.bf16.msra.mxu0 %v1749
        %1854 = vmatprep.mubr.bf16.mxu0 %v1518
        %1855 = vmatmul.mubr.bf16.gmra.mrb[0].mxu0 %v1517
        %v1856 = vpop.f32.mrb[0].mxu0
        %v1857 = vadd.f32 %v1817, %v1856
        %v1858 = vpop.f32.mrb[0].mxu0
        %v1859 = vpop.f32.mrb[0].mxu0
        %v1860 = vpop.f32.mrb[0].mxu0
        %1861 = vdwg.mxu0
        %v1862 = vadd.f32 %v1213, %v1857
        %v1863 = vld [vmem:[%s901] sm:$0x1]
        %v1864 = vld [vmem:[%s909] sm:$0x1]
        %v1865 = vsel %vm1185, %v1862, 0.0
        %1866 = vadd.xlane.f32.xlu0 %v1865
        %v1867 = vpop.xlane.xlu0 %1866
        %v1868 = vmul.f32 %v1867, 0.03125
        %v1869 = vsub.f32 %v1862, %v1868
        %v1870 = vmul.f32 %v1869, %v1067
        %v1871 = vmul.f32 %v1870, %v1870
        %v1872 = vsel %vm1185, %v1871, 0.0
        %1873 = vadd.xlane.f32.xlu0 %v1872
        %v1874 = vpop.xlane.xlu0 %1873
        %v1875 = vmul.f32 %v1874, 0.03125
        %v1876 = vadd.f32 %v1875, 1e-05
        %v1877 = vrsqrt.pop %v1876
        %v1878 = vmul.f32 %v1870, %v1877
        %v1880 = vlaneseq
        %v1881 = vshrl.u32 %v1880, 7
        %v1882 = vsub.s32 0, %v1881
        %v1883 = vrot.slane %v1863, %v1882
        %v1885 = vmul.f32 %v1878, %v1883
        %v1887 = vlaneseq
        %v1888 = vshrl.u32 %v1887, 7
        %v1889 = vsub.s32 0, %v1888
        %v1890 = vrot.slane %v1864, %v1889
        %v1892 = vadd.f32 %v1885, %v1890
        %p1893 = scmp.eq.s32.totalorder %s57, 0
        // Predicated region
        $region157: #{tpu_custom_call.1} parent=99 // pred_check
          %p1894 = pneg %p1893
        $region158: #{tpu_custom_call.1} parent=99 // pred_check_branch
          %1896 = sbr.rel (%p1894) target = $region160
        $region159: #{tpu_custom_call.1} parent=99 // pred_region
          %v1897 = vadd.f32 %v1068, %v1892
          %1898 = vst [vmem:[#allocation2] sm:$0x3] %v1897
        $region160: #{tpu_custom_call.1} parent=99 // pred_fallthru
          _
        %p1899 = scmp.eq.s32.totalorder %s57, 1
        // Predicated region
        $region161: #{tpu_custom_call.1} parent=99 // pred_check
          %p1900 = pneg %p1899
        $region162: #{tpu_custom_call.1} parent=99 // pred_check_branch
          %1902 = sbr.rel (%p1900) target = $region164
        $region163: #{tpu_custom_call.1} parent=99 // pred_region
          %v1903 = vld [vmem:[#allocation2] sm:$0x3]
          %v1904 = vadd.f32 %v1903, %v1892
          %1905 = vst [vmem:[#allocation2] sm:$0x3] %v1904
        $region164: #{tpu_custom_call.1} parent=99 // pred_fallthru
          _
        %p1906 = scmp.eq.s32.totalorder %s57, 2
        // Predicated region
        $region165: #{tpu_custom_call.1} parent=99 // pred_check
          %p1907 = pneg %p1906
        $region166: #{tpu_custom_call.1} parent=99 // pred_check_branch
          %1909 = sbr.rel (%p1907) target = $region168
        $region167: #{tpu_custom_call.1} parent=99 // pred_region
          %v1910 = vadd.f32 %v1068, %v1892
          %1911 = vst [vmem:[#allocation3] sm:$0x3] %v1910
        $region168: #{tpu_custom_call.1} parent=99 // pred_fallthru
          _
        %p1912 = scmp.eq.s32.totalorder %s57, 3
        // Predicated region
        $region169: #{tpu_custom_call.1} parent=99 // pred_check
          %p1913 = pneg %p1912
        $region170: #{tpu_custom_call.1} parent=99 // pred_check_branch
          %1915 = sbr.rel (%p1913) target = $region172
        $region171: #{tpu_custom_call.1} parent=99 // pred_region
          %v1916 = vld [vmem:[#allocation3] sm:$0x3]
          %v1917 = vadd.f32 %v1916, %v1892
          %1918 = vst [vmem:[#allocation3] sm:$0x3] %v1917
        $region172: #{tpu_custom_call.1} parent=99 // pred_fallthru
          _
        %p1919 = scmp.eq.s32.totalorder %s57, 4
        // Predicated region
        $region173: #{tpu_custom_call.1} parent=99 // pred_check
          %p1920 = pneg %p1919
        $region174: #{tpu_custom_call.1} parent=99 // pred_check_branch
          %1922 = sbr.rel (%p1920) target = $region176
        $region175: #{tpu_custom_call.1} parent=99 // pred_region
          %v1923 = vadd.f32 %v1068, %v1892
          %1924 = vst [vmem:[#allocation4] sm:$0x3] %v1923
        $region176: #{tpu_custom_call.1} parent=99 // pred_fallthru
          _
        %p1925 = scmp.eq.s32.totalorder %s57, 5
        // Predicated region
        $region177: #{tpu_custom_call.1} parent=99 // pred_check
          %p1926 = pneg %p1925
        $region178: #{tpu_custom_call.1} parent=99 // pred_check_branch
          %1928 = sbr.rel (%p1926) target = $region180
        $region179: #{tpu_custom_call.1} parent=99 // pred_region
          %v1929 = vld [vmem:[#allocation4] sm:$0x3]
          %v1930 = vadd.f32 %v1929, %v1892
          %1931 = vst [vmem:[#allocation4] sm:$0x3] %v1930
          %v1932 = vld [vmem:[#allocation2] sm:$0x3]
          %v1933 = vpack.c.bf16 %v1932, %v1932
          %v1934 = vld [vmem:[#allocation23] sm:$0xf]
          %v1935 = vld [vmem:[#allocation23 + $0x4] sm:$0xf]
          %v1936 = vld [vmem:[#allocation23 + $0x8] sm:$0xf]
          %v1937 = vld [vmem:[#allocation23 + $0xc] sm:$0xf]
          %v1938 = vld [vmem:[#allocation23 + $0x10] sm:$0xf]
          %v1939 = vld [vmem:[#allocation23 + $0x14] sm:$0xf]
          %v1940 = vld [vmem:[#allocation23 + $0x18] sm:$0xf]
          %v1941 = vld [vmem:[#allocation23 + $0x1c] sm:$0xf]
          %v1942 = vld [vmem:[#allocation23 + $0x20] sm:$0xf]
          %v1943 = vld [vmem:[#allocation23 + $0x24] sm:$0xf]
          %v1944 = vld [vmem:[#allocation23 + $0x28] sm:$0xf]
          %v1945 = vld [vmem:[#allocation23 + $0x2c] sm:$0xf]
          %v1946 = vld [vmem:[#allocation23 + $0x30] sm:$0xf]
          %v1947 = vld [vmem:[#allocation23 + $0x34] sm:$0xf]
          %v1948 = vld [vmem:[#allocation23 + $0x38] sm:$0xf]
          %v1949 = vld [vmem:[#allocation23 + $0x3c] sm:$0xf]
          %v1950 = vld [vmem:[#allocation25] sm:$0x1]
          %v1952 = vlaneseq
          %v1953 = vshrl.u32 %v1952, 7
          %v1954 = vsub.s32 0, %v1953
          %v1955 = vrot.slane %v1950, %v1954
          %v1973 = vunpack.c.l.b16 %v1934
          %v1974 = vunpack.c.l.b16 %v1935
          %v1975 = vunpack.c.l.b16 %v1936
          %v1976 = vunpack.c.l.b16 %v1937
          %v1977 = vunpack.c.l.b16 %v1938
          %v1978 = vunpack.c.l.b16 %v1939
          %v1979 = vunpack.c.l.b16 %v1940
          %v1980 = vunpack.c.l.b16 %v1941
          %v1981 = vunpack.c.l.b16 %v1942
          %v1982 = vunpack.c.l.b16 %v1943
          %v1983 = vunpack.c.l.b16 %v1944
          %v1984 = vunpack.c.l.b16 %v1945
          %v1985 = vunpack.c.l.b16 %v1946
          %v1986 = vunpack.c.l.b16 %v1947
          %v1987 = vunpack.c.l.b16 %v1948
          %v1988 = vunpack.c.l.b16 %v1949
          %v1989 = vpack.c.b16 %v1974, %v1973
          %v1990 = vpack.c.b16 %v1976, %v1975
          %v1991 = vpack.c.b16 %v1978, %v1977
          %v1992 = vpack.c.b16 %v1980, %v1979
          %v1993 = vpack.c.b16 %v1982, %v1981
          %v1994 = vpack.c.b16 %v1984, %v1983
          %v1995 = vpack.c.b16 %v1986, %v1985
          %v1996 = vpack.c.b16 %v1988, %v1987
          %2005 = vmatprep.subr.bf16.mxu0 0
          %2006 = vmatpush1.bf16.msra.mxu0 %v1989
          %2007 = vmatprep.subr.bf16.mxu0 0
          %2008 = vmatpush1.bf16.msra.mxu0 %v1990
          %2009 = vmatprep.subr.bf16.mxu0 0
          %2010 = vmatpush1.bf16.msra.mxu0 %v1991
          %2011 = vmatprep.subr.bf16.mxu0 0
          %2012 = vmatpush1.bf16.msra.mxu0 %v1992
          %2013 = vmatprep.subr.bf16.mxu0 0
          %2014 = vmatpush1.bf16.msra.mxu0 %v1993
          %2015 = vmatprep.subr.bf16.mxu0 0
          %2016 = vmatpush1.bf16.msra.mxu0 %v1994
          %2017 = vmatprep.subr.bf16.mxu0 0
          %2018 = vmatpush1.bf16.msra.mxu0 %v1995
          %2019 = vmatprep.subr.bf16.mxu0 0
          %2020 = vmatpush1.bf16.msra.mxu0 %v1996
          %2021 = vmatprep.subr.bf16.mxu0 0
          %2022 = vmatpush1.bf16.msra.mxu0 0
          %2023 = vmatprep.subr.bf16.mxu0 0
          %2024 = vmatpush1.bf16.msra.mxu0 0
          %2025 = vmatprep.subr.bf16.mxu0 0
          %2026 = vmatpush1.bf16.msra.mxu0 0
          %2027 = vmatprep.subr.bf16.mxu0 0
          %2028 = vmatpush1.bf16.msra.mxu0 0
          %2029 = vmatprep.subr.bf16.mxu0 0
          %2030 = vmatpush1.bf16.msra.mxu0 0
          %2031 = vmatprep.subr.bf16.mxu0 0
          %2032 = vmatpush1.bf16.msra.mxu0 0
          %2033 = vmatprep.subr.bf16.mxu0 0
          %2034 = vmatpush1.bf16.msra.mxu0 0
          %2035 = vmatprep.subr.bf16.mxu0 0
          %2036 = vmatpush1.bf16.msra.mxu0 0
          %2037 = vmatprep.mubr.bf16.mxu0 0
          %2038 = vmatmul.mubr.bf16.gmra.mrb[0].mxu0 %v1933
          %v2039 = vpop.f32.mrb[0].mxu0
          %v2040 = vadd.f32 %v1955, %v2039
          %v2041 = vpop.f32.mrb[0].mxu0
          %v2042 = vpop.f32.mrb[0].mxu0
          %v2043 = vpop.f32.mrb[0].mxu0
          %2044 = vdwg.mxu0
          %v2045 = vld [vmem:[#allocation3] sm:$0x3]
          %v2046 = vpack.c.bf16 %v2045, %v2045
          %s2047 = scalar_lea.vmem [#allocation23], 64
          %v2048 = vld [vmem:[%s2047] sm:$0xf]
          %v2049 = vld [vmem:[%s2047 + $0x4] sm:$0xf]
          %v2050 = vld [vmem:[%s2047 + $0x8] sm:$0xf]
          %v2051 = vld [vmem:[%s2047 + $0xc] sm:$0xf]
          %v2052 = vld [vmem:[%s2047 + $0x10] sm:$0xf]
          %v2053 = vld [vmem:[%s2047 + $0x14] sm:$0xf]
          %v2054 = vld [vmem:[%s2047 + $0x18] sm:$0xf]
          %v2055 = vld [vmem:[%s2047 + $0x1c] sm:$0xf]
          %v2056 = vld [vmem:[%s2047 + $0x20] sm:$0xf]
          %v2057 = vld [vmem:[%s2047 + $0x24] sm:$0xf]
          %v2058 = vld [vmem:[%s2047 + $0x28] sm:$0xf]
          %v2059 = vld [vmem:[%s2047 + $0x2c] sm:$0xf]
          %v2060 = vld [vmem:[%s2047 + $0x30] sm:$0xf]
          %v2061 = vld [vmem:[%s2047 + $0x34] sm:$0xf]
          %v2062 = vld [vmem:[%s2047 + $0x38] sm:$0xf]
          %v2063 = vld [vmem:[%s2047 + $0x3c] sm:$0xf]
          %s2064 = scalar_lea.vmem [#allocation25], 1
          %v2065 = vld [vmem:[%s2064] sm:$0x1]
          %v2067 = vlaneseq
          %v2068 = vshrl.u32 %v2067, 7
          %v2069 = vsub.s32 0, %v2068
          %v2070 = vrot.slane %v2065, %v2069
          %v2088 = vunpack.c.l.b16 %v2048
          %v2089 = vunpack.c.l.b16 %v2049
          %v2090 = vunpack.c.l.b16 %v2050
          %v2091 = vunpack.c.l.b16 %v2051
          %v2092 = vunpack.c.l.b16 %v2052
          %v2093 = vunpack.c.l.b16 %v2053
          %v2094 = vunpack.c.l.b16 %v2054
          %v2095 = vunpack.c.l.b16 %v2055
          %v2096 = vunpack.c.l.b16 %v2056
          %v2097 = vunpack.c.l.b16 %v2057
          %v2098 = vunpack.c.l.b16 %v2058
          %v2099 = vunpack.c.l.b16 %v2059
          %v2100 = vunpack.c.l.b16 %v2060
          %v2101 = vunpack.c.l.b16 %v2061
          %v2102 = vunpack.c.l.b16 %v2062
          %v2103 = vunpack.c.l.b16 %v2063
          %v2104 = vpack.c.b16 %v2089, %v2088
          %v2105 = vpack.c.b16 %v2091, %v2090
          %v2106 = vpack.c.b16 %v2093, %v2092
          %v2107 = vpack.c.b16 %v2095, %v2094
          %v2108 = vpack.c.b16 %v2097, %v2096
          %v2109 = vpack.c.b16 %v2099, %v2098
          %v2110 = vpack.c.b16 %v2101, %v2100
          %v2111 = vpack.c.b16 %v2103, %v2102
          %2120 = vmatprep.subr.bf16.mxu0 0
          %2121 = vmatpush1.bf16.msra.mxu0 %v2104
          %2122 = vmatprep.subr.bf16.mxu0 0
          %2123 = vmatpush1.bf16.msra.mxu0 %v2105
          %2124 = vmatprep.subr.bf16.mxu0 0
          %2125 = vmatpush1.bf16.msra.mxu0 %v2106
          %2126 = vmatprep.subr.bf16.mxu0 0
          %2127 = vmatpush1.bf16.msra.mxu0 %v2107
          %2128 = vmatprep.subr.bf16.mxu0 0
          %2129 = vmatpush1.bf16.msra.mxu0 %v2108
          %2130 = vmatprep.subr.bf16.mxu0 0
          %2131 = vmatpush1.bf16.msra.mxu0 %v2109
          %2132 = vmatprep.subr.bf16.mxu0 0
          %2133 = vmatpush1.bf16.msra.mxu0 %v2110
          %2134 = vmatprep.subr.bf16.mxu0 0
          %2135 = vmatpush1.bf16.msra.mxu0 %v2111
          %2136 = vmatprep.subr.bf16.mxu0 0
          %2137 = vmatpush1.bf16.msra.mxu0 0
          %2138 = vmatprep.subr.bf16.mxu0 0
          %2139 = vmatpush1.bf16.msra.mxu0 0
          %2140 = vmatprep.subr.bf16.mxu0 0
          %2141 = vmatpush1.bf16.msra.mxu0 0
          %2142 = vmatprep.subr.bf16.mxu0 0
          %2143 = vmatpush1.bf16.msra.mxu0 0
          %2144 = vmatprep.subr.bf16.mxu0 0
          %2145 = vmatpush1.bf16.msra.mxu0 0
          %2146 = vmatprep.subr.bf16.mxu0 0
          %2147 = vmatpush1.bf16.msra.mxu0 0
          %2148 = vmatprep.subr.bf16.mxu0 0
          %2149 = vmatpush1.bf16.msra.mxu0 0
          %2150 = vmatprep.subr.bf16.mxu0 0
          %2151 = vmatpush1.bf16.msra.mxu0 0
          %2152 = vmatprep.mubr.bf16.mxu0 0
          %2153 = vmatmul.mubr.bf16.gmra.mrb[0].mxu0 %v2046
          %v2154 = vpop.f32.mrb[0].mxu0
          %v2155 = vadd.f32 %v2070, %v2154
          %v2156 = vpop.f32.mrb[0].mxu0
          %v2157 = vpop.f32.mrb[0].mxu0
          %v2158 = vpop.f32.mrb[0].mxu0
          %2159 = vdwg.mxu0
          %v2160 = vld [vmem:[#allocation4] sm:$0x3]
          %v2161 = vpack.c.bf16 %v2160, %v2160
          %s2162 = scalar_lea.vmem [#allocation23], 128
          %v2163 = vld [vmem:[%s2162] sm:$0xf]
          %v2164 = vld [vmem:[%s2162 + $0x4] sm:$0xf]
          %v2165 = vld [vmem:[%s2162 + $0x8] sm:$0xf]
          %v2166 = vld [vmem:[%s2162 + $0xc] sm:$0xf]
          %v2167 = vld [vmem:[%s2162 + $0x10] sm:$0xf]
          %v2168 = vld [vmem:[%s2162 + $0x14] sm:$0xf]
          %v2169 = vld [vmem:[%s2162 + $0x18] sm:$0xf]
          %v2170 = vld [vmem:[%s2162 + $0x1c] sm:$0xf]
          %v2171 = vld [vmem:[%s2162 + $0x20] sm:$0xf]
          %v2172 = vld [vmem:[%s2162 + $0x24] sm:$0xf]
          %v2173 = vld [vmem:[%s2162 + $0x28] sm:$0xf]
          %v2174 = vld [vmem:[%s2162 + $0x2c] sm:$0xf]
          %v2175 = vld [vmem:[%s2162 + $0x30] sm:$0xf]
          %v2176 = vld [vmem:[%s2162 + $0x34] sm:$0xf]
          %v2177 = vld [vmem:[%s2162 + $0x38] sm:$0xf]
          %v2178 = vld [vmem:[%s2162 + $0x3c] sm:$0xf]
          %s2179 = scalar_lea.vmem [#allocation25], 2
          %v2180 = vld [vmem:[%s2179] sm:$0x1]
          %v2182 = vlaneseq
          %v2183 = vshrl.u32 %v2182, 7
          %v2184 = vsub.s32 0, %v2183
          %v2185 = vrot.slane %v2180, %v2184
          %v2203 = vunpack.c.l.b16 %v2163
          %v2204 = vunpack.c.l.b16 %v2164
          %v2205 = vunpack.c.l.b16 %v2165
          %v2206 = vunpack.c.l.b16 %v2166
          %v2207 = vunpack.c.l.b16 %v2167
          %v2208 = vunpack.c.l.b16 %v2168
          %v2209 = vunpack.c.l.b16 %v2169
          %v2210 = vunpack.c.l.b16 %v2170
          %v2211 = vunpack.c.l.b16 %v2171
          %v2212 = vunpack.c.l.b16 %v2172
          %v2213 = vunpack.c.l.b16 %v2173
          %v2214 = vunpack.c.l.b16 %v2174
          %v2215 = vunpack.c.l.b16 %v2175
          %v2216 = vunpack.c.l.b16 %v2176
          %v2217 = vunpack.c.l.b16 %v2177
          %v2218 = vunpack.c.l.b16 %v2178
          %v2219 = vpack.c.b16 %v2204, %v2203
          %v2220 = vpack.c.b16 %v2206, %v2205
          %v2221 = vpack.c.b16 %v2208, %v2207
          %v2222 = vpack.c.b16 %v2210, %v2209
          %v2223 = vpack.c.b16 %v2212, %v2211
          %v2224 = vpack.c.b16 %v2214, %v2213
          %v2225 = vpack.c.b16 %v2216, %v2215
          %v2226 = vpack.c.b16 %v2218, %v2217
          %2235 = vmatprep.subr.bf16.mxu0 0
          %2236 = vmatpush1.bf16.msra.mxu0 %v2219
          %2237 = vmatprep.subr.bf16.mxu0 0
          %2238 = vmatpush1.bf16.msra.mxu0 %v2220
          %2239 = vmatprep.subr.bf16.mxu0 0
          %2240 = vmatpush1.bf16.msra.mxu0 %v2221
          %2241 = vmatprep.subr.bf16.mxu0 0
          %2242 = vmatpush1.bf16.msra.mxu0 %v2222
          %2243 = vmatprep.subr.bf16.mxu0 0
          %2244 = vmatpush1.bf16.msra.mxu0 %v2223
          %2245 = vmatprep.subr.bf16.mxu0 0
          %2246 = vmatpush1.bf16.msra.mxu0 %v2224
          %2247 = vmatprep.subr.bf16.mxu0 0
          %2248 = vmatpush1.bf16.msra.mxu0 %v2225
          %2249 = vmatprep.subr.bf16.mxu0 0
          %2250 = vmatpush1.bf16.msra.mxu0 %v2226
          %2251 = vmatprep.subr.bf16.mxu0 0
          %2252 = vmatpush1.bf16.msra.mxu0 0
          %2253 = vmatprep.subr.bf16.mxu0 0
          %2254 = vmatpush1.bf16.msra.mxu0 0
          %2255 = vmatprep.subr.bf16.mxu0 0
          %2256 = vmatpush1.bf16.msra.mxu0 0
          %2257 = vmatprep.subr.bf16.mxu0 0
          %2258 = vmatpush1.bf16.msra.mxu0 0
          %2259 = vmatprep.subr.bf16.mxu0 0
          %2260 = vmatpush1.bf16.msra.mxu0 0
          %2261 = vmatprep.subr.bf16.mxu0 0
          %2262 = vmatpush1.bf16.msra.mxu0 0
          %2263 = vmatprep.subr.bf16.mxu0 0
          %2264 = vmatpush1.bf16.msra.mxu0 0
          %2265 = vmatprep.subr.bf16.mxu0 0
          %2266 = vmatpush1.bf16.msra.mxu0 0
          %2267 = vmatprep.mubr.bf16.mxu0 0
          %2268 = vmatmul.mubr.bf16.gmra.mrb[0].mxu0 %v2161
          %v2269 = vpop.f32.mrb[0].mxu0
          %v2270 = vadd.f32 %v2185, %v2269
          %v2271 = vpop.f32.mrb[0].mxu0
          %v2272 = vpop.f32.mrb[0].mxu0
          %v2273 = vpop.f32.mrb[0].mxu0
          %2274 = vdwg.mxu0
          %v2275 = vld [vmem:[#allocation26] sm:$0x1]
          %v2276 = vld [vmem:[%s14] sm:$0xff]
          %v2277 = vld [vmem:[%s14 + $0x8] sm:$0xff]
          %v2278 = vld [vmem:[%s14 + $0x10] sm:$0xff]
          %v2279 = vld [vmem:[%s14 + $0x18] sm:$0xff]
          %v2280 = vld [vmem:[%s14 + $0x20] sm:$0xff]
          %v2281 = vld [vmem:[%s14 + $0x28] sm:$0xff]
          %v2282 = vld [vmem:[%s14 + $0x30] sm:$0xff]
          %v2283 = vld [vmem:[%s14 + $0x38] sm:$0xff]
          %v2284 = vld [vmem:[%s14 + $0x40] sm:$0xff]
          %v2285 = vld [vmem:[%s14 + $0x48] sm:$0xff]
          %v2286 = vld [vmem:[%s14 + $0x50] sm:$0xff]
          %v2287 = vld [vmem:[%s14 + $0x58] sm:$0xff]
          %v2288 = vld [vmem:[%s14 + $0x60] sm:$0xff]
          %v2289 = vld [vmem:[%s14 + $0x68] sm:$0xff]
          %v2290 = vld [vmem:[%s14 + $0x70] sm:$0xff]
          %v2291 = vld [vmem:[%s14 + $0x78] sm:$0xff]
          %2292 = vmatprep.subr.mxu0 0.0
          %2293 = vmatpush1.msra.mxu0 %v2276
          %2294 = vmatprep.subr.mxu0 0.0
          %2295 = vmatpush1.msra.mxu0 %v2277
          %2296 = vmatprep.subr.mxu0 0.0
          %2297 = vmatpush1.msra.mxu0 %v2278
          %2298 = vmatprep.subr.mxu0 0.0
          %2299 = vmatpush1.msra.mxu0 %v2279
          %2300 = vmatprep.subr.mxu0 0.0
          %2301 = vmatpush1.msra.mxu0 %v2280
          %2302 = vmatprep.subr.mxu0 0.0
          %2303 = vmatpush1.msra.mxu0 %v2281
          %2304 = vmatprep.subr.mxu0 0.0
          %2305 = vmatpush1.msra.mxu0 %v2282
          %2306 = vmatprep.subr.mxu0 0.0
          %2307 = vmatpush1.msra.mxu0 %v2283
          %2308 = vmatprep.subr.mxu0 0.0
          %2309 = vmatpush1.msra.mxu0 %v2284
          %2310 = vmatprep.subr.mxu0 0.0
          %2311 = vmatpush1.msra.mxu0 %v2285
          %2312 = vmatprep.subr.mxu0 0.0
          %2313 = vmatpush1.msra.mxu0 %v2286
          %2314 = vmatprep.subr.mxu0 0.0
          %2315 = vmatpush1.msra.mxu0 %v2287
          %2316 = vmatprep.subr.mxu0 0.0
          %2317 = vmatpush1.msra.mxu0 %v2288
          %2318 = vmatprep.subr.mxu0 0.0
          %2319 = vmatpush1.msra.mxu0 %v2289
          %2320 = vmatprep.subr.mxu0 0.0
          %2321 = vmatpush1.msra.mxu0 %v2290
          %2322 = vmatprep.subr.mxu0 0.0
          %2323 = vmatpush1.msra.mxu0 %v2291
          %2324 = vmatprep.subr.mxu0 0.0
          %2325 = vmatpush1.msra.mxu0 0.0
          %2326 = vmatprep.subr.mxu0 0.0
          %2327 = vmatpush1.msra.mxu0 0.0
          %2328 = vmatprep.subr.mxu0 0.0
          %2329 = vmatpush1.msra.mxu0 0.0
          %2330 = vmatprep.subr.mxu0 0.0
          %2331 = vmatpush1.msra.mxu0 0.0
          %2332 = vmatprep.subr.mxu0 0.0
          %2333 = vmatpush1.msra.mxu0 0.0
          %2334 = vmatprep.subr.mxu0 0.0
          %2335 = vmatpush1.msra.mxu0 0.0
          %2336 = vmatprep.subr.mxu0 0.0
          %2337 = vmatpush1.msra.mxu0 0.0
          %2338 = vmatprep.subr.mxu0 0.0
          %2339 = vmatpush1.msra.mxu0 0.0
          %2340 = vmatprep.subr.mxu0 0.0
          %2341 = vmatpush1.msra.mxu0 0.0
          %2342 = vmatprep.subr.mxu0 0.0
          %2343 = vmatpush1.msra.mxu0 0.0
          %2344 = vmatprep.subr.mxu0 0.0
          %2345 = vmatpush1.msra.mxu0 0.0
          %2346 = vmatprep.subr.mxu0 0.0
          %2347 = vmatpush1.msra.mxu0 0.0
          %2348 = vmatprep.subr.mxu0 0.0
          %2349 = vmatpush1.msra.mxu0 0.0
          %2350 = vmatprep.subr.mxu0 0.0
          %2351 = vmatpush1.msra.mxu0 0.0
          %2352 = vmatprep.subr.mxu0 0.0
          %2353 = vmatpush1.msra.mxu0 0.0
          %2354 = vmatprep.subr.mxu0 0.0
          %2355 = vmatpush1.msra.mxu0 0.0
          %2356 = vmatprep.mubr.f32.mxu0 0.0
          %2357 = vmatmul.mubr.f32.gmra.mrb[0].mxu0 %v2040
          %v2358 = vpop.f32.mrb[0].mxu0
          %v2359 = vadd.f32 0.0, %v2358
          %v2360 = vpop.f32.mrb[0].mxu0
          %2361 = vdwg.mxu0
          %v2363 = vlaneseq
          %v2364 = vshrl.u32 %v2363, 7
          %v2365 = vsub.s32 0, %v2364
          %v2366 = vrot.slane %v2275, %v2365
          %v2368 = vadd.f32 %v2366, %v2359
          %s2369 = scalar_lea.vmem %s14, 128
          %v2370 = vld [vmem:[%s2369] sm:$0xff]
          %v2371 = vld [vmem:[%s2369 + $0x8] sm:$0xff]
          %v2372 = vld [vmem:[%s2369 + $0x10] sm:$0xff]
          %v2373 = vld [vmem:[%s2369 + $0x18] sm:$0xff]
          %v2374 = vld [vmem:[%s2369 + $0x20] sm:$0xff]
          %v2375 = vld [vmem:[%s2369 + $0x28] sm:$0xff]
          %v2376 = vld [vmem:[%s2369 + $0x30] sm:$0xff]
          %v2377 = vld [vmem:[%s2369 + $0x38] sm:$0xff]
          %v2378 = vld [vmem:[%s2369 + $0x40] sm:$0xff]
          %v2379 = vld [vmem:[%s2369 + $0x48] sm:$0xff]
          %v2380 = vld [vmem:[%s2369 + $0x50] sm:$0xff]
          %v2381 = vld [vmem:[%s2369 + $0x58] sm:$0xff]
          %v2382 = vld [vmem:[%s2369 + $0x60] sm:$0xff]
          %v2383 = vld [vmem:[%s2369 + $0x68] sm:$0xff]
          %v2384 = vld [vmem:[%s2369 + $0x70] sm:$0xff]
          %v2385 = vld [vmem:[%s2369 + $0x78] sm:$0xff]
          %2386 = vmatprep.subr.mxu0 0.0
          %2387 = vmatpush1.msra.mxu0 %v2370
          %2388 = vmatprep.subr.mxu0 0.0
          %2389 = vmatpush1.msra.mxu0 %v2371
          %2390 = vmatprep.subr.mxu0 0.0
          %2391 = vmatpush1.msra.mxu0 %v2372
          %2392 = vmatprep.subr.mxu0 0.0
          %2393 = vmatpush1.msra.mxu0 %v2373
          %2394 = vmatprep.subr.mxu0 0.0
          %2395 = vmatpush1.msra.mxu0 %v2374
          %2396 = vmatprep.subr.mxu0 0.0
          %2397 = vmatpush1.msra.mxu0 %v2375
          %2398 = vmatprep.subr.mxu0 0.0
          %2399 = vmatpush1.msra.mxu0 %v2376
          %2400 = vmatprep.subr.mxu0 0.0
          %2401 = vmatpush1.msra.mxu0 %v2377
          %2402 = vmatprep.subr.mxu0 0.0
          %2403 = vmatpush1.msra.mxu0 %v2378
          %2404 = vmatprep.subr.mxu0 0.0
          %2405 = vmatpush1.msra.mxu0 %v2379
          %2406 = vmatprep.subr.mxu0 0.0
          %2407 = vmatpush1.msra.mxu0 %v2380
          %2408 = vmatprep.subr.mxu0 0.0
          %2409 = vmatpush1.msra.mxu0 %v2381
          %2410 = vmatprep.subr.mxu0 0.0
          %2411 = vmatpush1.msra.mxu0 %v2382
          %2412 = vmatprep.subr.mxu0 0.0
          %2413 = vmatpush1.msra.mxu0 %v2383
          %2414 = vmatprep.subr.mxu0 0.0
          %2415 = vmatpush1.msra.mxu0 %v2384
          %2416 = vmatprep.subr.mxu0 0.0
          %2417 = vmatpush1.msra.mxu0 %v2385
          %2418 = vmatprep.subr.mxu0 0.0
          %2419 = vmatpush1.msra.mxu0 0.0
          %2420 = vmatprep.subr.mxu0 0.0
          %2421 = vmatpush1.msra.mxu0 0.0
          %2422 = vmatprep.subr.mxu0 0.0
          %2423 = vmatpush1.msra.mxu0 0.0
          %2424 = vmatprep.subr.mxu0 0.0
          %2425 = vmatpush1.msra.mxu0 0.0
          %2426 = vmatprep.subr.mxu0 0.0
          %2427 = vmatpush1.msra.mxu0 0.0
          %2428 = vmatprep.subr.mxu0 0.0
          %2429 = vmatpush1.msra.mxu0 0.0
          %2430 = vmatprep.subr.mxu0 0.0
          %2431 = vmatpush1.msra.mxu0 0.0
          %2432 = vmatprep.subr.mxu0 0.0
          %2433 = vmatpush1.msra.mxu0 0.0
          %2434 = vmatprep.subr.mxu0 0.0
          %2435 = vmatpush1.msra.mxu0 0.0
          %2436 = vmatprep.subr.mxu0 0.0
          %2437 = vmatpush1.msra.mxu0 0.0
          %2438 = vmatprep.subr.mxu0 0.0
          %2439 = vmatpush1.msra.mxu0 0.0
          %2440 = vmatprep.subr.mxu0 0.0
          %2441 = vmatpush1.msra.mxu0 0.0
          %2442 = vmatprep.subr.mxu0 0.0
          %2443 = vmatpush1.msra.mxu0 0.0
          %2444 = vmatprep.subr.mxu0 0.0
          %2445 = vmatpush1.msra.mxu0 0.0
          %2446 = vmatprep.subr.mxu0 0.0
          %2447 = vmatpush1.msra.mxu0 0.0
          %2448 = vmatprep.subr.mxu0 0.0
          %2449 = vmatpush1.msra.mxu0 0.0
          %2450 = vmatprep.mubr.f32.mxu0 0.0
          %2451 = vmatmul.mubr.f32.gmra.mrb[0].mxu0 %v2155
          %v2452 = vpop.f32.mrb[0].mxu0
          %v2453 = vadd.f32 0.0, %v2452
          %v2454 = vpop.f32.mrb[0].mxu0
          %2455 = vdwg.mxu0
          %v2456 = vadd.f32 %v2368, %v2453
          %s2457 = scalar_lea.vmem %s14, 256
          %v2458 = vld [vmem:[%s2457] sm:$0xff]
          %v2459 = vld [vmem:[%s2457 + $0x8] sm:$0xff]
          %v2460 = vld [vmem:[%s2457 + $0x10] sm:$0xff]
          %v2461 = vld [vmem:[%s2457 + $0x18] sm:$0xff]
          %v2462 = vld [vmem:[%s2457 + $0x20] sm:$0xff]
          %v2463 = vld [vmem:[%s2457 + $0x28] sm:$0xff]
          %v2464 = vld [vmem:[%s2457 + $0x30] sm:$0xff]
          %v2465 = vld [vmem:[%s2457 + $0x38] sm:$0xff]
          %v2466 = vld [vmem:[%s2457 + $0x40] sm:$0xff]
          %v2467 = vld [vmem:[%s2457 + $0x48] sm:$0xff]
          %v2468 = vld [vmem:[%s2457 + $0x50] sm:$0xff]
          %v2469 = vld [vmem:[%s2457 + $0x58] sm:$0xff]
          %v2470 = vld [vmem:[%s2457 + $0x60] sm:$0xff]
          %v2471 = vld [vmem:[%s2457 + $0x68] sm:$0xff]
          %v2472 = vld [vmem:[%s2457 + $0x70] sm:$0xff]
          %v2473 = vld [vmem:[%s2457 + $0x78] sm:$0xff]
          %2474 = vmatprep.subr.mxu0 0.0
          %2475 = vmatpush1.msra.mxu0 %v2458
          %2476 = vmatprep.subr.mxu0 0.0
          %2477 = vmatpush1.msra.mxu0 %v2459
          %2478 = vmatprep.subr.mxu0 0.0
          %2479 = vmatpush1.msra.mxu0 %v2460
          %2480 = vmatprep.subr.mxu0 0.0
          %2481 = vmatpush1.msra.mxu0 %v2461
          %2482 = vmatprep.subr.mxu0 0.0
          %2483 = vmatpush1.msra.mxu0 %v2462
          %2484 = vmatprep.subr.mxu0 0.0
          %2485 = vmatpush1.msra.mxu0 %v2463
          %2486 = vmatprep.subr.mxu0 0.0
          %2487 = vmatpush1.msra.mxu0 %v2464
          %2488 = vmatprep.subr.mxu0 0.0
          %2489 = vmatpush1.msra.mxu0 %v2465
          %2490 = vmatprep.subr.mxu0 0.0
          %2491 = vmatpush1.msra.mxu0 %v2466
          %2492 = vmatprep.subr.mxu0 0.0
          %2493 = vmatpush1.msra.mxu0 %v2467
          %2494 = vmatprep.subr.mxu0 0.0
          %2495 = vmatpush1.msra.mxu0 %v2468
          %2496 = vmatprep.subr.mxu0 0.0
          %2497 = vmatpush1.msra.mxu0 %v2469
          %2498 = vmatprep.subr.mxu0 0.0
          %2499 = vmatpush1.msra.mxu0 %v2470
          %2500 = vmatprep.subr.mxu0 0.0
          %2501 = vmatpush1.msra.mxu0 %v2471
          %2502 = vmatprep.subr.mxu0 0.0
          %2503 = vmatpush1.msra.mxu0 %v2472
          %2504 = vmatprep.subr.mxu0 0.0
          %2505 = vmatpush1.msra.mxu0 %v2473
          %2506 = vmatprep.subr.mxu0 0.0
          %2507 = vmatpush1.msra.mxu0 0.0
          %2508 = vmatprep.subr.mxu0 0.0
          %2509 = vmatpush1.msra.mxu0 0.0
          %2510 = vmatprep.subr.mxu0 0.0
          %2511 = vmatpush1.msra.mxu0 0.0
          %2512 = vmatprep.subr.mxu0 0.0
          %2513 = vmatpush1.msra.mxu0 0.0
          %2514 = vmatprep.subr.mxu0 0.0
          %2515 = vmatpush1.msra.mxu0 0.0
          %2516 = vmatprep.subr.mxu0 0.0
          %2517 = vmatpush1.msra.mxu0 0.0
          %2518 = vmatprep.subr.mxu0 0.0
          %2519 = vmatpush1.msra.mxu0 0.0
          %2520 = vmatprep.subr.mxu0 0.0
          %2521 = vmatpush1.msra.mxu0 0.0
          %2522 = vmatprep.subr.mxu0 0.0
          %2523 = vmatpush1.msra.mxu0 0.0
          %2524 = vmatprep.subr.mxu0 0.0
          %2525 = vmatpush1.msra.mxu0 0.0
          %2526 = vmatprep.subr.mxu0 0.0
          %2527 = vmatpush1.msra.mxu0 0.0
          %2528 = vmatprep.subr.mxu0 0.0
          %2529 = vmatpush1.msra.mxu0 0.0
          %2530 = vmatprep.subr.mxu0 0.0
          %2531 = vmatpush1.msra.mxu0 0.0
          %2532 = vmatprep.subr.mxu0 0.0
          %2533 = vmatpush1.msra.mxu0 0.0
          %2534 = vmatprep.subr.mxu0 0.0
          %2535 = vmatpush1.msra.mxu0 0.0
          %2536 = vmatprep.subr.mxu0 0.0
          %2537 = vmatpush1.msra.mxu0 0.0
          %2538 = vmatprep.mubr.f32.mxu0 0.0
          %2539 = vmatmul.mubr.f32.gmra.mrb[0].mxu0 %v2270
          %v2540 = vpop.f32.mrb[0].mxu0
          %v2541 = vadd.f32 0.0, %v2540
          %v2542 = vpop.f32.mrb[0].mxu0
          %2543 = vdwg.mxu0
          %v2544 = vadd.f32 %v2456, %v2541
          %vm2545 = vcmask 17408
          %v2546 = vsel %vm2545, %v2544, -inf
          %2547 = vmax.xlane.f32.xlu0 %v2546
          %v2548 = vpop.xlane.xlu0 %2547
          %v2549 = vsub.f32 %v2544, %v2548
          %v2550 = vmul.f32 %v2549, 1.442695
          %v2551 = vpow.pop %v2550
          %v2552 = vsel %vm2545, %v2551, 0.0
          %2553 = vadd.xlane.f32.xlu0 %v2552
          %v2554 = vpop.xlane.xlu0 %2553
          %v2555 = vrcp.pop %v2554
          %v2556 = vmul.f32 %v2551, %v2555
          %2558 = vset.pattern.permute.xlu0 0
          %2559 = vperm.xlu0 %2558, %v2556
          %v2560 = vpop.permute.xlu0 %2559
          %v2562 = vmul.f32 %v2040, %v2560
          %2563 = vset.pattern.permute.xlu0 1
          %2564 = vperm.xlu0 %2563, %v2556
          %v2565 = vpop.permute.xlu0 %2564
          %v2567 = vmul.f32 %v2155, %v2565
          %v2568 = vadd.f32 %v2562, %v2567
          %2569 = vset.pattern.permute.xlu0 2
          %2570 = vperm.xlu0 %2569, %v2556
          %v2571 = vpop.permute.xlu0 %2570
          %v2573 = vmul.f32 %v2270, %v2571
          %v2574 = vadd.f32 %v2568, %v2573
          %v2575 = vpack.c.bf16 %v2574, %v2574
          %v2576 = vld [vmem:[%s16] sm:$0xf]
          %v2577 = vld [vmem:[%s16 + $0x4] sm:$0xf]
          %v2578 = vld [vmem:[%s16 + $0x8] sm:$0xf]
          %v2579 = vld [vmem:[%s16 + $0xc] sm:$0xf]
          %v2580 = vld [vmem:[%s16 + $0x10] sm:$0xf]
          %v2581 = vld [vmem:[%s16 + $0x14] sm:$0xf]
          %v2582 = vld [vmem:[%s16 + $0x18] sm:$0xf]
          %v2583 = vld [vmem:[%s16 + $0x1c] sm:$0xf]
          %v2584 = vld [vmem:[%s16 + $0x20] sm:$0xf]
          %v2585 = vld [vmem:[%s16 + $0x24] sm:$0xf]
          %v2586 = vld [vmem:[%s16 + $0x28] sm:$0xf]
          %v2587 = vld [vmem:[%s16 + $0x2c] sm:$0xf]
          %v2588 = vld [vmem:[%s16 + $0x30] sm:$0xf]
          %v2589 = vld [vmem:[%s16 + $0x34] sm:$0xf]
          %v2590 = vld [vmem:[%s16 + $0x38] sm:$0xf]
          %v2591 = vld [vmem:[%s16 + $0x3c] sm:$0xf]
          %v2592 = vld [vmem:[%s17] sm:$0x1]
          %v2594 = vlaneseq
          %v2595 = vshrl.u32 %v2594, 7
          %v2596 = vsub.s32 0, %v2595
          %v2597 = vrot.slane %v2592, %v2596
          %v2615 = vunpack.c.l.b16 %v2576
          %v2616 = vunpack.c.l.b16 %v2577
          %v2617 = vunpack.c.l.b16 %v2578
          %v2618 = vunpack.c.l.b16 %v2579
          %v2619 = vunpack.c.l.b16 %v2580
          %v2620 = vunpack.c.l.b16 %v2581
          %v2621 = vunpack.c.l.b16 %v2582
          %v2622 = vunpack.c.l.b16 %v2583
          %v2623 = vunpack.c.l.b16 %v2584
          %v2624 = vunpack.c.l.b16 %v2585
          %v2625 = vunpack.c.l.b16 %v2586
          %v2626 = vunpack.c.l.b16 %v2587
          %v2627 = vunpack.c.l.b16 %v2588
          %v2628 = vunpack.c.l.b16 %v2589
          %v2629 = vunpack.c.l.b16 %v2590
          %v2630 = vunpack.c.l.b16 %v2591
          %v2631 = vpack.c.b16 %v2616, %v2615
          %v2632 = vpack.c.b16 %v2618, %v2617
          %v2633 = vpack.c.b16 %v2620, %v2619
          %v2634 = vpack.c.b16 %v2622, %v2621
          %v2635 = vpack.c.b16 %v2624, %v2623
          %v2636 = vpack.c.b16 %v2626, %v2625
          %v2637 = vpack.c.b16 %v2628, %v2627
          %v2638 = vpack.c.b16 %v2630, %v2629
          %2647 = vmatprep.subr.bf16.mxu0 0
          %2648 = vmatpush1.bf16.msra.mxu0 %v2631
          %2649 = vmatprep.subr.bf16.mxu0 0
          %2650 = vmatpush1.bf16.msra.mxu0 %v2632
          %2651 = vmatprep.subr.bf16.mxu0 0
          %2652 = vmatpush1.bf16.msra.mxu0 %v2633
          %2653 = vmatprep.subr.bf16.mxu0 0
          %2654 = vmatpush1.bf16.msra.mxu0 %v2634
          %2655 = vmatprep.subr.bf16.mxu0 0
          %2656 = vmatpush1.bf16.msra.mxu0 %v2635
          %2657 = vmatprep.subr.bf16.mxu0 0
          %2658 = vmatpush1.bf16.msra.mxu0 %v2636
          %2659 = vmatprep.subr.bf16.mxu0 0
          %2660 = vmatpush1.bf16.msra.mxu0 %v2637
          %2661 = vmatprep.subr.bf16.mxu0 0
          %2662 = vmatpush1.bf16.msra.mxu0 %v2638
          %2663 = vmatprep.subr.bf16.mxu0 0
          %2664 = vmatpush1.bf16.msra.mxu0 0
          %2665 = vmatprep.subr.bf16.mxu0 0
          %2666 = vmatpush1.bf16.msra.mxu0 0
          %2667 = vmatprep.subr.bf16.mxu0 0
          %2668 = vmatpush1.bf16.msra.mxu0 0
          %2669 = vmatprep.subr.bf16.mxu0 0
          %2670 = vmatpush1.bf16.msra.mxu0 0
          %2671 = vmatprep.subr.bf16.mxu0 0
          %2672 = vmatpush1.bf16.msra.mxu0 0
          %2673 = vmatprep.subr.bf16.mxu0 0
          %2674 = vmatpush1.bf16.msra.mxu0 0
          %2675 = vmatprep.subr.bf16.mxu0 0
          %2676 = vmatpush1.bf16.msra.mxu0 0
          %2677 = vmatprep.subr.bf16.mxu0 0
          %2678 = vmatpush1.bf16.msra.mxu0 0
          %2679 = vmatprep.mubr.bf16.mxu0 0
          %2680 = vmatmul.mubr.bf16.gmra.mrb[0].mxu0 %v2575
          %v2681 = vpop.f32.mrb[0].mxu0
          %v2682 = vadd.f32 %v2597, %v2681
          %v2683 = vpop.f32.mrb[0].mxu0
          %v2684 = vpop.f32.mrb[0].mxu0
          %v2685 = vpop.f32.mrb[0].mxu0
          %2686 = vdwg.mxu0
          %v2687 = vld [vmem:[%s18] sm:$0x1]
          %v2688 = vld [vmem:[%s19] sm:$0x1]
          %v2689 = vsel %vm1185, %v2682, 0.0
          %2690 = vadd.xlane.f32.xlu0 %v2689
          %v2691 = vpop.xlane.xlu0 %2690
          %v2692 = vmul.f32 %v2691, 0.03125
          %v2693 = vsub.f32 %v2682, %v2692
          %v2694 = vmul.f32 %v2693, %v1067
          %v2695 = vmul.f32 %v2694, %v2694
          %v2696 = vsel %vm1185, %v2695, 0.0
          %2697 = vadd.xlane.f32.xlu0 %v2696
          %v2698 = vpop.xlane.xlu0 %2697
          %v2699 = vmul.f32 %v2698, 0.03125
          %v2700 = vadd.f32 %v2699, 1e-05
          %v2701 = vrsqrt.pop %v2700
          %v2702 = vmul.f32 %v2694, %v2701
          %v2704 = vlaneseq
          %v2705 = vshrl.u32 %v2704, 7
          %v2706 = vsub.s32 0, %v2705
          %v2707 = vrot.slane %v2687, %v2706
          %v2709 = vmul.f32 %v2702, %v2707
          %v2711 = vlaneseq
          %v2712 = vshrl.u32 %v2711, 7
          %v2713 = vsub.s32 0, %v2712
          %v2714 = vrot.slane %v2688, %v2713
          %v2716 = vadd.f32 %v2709, %v2714
          %v2717 = vmax.f32 %v2716, 0.0
          %2718 = vst [vmem:[#allocation28] sm:$0x3] %v2717
        $region180: #{tpu_custom_call.1} parent=99 // pred_fallthru
          _
        // Predicated region
        $region181: #{tpu_custom_call.1} parent=99 // pred_check
          %p2719 = pneg %p566
        $region182: #{tpu_custom_call.1} parent=99 // pred_check_branch
          %2721 = sbr.rel (%p2719) target = $region184
        $region183: #{tpu_custom_call.1} parent=99 // pred_region
          %s2723 = ssub.s32 32, 32
          %2724 = vsyncadd [#allocation7], %s2723
          %s2725 = smul.addr %s56, 32
          %s2726 = scalar_lea.hbm %s20, %s2725
          %s2728 = sshll.u32 [#allocation28], 4
          %s2729 = int_to_ptr.vmem [resolvable:$true] %s2728
          %2731 = dma.vmem_to_hbm [thread:$0]  %s2729, 32, %s2726, [#allocation7]
        $region184: #{tpu_custom_call.1} parent=99 // pred_fallthru
          _
        // Predicated region
        $region185: #{tpu_custom_call.1} parent=99 // pred_check
          %p2732 = pneg %p566
        $region186: #{tpu_custom_call.1} parent=99 // pred_check_branch
          %2734 = sbr.rel (%p2732) target = $region188
        $region187: #{tpu_custom_call.1} parent=99 // pred_region
          %2735 = dma.done [#allocation7], 32
        $region188: #{tpu_custom_call.1} parent=99 // pred_fallthru
          _
      $region100: #{tpu_custom_call.1} parent=5 // pred_fallthru
        _
      %p2736 = scmp.le.s32.totalorder 2, %s47
      // Predicated region
      $region189: #{tpu_custom_call.1} parent=5 // pred_check
        %p2737 = pneg %p2736
      $region190: #{tpu_custom_call.1} parent=5 // pred_check_branch
        %2739 = sbr.rel (%p2737) target = $region192
      $region191: #{tpu_custom_call.1} parent=5 // pred_region
        %s2740 = ssub.s32 %s47, 2
      $region192: #{tpu_custom_call.1} parent=5 // pred_fallthru
        _
    $region6: #{tpu_custom_call.1} parent=1 // loop_footer
      %s51 = sadd.s32 1, %s47
    $region7: #{tpu_custom_call.1} parent=1 // loop_footer_branch
      %46 = sbr.rel target = $region3
    $region8: #{tpu_custom_call.1} parent=1 // loop_exit
      _
    %2741 = vsyncpa [#allocation6], 1
    %s2742 = scalar_lea.sflag [#allocation6], 1
    %2743 = vsyncpa %s2742, 1
    %2744 = vsyncpa [#allocation9], 1
    %s2745 = scalar_lea.sflag [#allocation9], 1
    %2746 = vsyncpa %s2745, 1
    %2747 = vsyncpa [#allocation12], 1
    %s2748 = scalar_lea.sflag [#allocation12], 1
    %2749 = vsyncpa %s2748, 1
    %2750 = vsyncpa [#allocation15], 1
    %s2751 = scalar_lea.sflag [#allocation15], 1
    %2752 = vsyncpa %s2751, 1
    %2753 = vsyncpa [#allocation18], 1
    %s2754 = scalar_lea.sflag [#allocation18], 1
    %2755 = vsyncpa %s2754, 1
    %2756 = vsyncpa [#allocation21], 1
    %s2757 = scalar_lea.sflag [#allocation21], 1
    %2758 = vsyncpa %s2757, 1
    %2759 = vsyncpa [#allocation24], 1
    %2760 = vsyncpa [#allocation27], 1
    %2761 = vsyncpa [#allocation7], 1
    %s2762 = scalar_lea.sflag [#allocation7], 1
    %2763 = vsyncpa %s2762, 1

</llo_original>
